<compile_context>
chip_gen: v7x
topology: tpu7x:2x2x1
jax: 0.10.0
libtpu: 0.0.40
codegen_flags: <defaults>
</compile_context>

<pallas_src>
import jax
import jax.numpy as jnp
from jax import lax
from jax.experimental import pallas as pl
from jax.experimental.pallas import tpu as pltpu


# ----------------------------------------------------------------------------
# Scaled-down ViT config (vit_base_patch16_224: 768/12/12 -> 32/4/2)
# ----------------------------------------------------------------------------
IMG_SIZE = 16
PATCH = 4
IN_CHANS = 3
PATCH_IN = IN_CHANS * PATCH * PATCH      # 48
EMBED_DIM = 32
NUM_HEADS = 4
HEAD_DIM = EMBED_DIM // NUM_HEADS        # 8
DEPTH = 2
MLP_HIDDEN = 4 * EMBED_DIM               # 128
NUM_PATCHES = (IMG_SIZE // PATCH) ** 2   # 16
SEQ = NUM_PATCHES + 1                    # 17
EMB_SIZE = 8                             # external-modality embedding size
NUM_CLASS = 5
LN_EPS = 1e-6


# ----------------------------------------------------------------------------
# Single fused Pallas kernel: entire ViT forward + classifier head.
# All refs are whole arrays resident in VMEM (no grid).
# ----------------------------------------------------------------------------
def _fused_vit_kernel(
    patches_ref,                # (B*NP, PATCH_IN)
    emb_ref,                    # (B, EMB_SIZE)
    row0_ref,                   # (1, D)   cls + pos[0]
    addp_ref,                   # (NP, D)  pos[1:] + patch_embed bias
    patch_w_ref,                # (PATCH_IN, D)
    hmask_ref,                  # (H*SEQ, D) per-head lane mask
    ln1_g_ref, ln1_b_ref,       # (DEPTH, 1, D)
    wq_ref, bq_ref,             # (DEPTH, D, D), (DEPTH, 1, D)  (scale pre-folded)
    wk_ref, bk_ref,             # (DEPTH, D, D), (DEPTH, 1, D)
    wv_ref, bv_ref,             # (DEPTH, D, D), (DEPTH, 1, D)
    wp_ref, bp_ref,             # (DEPTH, D, D), (DEPTH, 1, D)
    ln2_g_ref, ln2_b_ref,       # (DEPTH, 1, D)
    fc1_w_ref, fc1_b_ref,       # (DEPTH, D, MLP), (DEPTH, 1, MLP)
    fc2_w_ref, fc2_b_ref,       # (DEPTH, MLP, D), (DEPTH, 1, D)
    norm_g_ref, norm_b_ref,     # (1, D)
    head_wv_ref, head_we_ref, head_b_ref,   # (D, NC), (EMB, NC), (1, NC)
    out_ref,                    # (B, NC)
):
    batch = emb_ref.shape[0]

    def matmul(a, b):
        return jnp.dot(a, b, preferred_element_type=jnp.float32)

    def matmul_nt(a, b):        # a @ b.T without materializing a transpose
        return lax.dot_general(a, b, (((1,), (1,)), ((), ())),
                               preferred_element_type=jnp.float32)

    def layer_norm(x, g, b):
        mean = jnp.mean(x, axis=-1, keepdims=True)
        xc = x - mean
        var = jnp.mean(xc * xc, axis=-1, keepdims=True)
        return xc * lax.rsqrt(var + LN_EPS) * g + b

    def gelu(y):
        # TODO(synk): timm's nn.GELU is the exact erf-GELU; tanh approximation used here.
        c = 0.7978845608028654  # sqrt(2/pi)
        return 0.5 * y * (1.0 + jnp.tanh(c * (y + 0.044715 * y * y * y)))

    hmask = hmask_ref[...]      # (H*SEQ, D): 1 where lane belongs to that row-block's head
    row0 = row0_ref[...]        # (1, D)
    addp = addp_ref[...]        # (NP, D)

    # ---- patch embedding (conv-as-matmul) + CLS + pos, all batches at once ----
    pe = matmul(patches_ref[...], patch_w_ref[...])          # (B*NP, D)
    rows = []
    for b in range(batch):
        rows.append(row0)                                    # CLS row: cls + pos[0]
        rows.append(pe[b * NUM_PATCHES:(b + 1) * NUM_PATCHES, :] + addp)
    x = jnp.concatenate(rows, axis=0)                        # (B*SEQ, D)

    for d in range(DEPTH):
        # ---- attention sub-block: x = x + proj(attn(norm1(x))) ----
        xn = layer_norm(x, ln1_g_ref[d], ln1_b_ref[d])       # (B*SEQ, D)
        q = matmul(xn, wq_ref[d]) + bq_ref[d]                # scale folded into wq/bq
        k = matmul(xn, wk_ref[d]) + bk_ref[d]
        v = matmul(xn, wv_ref[d]) + bv_ref[d]

        # merged-head attention (per batch element): stack Q over heads along
        # sublanes and mask each row-block to its head's lanes, so a single
        # QK^T and a single P@V cover all heads; summing the masked row-blocks
        # of the PV result reproduces concat_h(o_h).
        attn_rows = []
        for b in range(batch):
            qb = q[b * SEQ:(b + 1) * SEQ, :]                 # (SEQ, D)
            kb = k[b * SEQ:(b + 1) * SEQ, :]
            vb = v[b * SEQ:(b + 1) * SEQ, :]
            qs = jnp.concatenate([qb] * NUM_HEADS, axis=0) * hmask   # (H*SEQ, D)
            s = matmul_nt(qs, kb)                            # (H*SEQ, SEQ)
            m = jnp.max(s, axis=-1, keepdims=True)
            p = jnp.exp(s - m)
            denom = jnp.sum(p, axis=-1, keepdims=True)
            p = p * pl.reciprocal(denom, approx=True)        # EUP divide
            o = matmul(p, vb) * hmask                        # (H*SEQ, D)
            osum = o[0:SEQ, :]                               # merge heads (disjoint masks)
            for h in range(1, NUM_HEADS):
                osum = osum + o[h * SEQ:(h + 1) * SEQ, :]
            attn_rows.append(osum)                           # (SEQ, D)
        attn = jnp.concatenate(attn_rows, axis=0)            # (B*SEQ, D)

        # single output projection for all batches / heads
        x = x + matmul(attn, wp_ref[d]) + bp_ref[d]

        # ---- MLP sub-block: x = x + fc2(gelu(fc1(norm2(x)))) ----
        h = layer_norm(x, ln2_g_ref[d], ln2_b_ref[d])
        h = gelu(matmul(h, fc1_w_ref[d]) + fc1_b_ref[d])
        x = x + matmul(h, fc2_w_ref[d]) + fc2_b_ref[d]

    # ---- final LN on the CLS rows only (LN is per-row) -> classifier head ----
    # Dropout is identity at inference.
    cls_rows = jnp.concatenate([x[b * SEQ:b * SEQ + 1, :] for b in range(batch)],
                               axis=0)                       # (B, D)
    cls_feat = layer_norm(cls_rows, norm_g_ref[...], norm_b_ref[...])
    logits = (matmul(cls_feat, head_wv_ref[...])
              + matmul(emb_ref[...], head_we_ref[...])
              + head_b_ref[...])                             # (B, NC)
    out_ref[...] = logits


# ----------------------------------------------------------------------------
# Deterministic parameter init (shapes follow timm ViT, scaled down)
# ----------------------------------------------------------------------------
def init_params(key):
    def normal(k, shape, scale=0.02):
        return scale * jax.random.normal(k, shape, dtype=jnp.float32)

    keys = jax.random.split(key, 8 + DEPTH)
    params = {
        "patch_w": normal(keys[0], (PATCH_IN, EMBED_DIM)),
        "patch_b": jnp.zeros((EMBED_DIM,), jnp.float32),
        "cls": normal(keys[1], (1, 1, EMBED_DIM)),
        "pos": normal(keys[2], (1, SEQ, EMBED_DIM)),
        "norm_g": jnp.ones((EMBED_DIM,), jnp.float32),
        "norm_b": jnp.zeros((EMBED_DIM,), jnp.float32),
        "head_w": normal(keys[3], (EMBED_DIM + EMB_SIZE, NUM_CLASS)),
        "head_b": jnp.zeros((NUM_CLASS,), jnp.float32),
        "blocks": [],
    }
    for d in range(DEPTH):
        bk = jax.random.split(keys[8 + d], 4)
        params["blocks"].append({
            "ln1_g": jnp.ones((EMBED_DIM,), jnp.float32),
            "ln1_b": jnp.zeros((EMBED_DIM,), jnp.float32),
            "qkv_w": normal(bk[0], (EMBED_DIM, 3 * EMBED_DIM)),
            "qkv_b": jnp.zeros((3 * EMBED_DIM,), jnp.float32),
            "proj_w": normal(bk[1], (EMBED_DIM, EMBED_DIM)),
            "proj_b": jnp.zeros((EMBED_DIM,), jnp.float32),
            "ln2_g": jnp.ones((EMBED_DIM,), jnp.float32),
            "ln2_b": jnp.zeros((EMBED_DIM,), jnp.float32),
            "fc1_w": normal(bk[2], (EMBED_DIM, MLP_HIDDEN)),
            "fc1_b": jnp.zeros((MLP_HIDDEN,), jnp.float32),
            "fc2_w": normal(bk[3], (MLP_HIDDEN, EMBED_DIM)),
            "fc2_b": jnp.zeros((EMBED_DIM,), jnp.float32),
        })
    return params


# ----------------------------------------------------------------------------
# One-time weight packing (runs at model-load time, NOT per forward call):
# per-depth stacks, qkv split into q/k/v (scale folded into q), cls+pos fold,
# classifier-weight split, per-head lane mask.
# ----------------------------------------------------------------------------
def prepare_params(params):
    blocks = params["blocks"]
    scale = HEAD_DIM ** -0.5

    def stk(name):
        return jnp.stack([blk[name] for blk in blocks])

    qkv_w = stk("qkv_w")                                  # (DEPTH, D, 3D)
    qkv_b = stk("qkv_b")                                  # (DEPTH, 3D)

    lane_head = jnp.arange(EMBED_DIM) // HEAD_DIM         # (D,)
    row_head = jnp.repeat(jnp.arange(NUM_HEADS), SEQ)     # (H*SEQ,)
    hmask = (row_head[:, None] == lane_head[None, :]).astype(jnp.float32)

    packed = {
        "patch_w": params["patch_w"],
        "row0": (params["cls"][0] + params["pos"][0, :1]).reshape(1, EMBED_DIM),
        "addp": params["pos"][0, 1:] + params["patch_b"][None, :],
        "hmask": hmask,
        "ln1_g": stk("ln1_g").reshape(DEPTH, 1, EMBED_DIM),
        "ln1_b": stk("ln1_b").reshape(DEPTH, 1, EMBED_DIM),
        "wq": qkv_w[:, :, :EMBED_DIM] * scale,
        "bq": (qkv_b[:, :EMBED_DIM] * scale).reshape(DEPTH, 1, EMBED_DIM),
        "wk": qkv_w[:, :, EMBED_DIM:2 * EMBED_DIM],
        "bk": qkv_b[:, EMBED_DIM:2 * EMBED_DIM].reshape(DEPTH, 1, EMBED_DIM),
        "wv": qkv_w[:, :, 2 * EMBED_DIM:],
        "bv": qkv_b[:, 2 * EMBED_DIM:].reshape(DEPTH, 1, EMBED_DIM),
        "wp": stk("proj_w"),
        "bp": stk("proj_b").reshape(DEPTH, 1, EMBED_DIM),
        "ln2_g": stk("ln2_g").reshape(DEPTH, 1, EMBED_DIM),
        "ln2_b": stk("ln2_b").reshape(DEPTH, 1, EMBED_DIM),
        "fc1_w": stk("fc1_w"),
        "fc1_b": stk("fc1_b").reshape(DEPTH, 1, MLP_HIDDEN),
        "fc2_w": stk("fc2_w"),
        "fc2_b": stk("fc2_b").reshape(DEPTH, 1, EMBED_DIM),
        "norm_g": params["norm_g"].reshape(1, EMBED_DIM),
        "norm_b": params["norm_b"].reshape(1, EMBED_DIM),
        "head_wv": params["head_w"][:EMBED_DIM],
        "head_we": params["head_w"][EMBED_DIM:],
        "head_b": params["head_b"].reshape(1, NUM_CLASS),
    }
    return packed


# ----------------------------------------------------------------------------
# Forward pass (mirrors timm ViT.forward_features + classifier head)
# ----------------------------------------------------------------------------
@jax.jit
def forward(img, embedding, packed):
    # mirrors `img.squeeze()` in the torch module for the (B, 1, C, H, W) input
    # (dim-specific squeeze is safe for B == 1 as well).
    img = jnp.squeeze(img, axis=1)                          # (B, C, H, W)
    B = img.shape[0]

    # patchify NCHW -> (B*N, C*p*p) in (C, ph, pw) order, matching the
    # equivalent Conv2d(patch, stride=patch) weight flattening.
    x = img.reshape(B, IN_CHANS, IMG_SIZE // PATCH, PATCH, IMG_SIZE // PATCH, PATCH)
    patches = x.transpose(0, 2, 4, 1, 3, 5).reshape(B * NUM_PATCHES, PATCH_IN)

    vmem = pl.BlockSpec(memory_space=pltpu.MemorySpace.VMEM)
    n_in = 27

    out = pl.pallas_call(
        _fused_vit_kernel,
        out_shape=jax.ShapeDtypeStruct((B, NUM_CLASS), jnp.float32),
        in_specs=[vmem] * n_in,
        out_specs=vmem,
    )(
        patches, embedding,
        packed["row0"], packed["addp"], packed["patch_w"], packed["hmask"],
        packed["ln1_g"], packed["ln1_b"],
        packed["wq"], packed["bq"], packed["wk"], packed["bk"],
        packed["wv"], packed["bv"], packed["wp"], packed["bp"],
        packed["ln2_g"], packed["ln2_b"],
        packed["fc1_w"], packed["fc1_b"], packed["fc2_w"], packed["fc2_b"],
        packed["norm_g"], packed["norm_b"],
        packed["head_wv"], packed["head_we"], packed["head_b"],
    )
    return out


if __name__ == "__main__":
    key = jax.random.PRNGKey(0)
    k_img, k_emb, k_par = jax.random.split(key, 3)
    B = 2
    img = jax.random.normal(k_img, (B, 1, IN_CHANS, IMG_SIZE, IMG_SIZE), dtype=jnp.float32)
    embedding = jax.random.normal(k_emb, (B, EMB_SIZE), dtype=jnp.float32)
    params = init_params(k_par)
    packed = prepare_params(params)          # one-time weight packing (load time)
    jax.block_until_ready(packed)

    out = forward(img, embedding, packed)
    jax.block_until_ready(out)
    assert out.shape == (B, NUM_CLASS) and out.dtype == jnp.float32
    assert bool(jnp.all(jnp.isfinite(out)))
    print("KERNEL_OK")
</pallas_src>

<mosaic_0001>
module attributes {stable_mosaic.version = 11 : i64} {
  func.func @_fused_vit_kernel(%arg0: memref<32x48xf32, #tpu.memory_space<vmem>>, %arg1: memref<2x8xf32, #tpu.memory_space<vmem>>, %arg2: memref<1x32xf32, #tpu.memory_space<vmem>>, %arg3: memref<16x32xf32, #tpu.memory_space<vmem>>, %arg4: memref<48x32xf32, #tpu.memory_space<vmem>>, %arg5: memref<68x32xf32, #tpu.memory_space<vmem>>, %arg6: memref<2x1x32xf32, #tpu.memory_space<vmem>>, %arg7: memref<2x1x32xf32, #tpu.memory_space<vmem>>, %arg8: memref<2x32x32xf32, #tpu.memory_space<vmem>>, %arg9: memref<2x1x32xf32, #tpu.memory_space<vmem>>, %arg10: memref<2x32x32xf32, #tpu.memory_space<vmem>>, %arg11: memref<2x1x32xf32, #tpu.memory_space<vmem>>, %arg12: memref<2x32x32xf32, #tpu.memory_space<vmem>>, %arg13: memref<2x1x32xf32, #tpu.memory_space<vmem>>, %arg14: memref<2x32x32xf32, #tpu.memory_space<vmem>>, %arg15: memref<2x1x32xf32, #tpu.memory_space<vmem>>, %arg16: memref<2x1x32xf32, #tpu.memory_space<vmem>>, %arg17: memref<2x1x32xf32, #tpu.memory_space<vmem>>, %arg18: memref<2x32x128xf32, #tpu.memory_space<vmem>>, %arg19: memref<2x1x128xf32, #tpu.memory_space<vmem>>, %arg20: memref<2x128x32xf32, #tpu.memory_space<vmem>>, %arg21: memref<2x1x32xf32, #tpu.memory_space<vmem>>, %arg22: memref<1x32xf32, #tpu.memory_space<vmem>>, %arg23: memref<1x32xf32, #tpu.memory_space<vmem>>, %arg24: memref<32x5xf32, #tpu.memory_space<vmem>>, %arg25: memref<8x5xf32, #tpu.memory_space<vmem>>, %arg26: memref<1x5xf32, #tpu.memory_space<vmem>>, %arg27: memref<2x5xf32, #tpu.memory_space<vmem>>) attributes {dimension_semantics = [], scalar_prefetch = 0 : i64, scratch_operands = 0 : i64, tpu.core_type = #tpu.core_type<tc>} {
    %c0 = arith.constant 0 : index
    %c0_0 = arith.constant 0 : index
    %0 = vector.load %arg5[%c0, %c0_0] : memref<68x32xf32, #tpu.memory_space<vmem>>, vector<68x32xf32>
    %c0_1 = arith.constant 0 : index
    %c0_2 = arith.constant 0 : index
    %1 = vector.load %arg2[%c0_1, %c0_2] : memref<1x32xf32, #tpu.memory_space<vmem>>, vector<1x32xf32>
    %c0_3 = arith.constant 0 : index
    %c0_4 = arith.constant 0 : index
    %2 = vector.load %arg3[%c0_3, %c0_4] : memref<16x32xf32, #tpu.memory_space<vmem>>, vector<16x32xf32>
    %c0_5 = arith.constant 0 : index
    %c0_6 = arith.constant 0 : index
    %3 = vector.load %arg0[%c0_5, %c0_6] : memref<32x48xf32, #tpu.memory_space<vmem>>, vector<32x48xf32>
    %c0_7 = arith.constant 0 : index
    %c0_8 = arith.constant 0 : index
    %4 = vector.load %arg4[%c0_7, %c0_8] : memref<48x32xf32, #tpu.memory_space<vmem>>, vector<48x32xf32>
    %cst = arith.constant dense<0.000000e+00> : vector<32x32xf32>
    %5 = tpu.matmul %3, %4, %cst {dimension_numbers = #tpu.dot_dimension_numbers<[1], [0], [0], [1], [0, 0, 1, 1], [], []>} : vector<32x48xf32>, vector<48x32xf32>, vector<32x32xf32> -> vector<32x32xf32>
    %6 = vector.extract_strided_slice %5 {offsets = [0, 0], sizes = [16, 32], strides = [1, 1]} : vector<32x32xf32> to vector<16x32xf32>
    %7 = arith.addf %6, %2 : vector<16x32xf32>
    %8 = vector.extract_strided_slice %5 {offsets = [16, 0], sizes = [16, 32], strides = [1, 1]} : vector<32x32xf32> to vector<16x32xf32>
    %9 = arith.addf %8, %2 : vector<16x32xf32>
    %10 = tpu.concatenate %1, %7, %1, %9 in 0 : vector<1x32xf32>, vector<16x32xf32>, vector<1x32xf32>, vector<16x32xf32> -> vector<34x32xf32>
    %c0_9 = arith.constant 0 : index
    %c0_10 = arith.constant 0 : index
    %c0_11 = arith.constant 0 : index
    %11 = vector.load %arg6[%c0_9, %c0_10, %c0_11] : memref<2x1x32xf32, #tpu.memory_space<vmem>>, vector<1x1x32xf32>
    %12 = vector.shape_cast %11 : vector<1x1x32xf32> to vector<1x32xf32>
    %c0_12 = arith.constant 0 : index
    %c0_13 = arith.constant 0 : index
    %c0_14 = arith.constant 0 : index
    %13 = vector.load %arg7[%c0_12, %c0_13, %c0_14] : memref<2x1x32xf32, #tpu.memory_space<vmem>>, vector<1x1x32xf32>
    %14 = vector.shape_cast %13 : vector<1x1x32xf32> to vector<1x32xf32>
    %cst_15 = arith.constant dense<0.000000e+00> : vector<34xf32>
    %15 = vector.multi_reduction <add>, %10, %cst_15 [1] : vector<34x32xf32> to vector<34xf32>
    %16 = vector.shape_cast %15 : vector<34xf32> to vector<34x1xf32>
    %cst_16 = arith.constant 3.200000e+01 : f32
    %17 = vector.broadcast %cst_16 : f32 to vector<34x1xf32>
    %18 = arith.divf %16, %17 : vector<34x1xf32>
    %19 = vector.broadcast %18 : vector<34x1xf32> to vector<34x32xf32>
    %20 = arith.subf %10, %19 : vector<34x32xf32>
    %21 = arith.mulf %20, %20 : vector<34x32xf32>
    %cst_17 = arith.constant dense<0.000000e+00> : vector<34xf32>
    %22 = vector.multi_reduction <add>, %21, %cst_17 [1] : vector<34x32xf32> to vector<34xf32>
    %23 = vector.shape_cast %22 : vector<34xf32> to vector<34x1xf32>
    %cst_18 = arith.constant 3.200000e+01 : f32
    %24 = vector.broadcast %cst_18 : f32 to vector<34x1xf32>
    %25 = arith.divf %23, %24 : vector<34x1xf32>
    %cst_19 = arith.constant 9.99999997E-7 : f32
    %26 = vector.broadcast %cst_19 : f32 to vector<34x1xf32>
    %27 = arith.addf %25, %26 : vector<34x1xf32>
    %28 = math.rsqrt %27 : vector<34x1xf32>
    %29 = vector.broadcast %28 : vector<34x1xf32> to vector<34x32xf32>
    %30 = arith.mulf %20, %29 : vector<34x32xf32>
    %31 = vector.broadcast %12 : vector<1x32xf32> to vector<34x32xf32>
    %32 = arith.mulf %30, %31 : vector<34x32xf32>
    %33 = vector.broadcast %14 : vector<1x32xf32> to vector<34x32xf32>
    %34 = arith.addf %32, %33 : vector<34x32xf32>
    %c0_20 = arith.constant 0 : index
    %c0_21 = arith.constant 0 : index
    %c0_22 = arith.constant 0 : index
    %35 = vector.load %arg8[%c0_20, %c0_21, %c0_22] : memref<2x32x32xf32, #tpu.memory_space<vmem>>, vector<1x32x32xf32>
    %36 = vector.shape_cast %35 : vector<1x32x32xf32> to vector<32x32xf32>
    %cst_23 = arith.constant dense<0.000000e+00> : vector<34x32xf32>
    %37 = tpu.matmul %34, %36, %cst_23 {dimension_numbers = #tpu.dot_dimension_numbers<[1], [0], [0], [1], [0, 0, 1, 1], [], []>} : vector<34x32xf32>, vector<32x32xf32>, vector<34x32xf32> -> vector<34x32xf32>
    %c0_24 = arith.constant 0 : index
    %c0_25 = arith.constant 0 : index
    %c0_26 = arith.constant 0 : index
    %38 = vector.load %arg9[%c0_24, %c0_25, %c0_26] : memref<2x1x32xf32, #tpu.memory_space<vmem>>, vector<1x1x32xf32>
    %39 = vector.shape_cast %38 : vector<1x1x32xf32> to vector<1x32xf32>
    %40 = vector.broadcast %39 : vector<1x32xf32> to vector<34x32xf32>
    %41 = arith.addf %37, %40 : vector<34x32xf32>
    %c0_27 = arith.constant 0 : index
    %c0_28 = arith.constant 0 : index
    %c0_29 = arith.constant 0 : index
    %42 = vector.load %arg10[%c0_27, %c0_28, %c0_29] : memref<2x32x32xf32, #tpu.memory_space<vmem>>, vector<1x32x32xf32>
    %43 = vector.shape_cast %42 : vector<1x32x32xf32> to vector<32x32xf32>
    %cst_30 = arith.constant dense<0.000000e+00> : vector<34x32xf32>
    %44 = tpu.matmul %34, %43, %cst_30 {dimension_numbers = #tpu.dot_dimension_numbers<[1], [0], [0], [1], [0, 0, 1, 1], [], []>} : vector<34x32xf32>, vector<32x32xf32>, vector<34x32xf32> -> vector<34x32xf32>
    %c0_31 = arith.constant 0 : index
    %c0_32 = arith.constant 0 : index
    %c0_33 = arith.constant 0 : index
    %45 = vector.load %arg11[%c0_31, %c0_32, %c0_33] : memref<2x1x32xf32, #tpu.memory_space<vmem>>, vector<1x1x32xf32>
    %46 = vector.shape_cast %45 : vector<1x1x32xf32> to vector<1x32xf32>
    %47 = vector.broadcast %46 : vector<1x32xf32> to vector<34x32xf32>
    %48 = arith.addf %44, %47 : vector<34x32xf32>
    %c0_34 = arith.constant 0 : index
    %c0_35 = arith.constant 0 : index
    %c0_36 = arith.constant 0 : index
    %49 = vector.load %arg12[%c0_34, %c0_35, %c0_36] : memref<2x32x32xf32, #tpu.memory_space<vmem>>, vector<1x32x32xf32>
    %50 = vector.shape_cast %49 : vector<1x32x32xf32> to vector<32x32xf32>
    %cst_37 = arith.constant dense<0.000000e+00> : vector<34x32xf32>
    %51 = tpu.matmul %34, %50, %cst_37 {dimension_numbers = #tpu.dot_dimension_numbers<[1], [0], [0], [1], [0, 0, 1, 1], [], []>} : vector<34x32xf32>, vector<32x32xf32>, vector<34x32xf32> -> vector<34x32xf32>
    %c0_38 = arith.constant 0 : index
    %c0_39 = arith.constant 0 : index
    %c0_40 = arith.constant 0 : index
    %52 = vector.load %arg13[%c0_38, %c0_39, %c0_40] : memref<2x1x32xf32, #tpu.memory_space<vmem>>, vector<1x1x32xf32>
    %53 = vector.shape_cast %52 : vector<1x1x32xf32> to vector<1x32xf32>
    %54 = vector.broadcast %53 : vector<1x32xf32> to vector<34x32xf32>
    %55 = arith.addf %51, %54 : vector<34x32xf32>
    %56 = vector.extract_strided_slice %41 {offsets = [0, 0], sizes = [17, 32], strides = [1, 1]} : vector<34x32xf32> to vector<17x32xf32>
    %57 = vector.extract_strided_slice %48 {offsets = [0, 0], sizes = [17, 32], strides = [1, 1]} : vector<34x32xf32> to vector<17x32xf32>
    %58 = vector.extract_strided_slice %55 {offsets = [0, 0], sizes = [17, 32], strides = [1, 1]} : vector<34x32xf32> to vector<17x32xf32>
    %59 = tpu.concatenate %56, %56, %56, %56 in 0 : vector<17x32xf32>, vector<17x32xf32>, vector<17x32xf32>, vector<17x32xf32> -> vector<68x32xf32>
    %60 = arith.mulf %59, %0 : vector<68x32xf32>
    %cst_41 = arith.constant dense<0.000000e+00> : vector<68x17xf32>
    %61 = tpu.matmul %60, %57, %cst_41 {dimension_numbers = #tpu.dot_dimension_numbers<[1], [1], [0], [0], [0, 0, 1, 0], [], []>} : vector<68x32xf32>, vector<17x32xf32>, vector<68x17xf32> -> vector<68x17xf32>
    %cst_42 = arith.constant dense<0xFF800000> : vector<68xf32>
    %62 = vector.multi_reduction <maximumf>, %61, %cst_42 [1] : vector<68x17xf32> to vector<68xf32>
    %63 = vector.shape_cast %62 : vector<68xf32> to vector<68x1xf32>
    %64 = vector.broadcast %63 : vector<68x1xf32> to vector<68x17xf32>
    %65 = arith.subf %61, %64 : vector<68x17xf32>
    %66 = math.exp %65 : vector<68x17xf32>
    %cst_43 = arith.constant dense<0.000000e+00> : vector<68xf32>
    %67 = vector.multi_reduction <add>, %66, %cst_43 [1] : vector<68x17xf32> to vector<68xf32>
    %68 = vector.shape_cast %67 : vector<68xf32> to vector<68x1xf32>
    %69 = tpu.reciprocal %68 {approx = true} : vector<68x1xf32> -> vector<68x1xf32>
    %70 = vector.broadcast %69 : vector<68x1xf32> to vector<68x17xf32>
    %71 = arith.mulf %66, %70 : vector<68x17xf32>
    %cst_44 = arith.constant dense<0.000000e+00> : vector<68x32xf32>
    %72 = tpu.matmul %71, %58, %cst_44 {dimension_numbers = #tpu.dot_dimension_numbers<[1], [0], [0], [1], [0, 0, 1, 1], [], []>} : vector<68x17xf32>, vector<17x32xf32>, vector<68x32xf32> -> vector<68x32xf32>
    %73 = arith.mulf %72, %0 : vector<68x32xf32>
    %74 = vector.extract_strided_slice %73 {offsets = [0, 0], sizes = [17, 32], strides = [1, 1]} : vector<68x32xf32> to vector<17x32xf32>
    %75 = vector.extract_strided_slice %73 {offsets = [17, 0], sizes = [17, 32], strides = [1, 1]} : vector<68x32xf32> to vector<17x32xf32>
    %76 = arith.addf %74, %75 : vector<17x32xf32>
    %77 = vector.extract_strided_slice %73 {offsets = [34, 0], sizes = [17, 32], strides = [1, 1]} : vector<68x32xf32> to vector<17x32xf32>
    %78 = arith.addf %76, %77 : vector<17x32xf32>
    %79 = vector.extract_strided_slice %73 {offsets = [51, 0], sizes = [17, 32], strides = [1, 1]} : vector<68x32xf32> to vector<17x32xf32>
    %80 = arith.addf %78, %79 : vector<17x32xf32>
    %81 = vector.extract_strided_slice %41 {offsets = [17, 0], sizes = [17, 32], strides = [1, 1]} : vector<34x32xf32> to vector<17x32xf32>
    %82 = vector.extract_strided_slice %48 {offsets = [17, 0], sizes = [17, 32], strides = [1, 1]} : vector<34x32xf32> to vector<17x32xf32>
    %83 = vector.extract_strided_slice %55 {offsets = [17, 0], sizes = [17, 32], strides = [1, 1]} : vector<34x32xf32> to vector<17x32xf32>
    %84 = tpu.concatenate %81, %81, %81, %81 in 0 : vector<17x32xf32>, vector<17x32xf32>, vector<17x32xf32>, vector<17x32xf32> -> vector<68x32xf32>
    %85 = arith.mulf %84, %0 : vector<68x32xf32>
    %cst_45 = arith.constant dense<0.000000e+00> : vector<68x17xf32>
    %86 = tpu.matmul %85, %82, %cst_45 {dimension_numbers = #tpu.dot_dimension_numbers<[1], [1], [0], [0], [0, 0, 1, 0], [], []>} : vector<68x32xf32>, vector<17x32xf32>, vector<68x17xf32> -> vector<68x17xf32>
    %cst_46 = arith.constant dense<0xFF800000> : vector<68xf32>
    %87 = vector.multi_reduction <maximumf>, %86, %cst_46 [1] : vector<68x17xf32> to vector<68xf32>
    %88 = vector.shape_cast %87 : vector<68xf32> to vector<68x1xf32>
    %89 = vector.broadcast %88 : vector<68x1xf32> to vector<68x17xf32>
    %90 = arith.subf %86, %89 : vector<68x17xf32>
    %91 = math.exp %90 : vector<68x17xf32>
    %cst_47 = arith.constant dense<0.000000e+00> : vector<68xf32>
    %92 = vector.multi_reduction <add>, %91, %cst_47 [1] : vector<68x17xf32> to vector<68xf32>
    %93 = vector.shape_cast %92 : vector<68xf32> to vector<68x1xf32>
    %94 = tpu.reciprocal %93 {approx = true} : vector<68x1xf32> -> vector<68x1xf32>
    %95 = vector.broadcast %94 : vector<68x1xf32> to vector<68x17xf32>
    %96 = arith.mulf %91, %95 : vector<68x17xf32>
    %cst_48 = arith.constant dense<0.000000e+00> : vector<68x32xf32>
    %97 = tpu.matmul %96, %83, %cst_48 {dimension_numbers = #tpu.dot_dimension_numbers<[1], [0], [0], [1], [0, 0, 1, 1], [], []>} : vector<68x17xf32>, vector<17x32xf32>, vector<68x32xf32> -> vector<68x32xf32>
    %98 = arith.mulf %97, %0 : vector<68x32xf32>
    %99 = vector.extract_strided_slice %98 {offsets = [0, 0], sizes = [17, 32], strides = [1, 1]} : vector<68x32xf32> to vector<17x32xf32>
    %100 = vector.extract_strided_slice %98 {offsets = [17, 0], sizes = [17, 32], strides = [1, 1]} : vector<68x32xf32> to vector<17x32xf32>
    %101 = arith.addf %99, %100 : vector<17x32xf32>
    %102 = vector.extract_strided_slice %98 {offsets = [34, 0], sizes = [17, 32], strides = [1, 1]} : vector<68x32xf32> to vector<17x32xf32>
    %103 = arith.addf %101, %102 : vector<17x32xf32>
    %104 = vector.extract_strided_slice %98 {offsets = [51, 0], sizes = [17, 32], strides = [1, 1]} : vector<68x32xf32> to vector<17x32xf32>
    %105 = arith.addf %103, %104 : vector<17x32xf32>
    %106 = tpu.concatenate %80, %105 in 0 : vector<17x32xf32>, vector<17x32xf32> -> vector<34x32xf32>
    %c0_49 = arith.constant 0 : index
    %c0_50 = arith.constant 0 : index
    %c0_51 = arith.constant 0 : index
    %107 = vector.load %arg14[%c0_49, %c0_50, %c0_51] : memref<2x32x32xf32, #tpu.memory_space<vmem>>, vector<1x32x32xf32>
    %108 = vector.shape_cast %107 : vector<1x32x32xf32> to vector<32x32xf32>
    %cst_52 = arith.constant dense<0.000000e+00> : vector<34x32xf32>
    %109 = tpu.matmul %106, %108, %cst_52 {dimension_numbers = #tpu.dot_dimension_numbers<[1], [0], [0], [1], [0, 0, 1, 1], [], []>} : vector<34x32xf32>, vector<32x32xf32>, vector<34x32xf32> -> vector<34x32xf32>
    %110 = arith.addf %10, %109 : vector<34x32xf32>
    %c0_53 = arith.constant 0 : index
    %c0_54 = arith.constant 0 : index
    %c0_55 = arith.constant 0 : index
    %111 = vector.load %arg15[%c0_53, %c0_54, %c0_55] : memref<2x1x32xf32, #tpu.memory_space<vmem>>, vector<1x1x32xf32>
    %112 = vector.shape_cast %111 : vector<1x1x32xf32> to vector<1x32xf32>
    %113 = vector.broadcast %112 : vector<1x32xf32> to vector<34x32xf32>
    %114 = arith.addf %110, %113 : vector<34x32xf32>
    %c0_56 = arith.constant 0 : index
    %c0_57 = arith.constant 0 : index
    %c0_58 = arith.constant 0 : index
    %115 = vector.load %arg16[%c0_56, %c0_57, %c0_58] : memref<2x1x32xf32, #tpu.memory_space<vmem>>, vector<1x1x32xf32>
    %116 = vector.shape_cast %115 : vector<1x1x32xf32> to vector<1x32xf32>
    %c0_59 = arith.constant 0 : index
    %c0_60 = arith.constant 0 : index
    %c0_61 = arith.constant 0 : index
    %117 = vector.load %arg17[%c0_59, %c0_60, %c0_61] : memref<2x1x32xf32, #tpu.memory_space<vmem>>, vector<1x1x32xf32>
    %118 = vector.shape_cast %117 : vector<1x1x32xf32> to vector<1x32xf32>
    %cst_62 = arith.constant dense<0.000000e+00> : vector<34xf32>
    %119 = vector.multi_reduction <add>, %114, %cst_62 [1] : vector<34x32xf32> to vector<34xf32>
    %120 = vector.shape_cast %119 : vector<34xf32> to vector<34x1xf32>
    %cst_63 = arith.constant 3.200000e+01 : f32
    %121 = vector.broadcast %cst_63 : f32 to vector<34x1xf32>
    %122 = arith.divf %120, %121 : vector<34x1xf32>
    %123 = vector.broadcast %122 : vector<34x1xf32> to vector<34x32xf32>
    %124 = arith.subf %114, %123 : vector<34x32xf32>
    %125 = arith.mulf %124, %124 : vector<34x32xf32>
    %cst_64 = arith.constant dense<0.000000e+00> : vector<34xf32>
    %126 = vector.multi_reduction <add>, %125, %cst_64 [1] : vector<34x32xf32> to vector<34xf32>
    %127 = vector.shape_cast %126 : vector<34xf32> to vector<34x1xf32>
    %cst_65 = arith.constant 3.200000e+01 : f32
    %128 = vector.broadcast %cst_65 : f32 to vector<34x1xf32>
    %129 = arith.divf %127, %128 : vector<34x1xf32>
    %cst_66 = arith.constant 9.99999997E-7 : f32
    %130 = vector.broadcast %cst_66 : f32 to vector<34x1xf32>
    %131 = arith.addf %129, %130 : vector<34x1xf32>
    %132 = math.rsqrt %131 : vector<34x1xf32>
    %133 = vector.broadcast %132 : vector<34x1xf32> to vector<34x32xf32>
    %134 = arith.mulf %124, %133 : vector<34x32xf32>
    %135 = vector.broadcast %116 : vector<1x32xf32> to vector<34x32xf32>
    %136 = arith.mulf %134, %135 : vector<34x32xf32>
    %137 = vector.broadcast %118 : vector<1x32xf32> to vector<34x32xf32>
    %138 = arith.addf %136, %137 : vector<34x32xf32>
    %c0_67 = arith.constant 0 : index
    %c0_68 = arith.constant 0 : index
    %c0_69 = arith.constant 0 : index
    %139 = vector.load %arg18[%c0_67, %c0_68, %c0_69] : memref<2x32x128xf32, #tpu.memory_space<vmem>>, vector<1x32x128xf32>
    %140 = vector.shape_cast %139 : vector<1x32x128xf32> to vector<32x128xf32>
    %cst_70 = arith.constant dense<0.000000e+00> : vector<34x128xf32>
    %141 = tpu.matmul %138, %140, %cst_70 {dimension_numbers = #tpu.dot_dimension_numbers<[1], [0], [0], [1], [0, 0, 1, 1], [], []>} : vector<34x32xf32>, vector<32x128xf32>, vector<34x128xf32> -> vector<34x128xf32>
    %c0_71 = arith.constant 0 : index
    %c0_72 = arith.constant 0 : index
    %c0_73 = arith.constant 0 : index
    %142 = vector.load %arg19[%c0_71, %c0_72, %c0_73] : memref<2x1x128xf32, #tpu.memory_space<vmem>>, vector<1x1x128xf32>
    %143 = vector.shape_cast %142 : vector<1x1x128xf32> to vector<1x128xf32>
    %144 = vector.broadcast %143 : vector<1x128xf32> to vector<34x128xf32>
    %145 = arith.addf %141, %144 : vector<34x128xf32>
    %cst_74 = arith.constant 5.000000e-01 : f32
    %146 = vector.broadcast %cst_74 : f32 to vector<34x128xf32>
    %147 = arith.mulf %146, %145 : vector<34x128xf32>
    %cst_75 = arith.constant 4.471500e-02 : f32
    %148 = vector.broadcast %cst_75 : f32 to vector<34x128xf32>
    %149 = arith.mulf %148, %145 : vector<34x128xf32>
    %150 = arith.mulf %149, %145 : vector<34x128xf32>
    %151 = arith.mulf %150, %145 : vector<34x128xf32>
    %152 = arith.addf %145, %151 : vector<34x128xf32>
    %cst_76 = arith.constant 0.797884583 : f32
    %153 = vector.broadcast %cst_76 : f32 to vector<34x128xf32>
    %154 = arith.mulf %153, %152 : vector<34x128xf32>
    %155 = math.tanh %154 : vector<34x128xf32>
    %cst_77 = arith.constant 1.000000e+00 : f32
    %156 = vector.broadcast %cst_77 : f32 to vector<34x128xf32>
    %157 = arith.addf %156, %155 : vector<34x128xf32>
    %158 = arith.mulf %147, %157 : vector<34x128xf32>
    %c0_78 = arith.constant 0 : index
    %c0_79 = arith.constant 0 : index
    %c0_80 = arith.constant 0 : index
    %159 = vector.load %arg20[%c0_78, %c0_79, %c0_80] : memref<2x128x32xf32, #tpu.memory_space<vmem>>, vector<1x128x32xf32>
    %160 = vector.shape_cast %159 : vector<1x128x32xf32> to vector<128x32xf32>
    %cst_81 = arith.constant dense<0.000000e+00> : vector<34x32xf32>
    %161 = tpu.matmul %158, %160, %cst_81 {dimension_numbers = #tpu.dot_dimension_numbers<[1], [0], [0], [1], [0, 0, 1, 1], [], []>} : vector<34x128xf32>, vector<128x32xf32>, vector<34x32xf32> -> vector<34x32xf32>
    %162 = arith.addf %114, %161 : vector<34x32xf32>
    %c0_82 = arith.constant 0 : index
    %c0_83 = arith.constant 0 : index
    %c0_84 = arith.constant 0 : index
    %163 = vector.load %arg21[%c0_82, %c0_83, %c0_84] : memref<2x1x32xf32, #tpu.memory_space<vmem>>, vector<1x1x32xf32>
    %164 = vector.shape_cast %163 : vector<1x1x32xf32> to vector<1x32xf32>
    %165 = vector.broadcast %164 : vector<1x32xf32> to vector<34x32xf32>
    %166 = arith.addf %162, %165 : vector<34x32xf32>
    %c1 = arith.constant 1 : index
    %c0_85 = arith.constant 0 : index
    %c0_86 = arith.constant 0 : index
    %167 = vector.load %arg6[%c1, %c0_85, %c0_86] : memref<2x1x32xf32, #tpu.memory_space<vmem>>, vector<1x1x32xf32>
    %168 = vector.shape_cast %167 : vector<1x1x32xf32> to vector<1x32xf32>
    %c1_87 = arith.constant 1 : index
    %c0_88 = arith.constant 0 : index
    %c0_89 = arith.constant 0 : index
    %169 = vector.load %arg7[%c1_87, %c0_88, %c0_89] : memref<2x1x32xf32, #tpu.memory_space<vmem>>, vector<1x1x32xf32>
    %170 = vector.shape_cast %169 : vector<1x1x32xf32> to vector<1x32xf32>
    %cst_90 = arith.constant dense<0.000000e+00> : vector<34xf32>
    %171 = vector.multi_reduction <add>, %166, %cst_90 [1] : vector<34x32xf32> to vector<34xf32>
    %172 = vector.shape_cast %171 : vector<34xf32> to vector<34x1xf32>
    %cst_91 = arith.constant 3.200000e+01 : f32
    %173 = vector.broadcast %cst_91 : f32 to vector<34x1xf32>
    %174 = arith.divf %172, %173 : vector<34x1xf32>
    %175 = vector.broadcast %174 : vector<34x1xf32> to vector<34x32xf32>
    %176 = arith.subf %166, %175 : vector<34x32xf32>
    %177 = arith.mulf %176, %176 : vector<34x32xf32>
    %cst_92 = arith.constant dense<0.000000e+00> : vector<34xf32>
    %178 = vector.multi_reduction <add>, %177, %cst_92 [1] : vector<34x32xf32> to vector<34xf32>
    %179 = vector.shape_cast %178 : vector<34xf32> to vector<34x1xf32>
    %cst_93 = arith.constant 3.200000e+01 : f32
    %180 = vector.broadcast %cst_93 : f32 to vector<34x1xf32>
    %181 = arith.divf %179, %180 : vector<34x1xf32>
    %cst_94 = arith.constant 9.99999997E-7 : f32
    %182 = vector.broadcast %cst_94 : f32 to vector<34x1xf32>
    %183 = arith.addf %181, %182 : vector<34x1xf32>
    %184 = math.rsqrt %183 : vector<34x1xf32>
    %185 = vector.broadcast %184 : vector<34x1xf32> to vector<34x32xf32>
    %186 = arith.mulf %176, %185 : vector<34x32xf32>
    %187 = vector.broadcast %168 : vector<1x32xf32> to vector<34x32xf32>
    %188 = arith.mulf %186, %187 : vector<34x32xf32>
    %189 = vector.broadcast %170 : vector<1x32xf32> to vector<34x32xf32>
    %190 = arith.addf %188, %189 : vector<34x32xf32>
    %c1_95 = arith.constant 1 : index
    %c0_96 = arith.constant 0 : index
    %c0_97 = arith.constant 0 : index
    %191 = vector.load %arg8[%c1_95, %c0_96, %c0_97] : memref<2x32x32xf32, #tpu.memory_space<vmem>>, vector<1x32x32xf32>
    %192 = vector.shape_cast %191 : vector<1x32x32xf32> to vector<32x32xf32>
    %cst_98 = arith.constant dense<0.000000e+00> : vector<34x32xf32>
    %193 = tpu.matmul %190, %192, %cst_98 {dimension_numbers = #tpu.dot_dimension_numbers<[1], [0], [0], [1], [0, 0, 1, 1], [], []>} : vector<34x32xf32>, vector<32x32xf32>, vector<34x32xf32> -> vector<34x32xf32>
    %c1_99 = arith.constant 1 : index
    %c0_100 = arith.constant 0 : index
    %c0_101 = arith.constant 0 : index
    %194 = vector.load %arg9[%c1_99, %c0_100, %c0_101] : memref<2x1x32xf32, #tpu.memory_space<vmem>>, vector<1x1x32xf32>
    %195 = vector.shape_cast %194 : vector<1x1x32xf32> to vector<1x32xf32>
    %196 = vector.broadcast %195 : vector<1x32xf32> to vector<34x32xf32>
    %197 = arith.addf %193, %196 : vector<34x32xf32>
    %c1_102 = arith.constant 1 : index
    %c0_103 = arith.constant 0 : index
    %c0_104 = arith.constant 0 : index
    %198 = vector.load %arg10[%c1_102, %c0_103, %c0_104] : memref<2x32x32xf32, #tpu.memory_space<vmem>>, vector<1x32x32xf32>
    %199 = vector.shape_cast %198 : vector<1x32x32xf32> to vector<32x32xf32>
    %cst_105 = arith.constant dense<0.000000e+00> : vector<34x32xf32>
    %200 = tpu.matmul %190, %199, %cst_105 {dimension_numbers = #tpu.dot_dimension_numbers<[1], [0], [0], [1], [0, 0, 1, 1], [], []>} : vector<34x32xf32>, vector<32x32xf32>, vector<34x32xf32> -> vector<34x32xf32>
    %c1_106 = arith.constant 1 : index
    %c0_107 = arith.constant 0 : index
    %c0_108 = arith.constant 0 : index
    %201 = vector.load %arg11[%c1_106, %c0_107, %c0_108] : memref<2x1x32xf32, #tpu.memory_space<vmem>>, vector<1x1x32xf32>
    %202 = vector.shape_cast %201 : vector<1x1x32xf32> to vector<1x32xf32>
    %203 = vector.broadcast %202 : vector<1x32xf32> to vector<34x32xf32>
    %204 = arith.addf %200, %203 : vector<34x32xf32>
    %c1_109 = arith.constant 1 : index
    %c0_110 = arith.constant 0 : index
    %c0_111 = arith.constant 0 : index
    %205 = vector.load %arg12[%c1_109, %c0_110, %c0_111] : memref<2x32x32xf32, #tpu.memory_space<vmem>>, vector<1x32x32xf32>
    %206 = vector.shape_cast %205 : vector<1x32x32xf32> to vector<32x32xf32>
    %cst_112 = arith.constant dense<0.000000e+00> : vector<34x32xf32>
    %207 = tpu.matmul %190, %206, %cst_112 {dimension_numbers = #tpu.dot_dimension_numbers<[1], [0], [0], [1], [0, 0, 1, 1], [], []>} : vector<34x32xf32>, vector<32x32xf32>, vector<34x32xf32> -> vector<34x32xf32>
    %c1_113 = arith.constant 1 : index
    %c0_114 = arith.constant 0 : index
    %c0_115 = arith.constant 0 : index
    %208 = vector.load %arg13[%c1_113, %c0_114, %c0_115] : memref<2x1x32xf32, #tpu.memory_space<vmem>>, vector<1x1x32xf32>
    %209 = vector.shape_cast %208 : vector<1x1x32xf32> to vector<1x32xf32>
    %210 = vector.broadcast %209 : vector<1x32xf32> to vector<34x32xf32>
    %211 = arith.addf %207, %210 : vector<34x32xf32>
    %212 = vector.extract_strided_slice %197 {offsets = [0, 0], sizes = [17, 32], strides = [1, 1]} : vector<34x32xf32> to vector<17x32xf32>
    %213 = vector.extract_strided_slice %204 {offsets = [0, 0], sizes = [17, 32], strides = [1, 1]} : vector<34x32xf32> to vector<17x32xf32>
    %214 = vector.extract_strided_slice %211 {offsets = [0, 0], sizes = [17, 32], strides = [1, 1]} : vector<34x32xf32> to vector<17x32xf32>
    %215 = tpu.concatenate %212, %212, %212, %212 in 0 : vector<17x32xf32>, vector<17x32xf32>, vector<17x32xf32>, vector<17x32xf32> -> vector<68x32xf32>
    %216 = arith.mulf %215, %0 : vector<68x32xf32>
    %cst_116 = arith.constant dense<0.000000e+00> : vector<68x17xf32>
    %217 = tpu.matmul %216, %213, %cst_116 {dimension_numbers = #tpu.dot_dimension_numbers<[1], [1], [0], [0], [0, 0, 1, 0], [], []>} : vector<68x32xf32>, vector<17x32xf32>, vector<68x17xf32> -> vector<68x17xf32>
    %cst_117 = arith.constant dense<0xFF800000> : vector<68xf32>
    %218 = vector.multi_reduction <maximumf>, %217, %cst_117 [1] : vector<68x17xf32> to vector<68xf32>
    %219 = vector.shape_cast %218 : vector<68xf32> to vector<68x1xf32>
    %220 = vector.broadcast %219 : vector<68x1xf32> to vector<68x17xf32>
    %221 = arith.subf %217, %220 : vector<68x17xf32>
    %222 = math.exp %221 : vector<68x17xf32>
    %cst_118 = arith.constant dense<0.000000e+00> : vector<68xf32>
    %223 = vector.multi_reduction <add>, %222, %cst_118 [1] : vector<68x17xf32> to vector<68xf32>
    %224 = vector.shape_cast %223 : vector<68xf32> to vector<68x1xf32>
    %225 = tpu.reciprocal %224 {approx = true} : vector<68x1xf32> -> vector<68x1xf32>
    %226 = vector.broadcast %225 : vector<68x1xf32> to vector<68x17xf32>
    %227 = arith.mulf %222, %226 : vector<68x17xf32>
    %cst_119 = arith.constant dense<0.000000e+00> : vector<68x32xf32>
    %228 = tpu.matmul %227, %214, %cst_119 {dimension_numbers = #tpu.dot_dimension_numbers<[1], [0], [0], [1], [0, 0, 1, 1], [], []>} : vector<68x17xf32>, vector<17x32xf32>, vector<68x32xf32> -> vector<68x32xf32>
    %229 = arith.mulf %228, %0 : vector<68x32xf32>
    %230 = vector.extract_strided_slice %229 {offsets = [0, 0], sizes = [17, 32], strides = [1, 1]} : vector<68x32xf32> to vector<17x32xf32>
    %231 = vector.extract_strided_slice %229 {offsets = [17, 0], sizes = [17, 32], strides = [1, 1]} : vector<68x32xf32> to vector<17x32xf32>
    %232 = arith.addf %230, %231 : vector<17x32xf32>
    %233 = vector.extract_strided_slice %229 {offsets = [34, 0], sizes = [17, 32], strides = [1, 1]} : vector<68x32xf32> to vector<17x32xf32>
    %234 = arith.addf %232, %233 : vector<17x32xf32>
    %235 = vector.extract_strided_slice %229 {offsets = [51, 0], sizes = [17, 32], strides = [1, 1]} : vector<68x32xf32> to vector<17x32xf32>
    %236 = arith.addf %234, %235 : vector<17x32xf32>
    %237 = vector.extract_strided_slice %197 {offsets = [17, 0], sizes = [17, 32], strides = [1, 1]} : vector<34x32xf32> to vector<17x32xf32>
    %238 = vector.extract_strided_slice %204 {offsets = [17, 0], sizes = [17, 32], strides = [1, 1]} : vector<34x32xf32> to vector<17x32xf32>
    %239 = vector.extract_strided_slice %211 {offsets = [17, 0], sizes = [17, 32], strides = [1, 1]} : vector<34x32xf32> to vector<17x32xf32>
    %240 = tpu.concatenate %237, %237, %237, %237 in 0 : vector<17x32xf32>, vector<17x32xf32>, vector<17x32xf32>, vector<17x32xf32> -> vector<68x32xf32>
    %241 = arith.mulf %240, %0 : vector<68x32xf32>
    %cst_120 = arith.constant dense<0.000000e+00> : vector<68x17xf32>
    %242 = tpu.matmul %241, %238, %cst_120 {dimension_numbers = #tpu.dot_dimension_numbers<[1], [1], [0], [0], [0, 0, 1, 0], [], []>} : vector<68x32xf32>, vector<17x32xf32>, vector<68x17xf32> -> vector<68x17xf32>
    %cst_121 = arith.constant dense<0xFF800000> : vector<68xf32>
    %243 = vector.multi_reduction <maximumf>, %242, %cst_121 [1] : vector<68x17xf32> to vector<68xf32>
    %244 = vector.shape_cast %243 : vector<68xf32> to vector<68x1xf32>
    %245 = vector.broadcast %244 : vector<68x1xf32> to vector<68x17xf32>
    %246 = arith.subf %242, %245 : vector<68x17xf32>
    %247 = math.exp %246 : vector<68x17xf32>
    %cst_122 = arith.constant dense<0.000000e+00> : vector<68xf32>
    %248 = vector.multi_reduction <add>, %247, %cst_122 [1] : vector<68x17xf32> to vector<68xf32>
    %249 = vector.shape_cast %248 : vector<68xf32> to vector<68x1xf32>
    %250 = tpu.reciprocal %249 {approx = true} : vector<68x1xf32> -> vector<68x1xf32>
    %251 = vector.broadcast %250 : vector<68x1xf32> to vector<68x17xf32>
    %252 = arith.mulf %247, %251 : vector<68x17xf32>
    %cst_123 = arith.constant dense<0.000000e+00> : vector<68x32xf32>
    %253 = tpu.matmul %252, %239, %cst_123 {dimension_numbers = #tpu.dot_dimension_numbers<[1], [0], [0], [1], [0, 0, 1, 1], [], []>} : vector<68x17xf32>, vector<17x32xf32>, vector<68x32xf32> -> vector<68x32xf32>
    %254 = arith.mulf %253, %0 : vector<68x32xf32>
    %255 = vector.extract_strided_slice %254 {offsets = [0, 0], sizes = [17, 32], strides = [1, 1]} : vector<68x32xf32> to vector<17x32xf32>
    %256 = vector.extract_strided_slice %254 {offsets = [17, 0], sizes = [17, 32], strides = [1, 1]} : vector<68x32xf32> to vector<17x32xf32>
    %257 = arith.addf %255, %256 : vector<17x32xf32>
    %258 = vector.extract_strided_slice %254 {offsets = [34, 0], sizes = [17, 32], strides = [1, 1]} : vector<68x32xf32> to vector<17x32xf32>
    %259 = arith.addf %257, %258 : vector<17x32xf32>
    %260 = vector.extract_strided_slice %254 {offsets = [51, 0], sizes = [17, 32], strides = [1, 1]} : vector<68x32xf32> to vector<17x32xf32>
    %261 = arith.addf %259, %260 : vector<17x32xf32>
    %262 = tpu.concatenate %236, %261 in 0 : vector<17x32xf32>, vector<17x32xf32> -> vector<34x32xf32>
    %c1_124 = arith.constant 1 : index
    %c0_125 = arith.constant 0 : index
    %c0_126 = arith.constant 0 : index
    %263 = vector.load %arg14[%c1_124, %c0_125, %c0_126] : memref<2x32x32xf32, #tpu.memory_space<vmem>>, vector<1x32x32xf32>
    %264 = vector.shape_cast %263 : vector<1x32x32xf32> to vector<32x32xf32>
    %cst_127 = arith.constant dense<0.000000e+00> : vector<34x32xf32>
    %265 = tpu.matmul %262, %264, %cst_127 {dimension_numbers = #tpu.dot_dimension_numbers<[1], [0], [0], [1], [0, 0, 1, 1], [], []>} : vector<34x32xf32>, vector<32x32xf32>, vector<34x32xf32> -> vector<34x32xf32>
    %266 = arith.addf %166, %265 : vector<34x32xf32>
    %c1_128 = arith.constant 1 : index
    %c0_129 = arith.constant 0 : index
    %c0_130 = arith.constant 0 : index
    %267 = vector.load %arg15[%c1_128, %c0_129, %c0_130] : memref<2x1x32xf32, #tpu.memory_space<vmem>>, vector<1x1x32xf32>
    %268 = vector.shape_cast %267 : vector<1x1x32xf32> to vector<1x32xf32>
    %269 = vector.broadcast %268 : vector<1x32xf32> to vector<34x32xf32>
    %270 = arith.addf %266, %269 : vector<34x32xf32>
    %c1_131 = arith.constant 1 : index
    %c0_132 = arith.constant 0 : index
    %c0_133 = arith.constant 0 : index
    %271 = vector.load %arg16[%c1_131, %c0_132, %c0_133] : memref<2x1x32xf32, #tpu.memory_space<vmem>>, vector<1x1x32xf32>
    %272 = vector.shape_cast %271 : vector<1x1x32xf32> to vector<1x32xf32>
    %c1_134 = arith.constant 1 : index
    %c0_135 = arith.constant 0 : index
    %c0_136 = arith.constant 0 : index
    %273 = vector.load %arg17[%c1_134, %c0_135, %c0_136] : memref<2x1x32xf32, #tpu.memory_space<vmem>>, vector<1x1x32xf32>
    %274 = vector.shape_cast %273 : vector<1x1x32xf32> to vector<1x32xf32>
    %cst_137 = arith.constant dense<0.000000e+00> : vector<34xf32>
    %275 = vector.multi_reduction <add>, %270, %cst_137 [1] : vector<34x32xf32> to vector<34xf32>
    %276 = vector.shape_cast %275 : vector<34xf32> to vector<34x1xf32>
    %cst_138 = arith.constant 3.200000e+01 : f32
    %277 = vector.broadcast %cst_138 : f32 to vector<34x1xf32>
    %278 = arith.divf %276, %277 : vector<34x1xf32>
    %279 = vector.broadcast %278 : vector<34x1xf32> to vector<34x32xf32>
    %280 = arith.subf %270, %279 : vector<34x32xf32>
    %281 = arith.mulf %280, %280 : vector<34x32xf32>
    %cst_139 = arith.constant dense<0.000000e+00> : vector<34xf32>
    %282 = vector.multi_reduction <add>, %281, %cst_139 [1] : vector<34x32xf32> to vector<34xf32>
    %283 = vector.shape_cast %282 : vector<34xf32> to vector<34x1xf32>
    %cst_140 = arith.constant 3.200000e+01 : f32
    %284 = vector.broadcast %cst_140 : f32 to vector<34x1xf32>
    %285 = arith.divf %283, %284 : vector<34x1xf32>
    %cst_141 = arith.constant 9.99999997E-7 : f32
    %286 = vector.broadcast %cst_141 : f32 to vector<34x1xf32>
    %287 = arith.addf %285, %286 : vector<34x1xf32>
    %288 = math.rsqrt %287 : vector<34x1xf32>
    %289 = vector.broadcast %288 : vector<34x1xf32> to vector<34x32xf32>
    %290 = arith.mulf %280, %289 : vector<34x32xf32>
    %291 = vector.broadcast %272 : vector<1x32xf32> to vector<34x32xf32>
    %292 = arith.mulf %290, %291 : vector<34x32xf32>
    %293 = vector.broadcast %274 : vector<1x32xf32> to vector<34x32xf32>
    %294 = arith.addf %292, %293 : vector<34x32xf32>
    %c1_142 = arith.constant 1 : index
    %c0_143 = arith.constant 0 : index
    %c0_144 = arith.constant 0 : index
    %295 = vector.load %arg18[%c1_142, %c0_143, %c0_144] : memref<2x32x128xf32, #tpu.memory_space<vmem>>, vector<1x32x128xf32>
    %296 = vector.shape_cast %295 : vector<1x32x128xf32> to vector<32x128xf32>
    %cst_145 = arith.constant dense<0.000000e+00> : vector<34x128xf32>
    %297 = tpu.matmul %294, %296, %cst_145 {dimension_numbers = #tpu.dot_dimension_numbers<[1], [0], [0], [1], [0, 0, 1, 1], [], []>} : vector<34x32xf32>, vector<32x128xf32>, vector<34x128xf32> -> vector<34x128xf32>
    %c1_146 = arith.constant 1 : index
    %c0_147 = arith.constant 0 : index
    %c0_148 = arith.constant 0 : index
    %298 = vector.load %arg19[%c1_146, %c0_147, %c0_148] : memref<2x1x128xf32, #tpu.memory_space<vmem>>, vector<1x1x128xf32>
    %299 = vector.shape_cast %298 : vector<1x1x128xf32> to vector<1x128xf32>
    %300 = vector.broadcast %299 : vector<1x128xf32> to vector<34x128xf32>
    %301 = arith.addf %297, %300 : vector<34x128xf32>
    %cst_149 = arith.constant 5.000000e-01 : f32
    %302 = vector.broadcast %cst_149 : f32 to vector<34x128xf32>
    %303 = arith.mulf %302, %301 : vector<34x128xf32>
    %cst_150 = arith.constant 4.471500e-02 : f32
    %304 = vector.broadcast %cst_150 : f32 to vector<34x128xf32>
    %305 = arith.mulf %304, %301 : vector<34x128xf32>
    %306 = arith.mulf %305, %301 : vector<34x128xf32>
    %307 = arith.mulf %306, %301 : vector<34x128xf32>
    %308 = arith.addf %301, %307 : vector<34x128xf32>
    %cst_151 = arith.constant 0.797884583 : f32
    %309 = vector.broadcast %cst_151 : f32 to vector<34x128xf32>
    %310 = arith.mulf %309, %308 : vector<34x128xf32>
    %311 = math.tanh %310 : vector<34x128xf32>
    %cst_152 = arith.constant 1.000000e+00 : f32
    %312 = vector.broadcast %cst_152 : f32 to vector<34x128xf32>
    %313 = arith.addf %312, %311 : vector<34x128xf32>
    %314 = arith.mulf %303, %313 : vector<34x128xf32>
    %c1_153 = arith.constant 1 : index
    %c0_154 = arith.constant 0 : index
    %c0_155 = arith.constant 0 : index
    %315 = vector.load %arg20[%c1_153, %c0_154, %c0_155] : memref<2x128x32xf32, #tpu.memory_space<vmem>>, vector<1x128x32xf32>
    %316 = vector.shape_cast %315 : vector<1x128x32xf32> to vector<128x32xf32>
    %cst_156 = arith.constant dense<0.000000e+00> : vector<34x32xf32>
    %317 = tpu.matmul %314, %316, %cst_156 {dimension_numbers = #tpu.dot_dimension_numbers<[1], [0], [0], [1], [0, 0, 1, 1], [], []>} : vector<34x128xf32>, vector<128x32xf32>, vector<34x32xf32> -> vector<34x32xf32>
    %318 = arith.addf %270, %317 : vector<34x32xf32>
    %c1_157 = arith.constant 1 : index
    %c0_158 = arith.constant 0 : index
    %c0_159 = arith.constant 0 : index
    %319 = vector.load %arg21[%c1_157, %c0_158, %c0_159] : memref<2x1x32xf32, #tpu.memory_space<vmem>>, vector<1x1x32xf32>
    %320 = vector.shape_cast %319 : vector<1x1x32xf32> to vector<1x32xf32>
    %321 = vector.broadcast %320 : vector<1x32xf32> to vector<34x32xf32>
    %322 = arith.addf %318, %321 : vector<34x32xf32>
    %323 = vector.extract_strided_slice %322 {offsets = [0, 0], sizes = [1, 32], strides = [1, 1]} : vector<34x32xf32> to vector<1x32xf32>
    %324 = vector.extract_strided_slice %322 {offsets = [17, 0], sizes = [1, 32], strides = [1, 1]} : vector<34x32xf32> to vector<1x32xf32>
    %325 = tpu.concatenate %323, %324 in 0 : vector<1x32xf32>, vector<1x32xf32> -> vector<2x32xf32>
    %c0_160 = arith.constant 0 : index
    %c0_161 = arith.constant 0 : index
    %326 = vector.load %arg22[%c0_160, %c0_161] : memref<1x32xf32, #tpu.memory_space<vmem>>, vector<1x32xf32>
    %c0_162 = arith.constant 0 : index
    %c0_163 = arith.constant 0 : index
    %327 = vector.load %arg23[%c0_162, %c0_163] : memref<1x32xf32, #tpu.memory_space<vmem>>, vector<1x32xf32>
    %cst_164 = arith.constant dense<0.000000e+00> : vector<2xf32>
    %328 = vector.multi_reduction <add>, %325, %cst_164 [1] : vector<2x32xf32> to vector<2xf32>
    %329 = vector.shape_cast %328 : vector<2xf32> to vector<2x1xf32>
    %cst_165 = arith.constant 3.200000e+01 : f32
    %330 = vector.broadcast %cst_165 : f32 to vector<2x1xf32>
    %331 = arith.divf %329, %330 : vector<2x1xf32>
    %332 = vector.broadcast %331 : vector<2x1xf32> to vector<2x32xf32>
    %333 = arith.subf %325, %332 : vector<2x32xf32>
    %334 = arith.mulf %333, %333 : vector<2x32xf32>
    %cst_166 = arith.constant dense<0.000000e+00> : vector<2xf32>
    %335 = vector.multi_reduction <add>, %334, %cst_166 [1] : vector<2x32xf32> to vector<2xf32>
    %336 = vector.shape_cast %335 : vector<2xf32> to vector<2x1xf32>
    %cst_167 = arith.constant 3.200000e+01 : f32
    %337 = vector.broadcast %cst_167 : f32 to vector<2x1xf32>
    %338 = arith.divf %336, %337 : vector<2x1xf32>
    %cst_168 = arith.constant 9.99999997E-7 : f32
    %339 = vector.broadcast %cst_168 : f32 to vector<2x1xf32>
    %340 = arith.addf %338, %339 : vector<2x1xf32>
    %341 = math.rsqrt %340 : vector<2x1xf32>
    %342 = vector.broadcast %341 : vector<2x1xf32> to vector<2x32xf32>
    %343 = arith.mulf %333, %342 : vector<2x32xf32>
    %344 = vector.broadcast %326 : vector<1x32xf32> to vector<2x32xf32>
    %345 = arith.mulf %343, %344 : vector<2x32xf32>
    %346 = vector.broadcast %327 : vector<1x32xf32> to vector<2x32xf32>
    %347 = arith.addf %345, %346 : vector<2x32xf32>
    %c0_169 = arith.constant 0 : index
    %c0_170 = arith.constant 0 : index
    %348 = vector.load %arg24[%c0_169, %c0_170] : memref<32x5xf32, #tpu.memory_space<vmem>>, vector<32x5xf32>
    %cst_171 = arith.constant dense<0.000000e+00> : vector<2x5xf32>
    %349 = tpu.matmul %347, %348, %cst_171 {dimension_numbers = #tpu.dot_dimension_numbers<[1], [0], [0], [1], [0, 0, 1, 1], [], []>} : vector<2x32xf32>, vector<32x5xf32>, vector<2x5xf32> -> vector<2x5xf32>
    %c0_172 = arith.constant 0 : index
    %c0_173 = arith.constant 0 : index
    %350 = vector.load %arg1[%c0_172, %c0_173] : memref<2x8xf32, #tpu.memory_space<vmem>>, vector<2x8xf32>
    %c0_174 = arith.constant 0 : index
    %c0_175 = arith.constant 0 : index
    %351 = vector.load %arg25[%c0_174, %c0_175] : memref<8x5xf32, #tpu.memory_space<vmem>>, vector<8x5xf32>
    %cst_176 = arith.constant dense<0.000000e+00> : vector<2x5xf32>
    %352 = tpu.matmul %350, %351, %cst_176 {dimension_numbers = #tpu.dot_dimension_numbers<[1], [0], [0], [1], [0, 0, 1, 1], [], []>} : vector<2x8xf32>, vector<8x5xf32>, vector<2x5xf32> -> vector<2x5xf32>
    %353 = arith.addf %349, %352 : vector<2x5xf32>
    %c0_177 = arith.constant 0 : index
    %c0_178 = arith.constant 0 : index
    %354 = vector.load %arg26[%c0_177, %c0_178] : memref<1x5xf32, #tpu.memory_space<vmem>>, vector<1x5xf32>
    %355 = vector.broadcast %354 : vector<1x5xf32> to vector<2x5xf32>
    %356 = arith.addf %353, %355 : vector<2x5xf32>
    %c0_179 = arith.constant 0 : index
    %c0_180 = arith.constant 0 : index
    %357 = vector.load %arg27[%c0_179, %c0_180] : memref<2x5xf32, #tpu.memory_space<vmem>>, vector<2x5xf32>
    tpu.vector_store %arg27[%c0_179, %c0_180], %356 {strides = array<i32>} : memref<2x5xf32, #tpu.memory_space<vmem>>, vector<2x5xf32>,
    return
  }
}

</mosaic_0001>

<llo_original>
// kernel: squeeze.1
$region0: #{squeeze.1}
  %s0 = inlined_call_operand.vmem [shape: f32[2,1,3,16,16], index: 0, kind: input, shape index: {}]
  %s1 = inlined_call_operand.vmem [shape: f32[2,3,4,4,4,4], index: 1, kind: output, shape index: {}]
  $region1: #{squeeze.1} parent=0
    #allocation0 [shape = 'u8[393216]{0}', space=vmem, size = 0x60000, scoped, tag = 'scoped mem for output reshape']
    %v2 = vld [vmem:[%s0] sm:$0xff]
    %vm3 = vcmask 31744
    %4 = vst.msk [vmem:[#allocation0] ss:$8 sm:$0xf] %vm3, %v2
    %5 = vst.msk [vmem:[#allocation0] ss:$8 sm:$0xf0] %vm3, %v2
    %s6 = scalar_lea.vmem %s0, 8
    %v7 = vld [vmem:[%s6] sm:$0xff]
    %vm8 = vcmask 31744
    %s9 = scalar_lea.vmem [#allocation0], 64
    %10 = vst.msk [vmem:[%s9] ss:$8 sm:$0xf] %vm8, %v7
    %s11 = scalar_lea.vmem [#allocation0], 64
    %12 = vst.msk [vmem:[%s11] ss:$8 sm:$0xf0] %vm8, %v7
    %s13 = scalar_lea.vmem %s0, 16
    %v14 = vld [vmem:[%s13] sm:$0xff]
    %vm15 = vcmask 31744
    %s16 = scalar_lea.vmem [#allocation0], 128
    %17 = vst.msk [vmem:[%s16] ss:$8 sm:$0xf] %vm15, %v14
    %s18 = scalar_lea.vmem [#allocation0], 128
    %19 = vst.msk [vmem:[%s18] ss:$8 sm:$0xf0] %vm15, %v14
    %s20 = scalar_lea.vmem %s0, 24
    %v21 = vld [vmem:[%s20] sm:$0xff]
    %vm22 = vcmask 31744
    %s23 = scalar_lea.vmem [#allocation0], 192
    %24 = vst.msk [vmem:[%s23] ss:$8 sm:$0xf] %vm22, %v21
    %s25 = scalar_lea.vmem [#allocation0], 192
    %26 = vst.msk [vmem:[%s25] ss:$8 sm:$0xf0] %vm22, %v21
    %s27 = scalar_lea.vmem %s0, 32
    %v28 = vld [vmem:[%s27] sm:$0xff]
    %vm29 = vcmask 31744
    %s30 = scalar_lea.vmem [#allocation0], 256
    %31 = vst.msk [vmem:[%s30] ss:$8 sm:$0xf] %vm29, %v28
    %s32 = scalar_lea.vmem [#allocation0], 256
    %33 = vst.msk [vmem:[%s32] ss:$8 sm:$0xf0] %vm29, %v28
    %s34 = scalar_lea.vmem %s0, 40
    %v35 = vld [vmem:[%s34] sm:$0xff]
    %vm36 = vcmask 31744
    %s37 = scalar_lea.vmem [#allocation0], 320
    %38 = vst.msk [vmem:[%s37] ss:$8 sm:$0xf] %vm36, %v35
    %s39 = scalar_lea.vmem [#allocation0], 320
    %40 = vst.msk [vmem:[%s39] ss:$8 sm:$0xf0] %vm36, %v35
    %s41 = scalar_lea.vmem %s0, 48
    %v42 = vld [vmem:[%s41] sm:$0xff]
    %vm43 = vcmask 31744
    %s44 = scalar_lea.vmem [#allocation0], 384
    %45 = vst.msk [vmem:[%s44] ss:$8 sm:$0xf] %vm43, %v42
    %s46 = scalar_lea.vmem [#allocation0], 384
    %47 = vst.msk [vmem:[%s46] ss:$8 sm:$0xf0] %vm43, %v42
    %s48 = scalar_lea.vmem %s0, 56
    %v49 = vld [vmem:[%s48] sm:$0xff]
    %vm50 = vcmask 31744
    %s51 = scalar_lea.vmem [#allocation0], 448
    %52 = vst.msk [vmem:[%s51] ss:$8 sm:$0xf] %vm50, %v49
    %s53 = scalar_lea.vmem [#allocation0], 448
    %54 = vst.msk [vmem:[%s53] ss:$8 sm:$0xf0] %vm50, %v49
    %s55 = scalar_lea.vmem %s0, 64
    %v56 = vld [vmem:[%s55] sm:$0xff]
    %vm57 = vcmask 31744
    %s58 = scalar_lea.vmem [#allocation0], 512
    %59 = vst.msk [vmem:[%s58] ss:$8 sm:$0xf] %vm57, %v56
    %s60 = scalar_lea.vmem [#allocation0], 512
    %61 = vst.msk [vmem:[%s60] ss:$8 sm:$0xf0] %vm57, %v56
    %s62 = scalar_lea.vmem %s0, 72
    %v63 = vld [vmem:[%s62] sm:$0xff]
    %vm64 = vcmask 31744
    %s65 = scalar_lea.vmem [#allocation0], 576
    %66 = vst.msk [vmem:[%s65] ss:$8 sm:$0xf] %vm64, %v63
    %s67 = scalar_lea.vmem [#allocation0], 576
    %68 = vst.msk [vmem:[%s67] ss:$8 sm:$0xf0] %vm64, %v63
    %s69 = scalar_lea.vmem %s0, 80
    %v70 = vld [vmem:[%s69] sm:$0xff]
    %vm71 = vcmask 31744
    %s72 = scalar_lea.vmem [#allocation0], 640
    %73 = vst.msk [vmem:[%s72] ss:$8 sm:$0xf] %vm71, %v70
    %s74 = scalar_lea.vmem [#allocation0], 640
    %75 = vst.msk [vmem:[%s74] ss:$8 sm:$0xf0] %vm71, %v70
    %s76 = scalar_lea.vmem %s0, 88
    %v77 = vld [vmem:[%s76] sm:$0xff]
    %vm78 = vcmask 31744
    %s79 = scalar_lea.vmem [#allocation0], 704
    %80 = vst.msk [vmem:[%s79] ss:$8 sm:$0xf] %vm78, %v77
    %s81 = scalar_lea.vmem [#allocation0], 704
    %82 = vst.msk [vmem:[%s81] ss:$8 sm:$0xf0] %vm78, %v77
    %v83 = vld [vmem:[%s0] sm:$0xff]
    %84 = vrot.lane.b32.xlu0 %v83, 124
    %v85 = vpop.permute.xlu0 %84
    %vm86 = vcmask 31744
    %s87 = scalar_lea.vmem [#allocation0], 1
    %88 = vst.msk [vmem:[%s87] ss:$8 sm:$0xf] %vm86, %v85
    %s89 = scalar_lea.vmem [#allocation0], 1
    %90 = vst.msk [vmem:[%s89] ss:$8 sm:$0xf0] %vm86, %v85
    %s91 = scalar_lea.vmem %s0, 8
    %v92 = vld [vmem:[%s91] sm:$0xff]
    %93 = vrot.lane.b32.xlu0 %v92, 124
    %v94 = vpop.permute.xlu0 %93
    %vm95 = vcmask 31744
    %s96 = scalar_lea.vmem [#allocation0], 65
    %97 = vst.msk [vmem:[%s96] ss:$8 sm:$0xf] %vm95, %v94
    %s98 = scalar_lea.vmem [#allocation0], 65
    %99 = vst.msk [vmem:[%s98] ss:$8 sm:$0xf0] %vm95, %v94
    %s100 = scalar_lea.vmem %s0, 16
    %v101 = vld [vmem:[%s100] sm:$0xff]
    %102 = vrot.lane.b32.xlu0 %v101, 124
    %v103 = vpop.permute.xlu0 %102
    %vm104 = vcmask 31744
    %s105 = scalar_lea.vmem [#allocation0], 129
    %106 = vst.msk [vmem:[%s105] ss:$8 sm:$0xf] %vm104, %v103
    %s107 = scalar_lea.vmem [#allocation0], 129
    %108 = vst.msk [vmem:[%s107] ss:$8 sm:$0xf0] %vm104, %v103
    %s109 = scalar_lea.vmem %s0, 24
    %v110 = vld [vmem:[%s109] sm:$0xff]
    %111 = vrot.lane.b32.xlu0 %v110, 124
    %v112 = vpop.permute.xlu0 %111
    %vm113 = vcmask 31744
    %s114 = scalar_lea.vmem [#allocation0], 193
    %115 = vst.msk [vmem:[%s114] ss:$8 sm:$0xf] %vm113, %v112
    %s116 = scalar_lea.vmem [#allocation0], 193
    %117 = vst.msk [vmem:[%s116] ss:$8 sm:$0xf0] %vm113, %v112
    %s118 = scalar_lea.vmem %s0, 32
    %v119 = vld [vmem:[%s118] sm:$0xff]
    %120 = vrot.lane.b32.xlu0 %v119, 124
    %v121 = vpop.permute.xlu0 %120
    %vm122 = vcmask 31744
    %s123 = scalar_lea.vmem [#allocation0], 257
    %124 = vst.msk [vmem:[%s123] ss:$8 sm:$0xf] %vm122, %v121
    %s125 = scalar_lea.vmem [#allocation0], 257
    %126 = vst.msk [vmem:[%s125] ss:$8 sm:$0xf0] %vm122, %v121
    %s127 = scalar_lea.vmem %s0, 40
    %v128 = vld [vmem:[%s127] sm:$0xff]
    %129 = vrot.lane.b32.xlu0 %v128, 124
    %v130 = vpop.permute.xlu0 %129
    %vm131 = vcmask 31744
    %s132 = scalar_lea.vmem [#allocation0], 321
    %133 = vst.msk [vmem:[%s132] ss:$8 sm:$0xf] %vm131, %v130
    %s134 = scalar_lea.vmem [#allocation0], 321
    %135 = vst.msk [vmem:[%s134] ss:$8 sm:$0xf0] %vm131, %v130
    %s136 = scalar_lea.vmem %s0, 48
    %v137 = vld [vmem:[%s136] sm:$0xff]
    %138 = vrot.lane.b32.xlu0 %v137, 124
    %v139 = vpop.permute.xlu0 %138
    %vm140 = vcmask 31744
    %s141 = scalar_lea.vmem [#allocation0], 385
    %142 = vst.msk [vmem:[%s141] ss:$8 sm:$0xf] %vm140, %v139
    %s143 = scalar_lea.vmem [#allocation0], 385
    %144 = vst.msk [vmem:[%s143] ss:$8 sm:$0xf0] %vm140, %v139
    %s145 = scalar_lea.vmem %s0, 56
    %v146 = vld [vmem:[%s145] sm:$0xff]
    %147 = vrot.lane.b32.xlu0 %v146, 124
    %v148 = vpop.permute.xlu0 %147
    %vm149 = vcmask 31744
    %s150 = scalar_lea.vmem [#allocation0], 449
    %151 = vst.msk [vmem:[%s150] ss:$8 sm:$0xf] %vm149, %v148
    %s152 = scalar_lea.vmem [#allocation0], 449
    %153 = vst.msk [vmem:[%s152] ss:$8 sm:$0xf0] %vm149, %v148
    %s154 = scalar_lea.vmem %s0, 64
    %v155 = vld [vmem:[%s154] sm:$0xff]
    %156 = vrot.lane.b32.xlu0 %v155, 124
    %v157 = vpop.permute.xlu0 %156
    %vm158 = vcmask 31744
    %s159 = scalar_lea.vmem [#allocation0], 513
    %160 = vst.msk [vmem:[%s159] ss:$8 sm:$0xf] %vm158, %v157
    %s161 = scalar_lea.vmem [#allocation0], 513
    %162 = vst.msk [vmem:[%s161] ss:$8 sm:$0xf0] %vm158, %v157
    %s163 = scalar_lea.vmem %s0, 72
    %v164 = vld [vmem:[%s163] sm:$0xff]
    %165 = vrot.lane.b32.xlu0 %v164, 124
    %v166 = vpop.permute.xlu0 %165
    %vm167 = vcmask 31744
    %s168 = scalar_lea.vmem [#allocation0], 577
    %169 = vst.msk [vmem:[%s168] ss:$8 sm:$0xf] %vm167, %v166
    %s170 = scalar_lea.vmem [#allocation0], 577
    %171 = vst.msk [vmem:[%s170] ss:$8 sm:$0xf0] %vm167, %v166
    %s172 = scalar_lea.vmem %s0, 80
    %v173 = vld [vmem:[%s172] sm:$0xff]
    %174 = vrot.lane.b32.xlu0 %v173, 124
    %v175 = vpop.permute.xlu0 %174
    %vm176 = vcmask 31744
    %s177 = scalar_lea.vmem [#allocation0], 641
    %178 = vst.msk [vmem:[%s177] ss:$8 sm:$0xf] %vm176, %v175
    %s179 = scalar_lea.vmem [#allocation0], 641
    %180 = vst.msk [vmem:[%s179] ss:$8 sm:$0xf0] %vm176, %v175
    %s181 = scalar_lea.vmem %s0, 88
    %v182 = vld [vmem:[%s181] sm:$0xff]
    %183 = vrot.lane.b32.xlu0 %v182, 124
    %v184 = vpop.permute.xlu0 %183
    %vm185 = vcmask 31744
    %s186 = scalar_lea.vmem [#allocation0], 705
    %187 = vst.msk [vmem:[%s186] ss:$8 sm:$0xf] %vm185, %v184
    %s188 = scalar_lea.vmem [#allocation0], 705
    %189 = vst.msk [vmem:[%s188] ss:$8 sm:$0xf0] %vm185, %v184
    %v190 = vld [vmem:[%s0] sm:$0xff]
    %191 = vrot.lane.b32.xlu0 %v190, 120
    %v192 = vpop.permute.xlu0 %191
    %vm193 = vcmask 31744
    %s194 = scalar_lea.vmem [#allocation0], 2
    %195 = vst.msk [vmem:[%s194] ss:$8 sm:$0xf] %vm193, %v192
    %s196 = scalar_lea.vmem [#allocation0], 2
    %197 = vst.msk [vmem:[%s196] ss:$8 sm:$0xf0] %vm193, %v192
    %s198 = scalar_lea.vmem %s0, 8
    %v199 = vld [vmem:[%s198] sm:$0xff]
    %200 = vrot.lane.b32.xlu0 %v199, 120
    %v201 = vpop.permute.xlu0 %200
    %vm202 = vcmask 31744
    %s203 = scalar_lea.vmem [#allocation0], 66
    %204 = vst.msk [vmem:[%s203] ss:$8 sm:$0xf] %vm202, %v201
    %s205 = scalar_lea.vmem [#allocation0], 66
    %206 = vst.msk [vmem:[%s205] ss:$8 sm:$0xf0] %vm202, %v201
    %s207 = scalar_lea.vmem %s0, 16
    %v208 = vld [vmem:[%s207] sm:$0xff]
    %209 = vrot.lane.b32.xlu0 %v208, 120
    %v210 = vpop.permute.xlu0 %209
    %vm211 = vcmask 31744
    %s212 = scalar_lea.vmem [#allocation0], 130
    %213 = vst.msk [vmem:[%s212] ss:$8 sm:$0xf] %vm211, %v210
    %s214 = scalar_lea.vmem [#allocation0], 130
    %215 = vst.msk [vmem:[%s214] ss:$8 sm:$0xf0] %vm211, %v210
    %s216 = scalar_lea.vmem %s0, 24
    %v217 = vld [vmem:[%s216] sm:$0xff]
    %218 = vrot.lane.b32.xlu0 %v217, 120
    %v219 = vpop.permute.xlu0 %218
    %vm220 = vcmask 31744
    %s221 = scalar_lea.vmem [#allocation0], 194
    %222 = vst.msk [vmem:[%s221] ss:$8 sm:$0xf] %vm220, %v219
    %s223 = scalar_lea.vmem [#allocation0], 194
    %224 = vst.msk [vmem:[%s223] ss:$8 sm:$0xf0] %vm220, %v219
    %s225 = scalar_lea.vmem %s0, 32
    %v226 = vld [vmem:[%s225] sm:$0xff]
    %227 = vrot.lane.b32.xlu0 %v226, 120
    %v228 = vpop.permute.xlu0 %227
    %vm229 = vcmask 31744
    %s230 = scalar_lea.vmem [#allocation0], 258
    %231 = vst.msk [vmem:[%s230] ss:$8 sm:$0xf] %vm229, %v228
    %s232 = scalar_lea.vmem [#allocation0], 258
    %233 = vst.msk [vmem:[%s232] ss:$8 sm:$0xf0] %vm229, %v228
    %s234 = scalar_lea.vmem %s0, 40
    %v235 = vld [vmem:[%s234] sm:$0xff]
    %236 = vrot.lane.b32.xlu0 %v235, 120
    %v237 = vpop.permute.xlu0 %236
    %vm238 = vcmask 31744
    %s239 = scalar_lea.vmem [#allocation0], 322
    %240 = vst.msk [vmem:[%s239] ss:$8 sm:$0xf] %vm238, %v237
    %s241 = scalar_lea.vmem [#allocation0], 322
    %242 = vst.msk [vmem:[%s241] ss:$8 sm:$0xf0] %vm238, %v237
    %s243 = scalar_lea.vmem %s0, 48
    %v244 = vld [vmem:[%s243] sm:$0xff]
    %245 = vrot.lane.b32.xlu0 %v244, 120
    %v246 = vpop.permute.xlu0 %245
    %vm247 = vcmask 31744
    %s248 = scalar_lea.vmem [#allocation0], 386
    %249 = vst.msk [vmem:[%s248] ss:$8 sm:$0xf] %vm247, %v246
    %s250 = scalar_lea.vmem [#allocation0], 386
    %251 = vst.msk [vmem:[%s250] ss:$8 sm:$0xf0] %vm247, %v246
    %s252 = scalar_lea.vmem %s0, 56
    %v253 = vld [vmem:[%s252] sm:$0xff]
    %254 = vrot.lane.b32.xlu0 %v253, 120
    %v255 = vpop.permute.xlu0 %254
    %vm256 = vcmask 31744
    %s257 = scalar_lea.vmem [#allocation0], 450
    %258 = vst.msk [vmem:[%s257] ss:$8 sm:$0xf] %vm256, %v255
    %s259 = scalar_lea.vmem [#allocation0], 450
    %260 = vst.msk [vmem:[%s259] ss:$8 sm:$0xf0] %vm256, %v255
    %s261 = scalar_lea.vmem %s0, 64
    %v262 = vld [vmem:[%s261] sm:$0xff]
    %263 = vrot.lane.b32.xlu0 %v262, 120
    %v264 = vpop.permute.xlu0 %263
    %vm265 = vcmask 31744
    %s266 = scalar_lea.vmem [#allocation0], 514
    %267 = vst.msk [vmem:[%s266] ss:$8 sm:$0xf] %vm265, %v264
    %s268 = scalar_lea.vmem [#allocation0], 514
    %269 = vst.msk [vmem:[%s268] ss:$8 sm:$0xf0] %vm265, %v264
    %s270 = scalar_lea.vmem %s0, 72
    %v271 = vld [vmem:[%s270] sm:$0xff]
    %272 = vrot.lane.b32.xlu0 %v271, 120
    %v273 = vpop.permute.xlu0 %272
    %vm274 = vcmask 31744
    %s275 = scalar_lea.vmem [#allocation0], 578
    %276 = vst.msk [vmem:[%s275] ss:$8 sm:$0xf] %vm274, %v273
    %s277 = scalar_lea.vmem [#allocation0], 578
    %278 = vst.msk [vmem:[%s277] ss:$8 sm:$0xf0] %vm274, %v273
    %s279 = scalar_lea.vmem %s0, 80
    %v280 = vld [vmem:[%s279] sm:$0xff]
    %281 = vrot.lane.b32.xlu0 %v280, 120
    %v282 = vpop.permute.xlu0 %281
    %vm283 = vcmask 31744
    %s284 = scalar_lea.vmem [#allocation0], 642
    %285 = vst.msk [vmem:[%s284] ss:$8 sm:$0xf] %vm283, %v282
    %s286 = scalar_lea.vmem [#allocation0], 642
    %287 = vst.msk [vmem:[%s286] ss:$8 sm:$0xf0] %vm283, %v282
    %s288 = scalar_lea.vmem %s0, 88
    %v289 = vld [vmem:[%s288] sm:$0xff]
    %290 = vrot.lane.b32.xlu0 %v289, 120
    %v291 = vpop.permute.xlu0 %290
    %vm292 = vcmask 31744
    %s293 = scalar_lea.vmem [#allocation0], 706
    %294 = vst.msk [vmem:[%s293] ss:$8 sm:$0xf] %vm292, %v291
    %s295 = scalar_lea.vmem [#allocation0], 706
    %296 = vst.msk [vmem:[%s295] ss:$8 sm:$0xf0] %vm292, %v291
    %v297 = vld [vmem:[%s0] sm:$0xff]
    %298 = vrot.lane.b32.xlu0 %v297, 116
    %v299 = vpop.permute.xlu0 %298
    %vm300 = vcmask 31744
    %s301 = scalar_lea.vmem [#allocation0], 3
    %302 = vst.msk [vmem:[%s301] ss:$8 sm:$0xf] %vm300, %v299
    %s303 = scalar_lea.vmem [#allocation0], 3
    %304 = vst.msk [vmem:[%s303] ss:$8 sm:$0xf0] %vm300, %v299
    %s305 = scalar_lea.vmem %s0, 8
    %v306 = vld [vmem:[%s305] sm:$0xff]
    %307 = vrot.lane.b32.xlu0 %v306, 116
    %v308 = vpop.permute.xlu0 %307
    %vm309 = vcmask 31744
    %s310 = scalar_lea.vmem [#allocation0], 67
    %311 = vst.msk [vmem:[%s310] ss:$8 sm:$0xf] %vm309, %v308
    %s312 = scalar_lea.vmem [#allocation0], 67
    %313 = vst.msk [vmem:[%s312] ss:$8 sm:$0xf0] %vm309, %v308
    %s314 = scalar_lea.vmem %s0, 16
    %v315 = vld [vmem:[%s314] sm:$0xff]
    %316 = vrot.lane.b32.xlu0 %v315, 116
    %v317 = vpop.permute.xlu0 %316
    %vm318 = vcmask 31744
    %s319 = scalar_lea.vmem [#allocation0], 131
    %320 = vst.msk [vmem:[%s319] ss:$8 sm:$0xf] %vm318, %v317
    %s321 = scalar_lea.vmem [#allocation0], 131
    %322 = vst.msk [vmem:[%s321] ss:$8 sm:$0xf0] %vm318, %v317
    %s323 = scalar_lea.vmem %s0, 24
    %v324 = vld [vmem:[%s323] sm:$0xff]
    %325 = vrot.lane.b32.xlu0 %v324, 116
    %v326 = vpop.permute.xlu0 %325
    %vm327 = vcmask 31744
    %s328 = scalar_lea.vmem [#allocation0], 195
    %329 = vst.msk [vmem:[%s328] ss:$8 sm:$0xf] %vm327, %v326
    %s330 = scalar_lea.vmem [#allocation0], 195
    %331 = vst.msk [vmem:[%s330] ss:$8 sm:$0xf0] %vm327, %v326
    %s332 = scalar_lea.vmem %s0, 32
    %v333 = vld [vmem:[%s332] sm:$0xff]
    %334 = vrot.lane.b32.xlu0 %v333, 116
    %v335 = vpop.permute.xlu0 %334
    %vm336 = vcmask 31744
    %s337 = scalar_lea.vmem [#allocation0], 259
    %338 = vst.msk [vmem:[%s337] ss:$8 sm:$0xf] %vm336, %v335
    %s339 = scalar_lea.vmem [#allocation0], 259
    %340 = vst.msk [vmem:[%s339] ss:$8 sm:$0xf0] %vm336, %v335
    %s341 = scalar_lea.vmem %s0, 40
    %v342 = vld [vmem:[%s341] sm:$0xff]
    %343 = vrot.lane.b32.xlu0 %v342, 116
    %v344 = vpop.permute.xlu0 %343
    %vm345 = vcmask 31744
    %s346 = scalar_lea.vmem [#allocation0], 323
    %347 = vst.msk [vmem:[%s346] ss:$8 sm:$0xf] %vm345, %v344
    %s348 = scalar_lea.vmem [#allocation0], 323
    %349 = vst.msk [vmem:[%s348] ss:$8 sm:$0xf0] %vm345, %v344
    %s350 = scalar_lea.vmem %s0, 48
    %v351 = vld [vmem:[%s350] sm:$0xff]
    %352 = vrot.lane.b32.xlu0 %v351, 116
    %v353 = vpop.permute.xlu0 %352
    %vm354 = vcmask 31744
    %s355 = scalar_lea.vmem [#allocation0], 387
    %356 = vst.msk [vmem:[%s355] ss:$8 sm:$0xf] %vm354, %v353
    %s357 = scalar_lea.vmem [#allocation0], 387
    %358 = vst.msk [vmem:[%s357] ss:$8 sm:$0xf0] %vm354, %v353
    %s359 = scalar_lea.vmem %s0, 56
    %v360 = vld [vmem:[%s359] sm:$0xff]
    %361 = vrot.lane.b32.xlu0 %v360, 116
    %v362 = vpop.permute.xlu0 %361
    %vm363 = vcmask 31744
    %s364 = scalar_lea.vmem [#allocation0], 451
    %365 = vst.msk [vmem:[%s364] ss:$8 sm:$0xf] %vm363, %v362
    %s366 = scalar_lea.vmem [#allocation0], 451
    %367 = vst.msk [vmem:[%s366] ss:$8 sm:$0xf0] %vm363, %v362
    %s368 = scalar_lea.vmem %s0, 64
    %v369 = vld [vmem:[%s368] sm:$0xff]
    %370 = vrot.lane.b32.xlu0 %v369, 116
    %v371 = vpop.permute.xlu0 %370
    %vm372 = vcmask 31744
    %s373 = scalar_lea.vmem [#allocation0], 515
    %374 = vst.msk [vmem:[%s373] ss:$8 sm:$0xf] %vm372, %v371
    %s375 = scalar_lea.vmem [#allocation0], 515
    %376 = vst.msk [vmem:[%s375] ss:$8 sm:$0xf0] %vm372, %v371
    %s377 = scalar_lea.vmem %s0, 72
    %v378 = vld [vmem:[%s377] sm:$0xff]
    %379 = vrot.lane.b32.xlu0 %v378, 116
    %v380 = vpop.permute.xlu0 %379
    %vm381 = vcmask 31744
    %s382 = scalar_lea.vmem [#allocation0], 579
    %383 = vst.msk [vmem:[%s382] ss:$8 sm:$0xf] %vm381, %v380
    %s384 = scalar_lea.vmem [#allocation0], 579
    %385 = vst.msk [vmem:[%s384] ss:$8 sm:$0xf0] %vm381, %v380
    %s386 = scalar_lea.vmem %s0, 80
    %v387 = vld [vmem:[%s386] sm:$0xff]
    %388 = vrot.lane.b32.xlu0 %v387, 116
    %v389 = vpop.permute.xlu0 %388
    %vm390 = vcmask 31744
    %s391 = scalar_lea.vmem [#allocation0], 643
    %392 = vst.msk [vmem:[%s391] ss:$8 sm:$0xf] %vm390, %v389
    %s393 = scalar_lea.vmem [#allocation0], 643
    %394 = vst.msk [vmem:[%s393] ss:$8 sm:$0xf0] %vm390, %v389
    %s395 = scalar_lea.vmem %s0, 88
    %v396 = vld [vmem:[%s395] sm:$0xff]
    %397 = vrot.lane.b32.xlu0 %v396, 116
    %v398 = vpop.permute.xlu0 %397
    %vm399 = vcmask 31744
    %s400 = scalar_lea.vmem [#allocation0], 707
    %401 = vst.msk [vmem:[%s400] ss:$8 sm:$0xf] %vm399, %v398
    %s402 = scalar_lea.vmem [#allocation0], 707
    %403 = vst.msk [vmem:[%s402] ss:$8 sm:$0xf0] %vm399, %v398
    %s405 = sshllo.u32 0, 4
    %v407 = vld [vmem:[#allocation0] sm:%s405]
    %s408 = sshllo.u32 0, 4
    %409 = vst [vmem:[%s1] sm:%s408] %v407
    %s410 = scalar_lea.vmem [#allocation0], 8
    %v411 = vld [vmem:[%s410] sm:%s405]
    %s412 = sshllo.u32 0, 4
    %s413 = scalar_lea.vmem %s1, 4
    %414 = vst [vmem:[%s413] sm:%s412] %v411
    %s415 = scalar_lea.vmem [#allocation0], 16
    %v416 = vld [vmem:[%s415] sm:%s405]
    %s417 = sshllo.u32 0, 4
    %s418 = smul.addr 4, 2
    %s419 = scalar_lea.vmem %s1, %s418
    %420 = vst [vmem:[%s419] sm:%s417] %v416
    %s421 = scalar_lea.vmem [#allocation0], 24
    %v422 = vld [vmem:[%s421] sm:%s405]
    %s423 = sshllo.u32 0, 4
    %s424 = smul.addr 4, 3
    %s425 = scalar_lea.vmem %s1, %s424
    %426 = vst [vmem:[%s425] sm:%s423] %v422
    %s427 = scalar_lea.vmem [#allocation0], 32
    %v428 = vld [vmem:[%s427] sm:%s405]
    %s429 = sshllo.u32 0, 4
    %s430 = smul.addr 4, 4
    %s431 = scalar_lea.vmem %s1, %s430
    %432 = vst [vmem:[%s431] sm:%s429] %v428
    %s433 = scalar_lea.vmem [#allocation0], 40
    %v434 = vld [vmem:[%s433] sm:%s405]
    %s435 = sshllo.u32 0, 4
    %s436 = smul.addr 4, 5
    %s437 = scalar_lea.vmem %s1, %s436
    %438 = vst [vmem:[%s437] sm:%s435] %v434
    %s439 = scalar_lea.vmem [#allocation0], 48
    %v440 = vld [vmem:[%s439] sm:%s405]
    %s441 = sshllo.u32 0, 4
    %s442 = smul.addr 4, 6
    %s443 = scalar_lea.vmem %s1, %s442
    %444 = vst [vmem:[%s443] sm:%s441] %v440
    %s445 = scalar_lea.vmem [#allocation0], 56
    %v446 = vld [vmem:[%s445] sm:%s405]
    %s447 = sshllo.u32 0, 4
    %s448 = smul.addr 4, 7
    %s449 = scalar_lea.vmem %s1, %s448
    %450 = vst [vmem:[%s449] sm:%s447] %v446
    %s451 = scalar_lea.vmem [#allocation0], 64
    %v452 = vld [vmem:[%s451] sm:%s405]
    %s453 = sshllo.u32 0, 4
    %s454 = smul.addr 4, 8
    %s455 = scalar_lea.vmem %s1, %s454
    %456 = vst [vmem:[%s455] sm:%s453] %v452
    %s457 = scalar_lea.vmem [#allocation0], 72
    %v458 = vld [vmem:[%s457] sm:%s405]
    %s459 = sshllo.u32 0, 4
    %s460 = smul.addr 4, 9
    %s461 = scalar_lea.vmem %s1, %s460
    %462 = vst [vmem:[%s461] sm:%s459] %v458
    %s463 = scalar_lea.vmem [#allocation0], 80
    %v464 = vld [vmem:[%s463] sm:%s405]
    %s465 = sshllo.u32 0, 4
    %s466 = smul.addr 4, 10
    %s467 = scalar_lea.vmem %s1, %s466
    %468 = vst [vmem:[%s467] sm:%s465] %v464
    %s469 = scalar_lea.vmem [#allocation0], 88
    %v470 = vld [vmem:[%s469] sm:%s405]
    %s471 = sshllo.u32 0, 4
    %s472 = smul.addr 4, 11
    %s473 = scalar_lea.vmem %s1, %s472
    %474 = vst [vmem:[%s473] sm:%s471] %v470
    %s475 = scalar_lea.vmem [#allocation0], 96
    %v476 = vld [vmem:[%s475] sm:%s405]
    %s477 = sshllo.u32 0, 4
    %s478 = smul.addr 4, 12
    %s479 = scalar_lea.vmem %s1, %s478
    %480 = vst [vmem:[%s479] sm:%s477] %v476
    %s481 = scalar_lea.vmem [#allocation0], 104
    %v482 = vld [vmem:[%s481] sm:%s405]
    %s483 = sshllo.u32 0, 4
    %s484 = smul.addr 4, 13
    %s485 = scalar_lea.vmem %s1, %s484
    %486 = vst [vmem:[%s485] sm:%s483] %v482
    %s487 = scalar_lea.vmem [#allocation0], 112
    %v488 = vld [vmem:[%s487] sm:%s405]
    %s489 = sshllo.u32 0, 4
    %s490 = smul.addr 4, 14
    %s491 = scalar_lea.vmem %s1, %s490
    %492 = vst [vmem:[%s491] sm:%s489] %v488
    %s493 = scalar_lea.vmem [#allocation0], 120
    %v494 = vld [vmem:[%s493] sm:%s405]
    %s495 = sshllo.u32 0, 4
    %s496 = smul.addr 4, 15
    %s497 = scalar_lea.vmem %s1, %s496
    %498 = vst [vmem:[%s497] sm:%s495] %v494
    %s499 = scalar_lea.vmem [#allocation0], 128
    %v500 = vld [vmem:[%s499] sm:%s405]
    %s501 = sshllo.u32 0, 4
    %s502 = smul.addr 4, 16
    %s503 = scalar_lea.vmem %s1, %s502
    %504 = vst [vmem:[%s503] sm:%s501] %v500
    %s505 = scalar_lea.vmem [#allocation0], 136
    %v506 = vld [vmem:[%s505] sm:%s405]
    %s507 = sshllo.u32 0, 4
    %s508 = smul.addr 4, 17
    %s509 = scalar_lea.vmem %s1, %s508
    %510 = vst [vmem:[%s509] sm:%s507] %v506
    %s511 = scalar_lea.vmem [#allocation0], 144
    %v512 = vld [vmem:[%s511] sm:%s405]
    %s513 = sshllo.u32 0, 4
    %s514 = smul.addr 4, 18
    %s515 = scalar_lea.vmem %s1, %s514
    %516 = vst [vmem:[%s515] sm:%s513] %v512
    %s517 = scalar_lea.vmem [#allocation0], 152
    %v518 = vld [vmem:[%s517] sm:%s405]
    %s519 = sshllo.u32 0, 4
    %s520 = smul.addr 4, 19
    %s521 = scalar_lea.vmem %s1, %s520
    %522 = vst [vmem:[%s521] sm:%s519] %v518
    %s523 = scalar_lea.vmem [#allocation0], 160
    %v524 = vld [vmem:[%s523] sm:%s405]
    %s525 = sshllo.u32 0, 4
    %s526 = smul.addr 4, 20
    %s527 = scalar_lea.vmem %s1, %s526
    %528 = vst [vmem:[%s527] sm:%s525] %v524
    %s529 = scalar_lea.vmem [#allocation0], 168
    %v530 = vld [vmem:[%s529] sm:%s405]
    %s531 = sshllo.u32 0, 4
    %s532 = smul.addr 4, 21
    %s533 = scalar_lea.vmem %s1, %s532
    %534 = vst [vmem:[%s533] sm:%s531] %v530
    %s535 = scalar_lea.vmem [#allocation0], 176
    %v536 = vld [vmem:[%s535] sm:%s405]
    %s537 = sshllo.u32 0, 4
    %s538 = smul.addr 4, 22
    %s539 = scalar_lea.vmem %s1, %s538
    %540 = vst [vmem:[%s539] sm:%s537] %v536
    %s541 = scalar_lea.vmem [#allocation0], 184
    %v542 = vld [vmem:[%s541] sm:%s405]
    %s543 = sshllo.u32 0, 4
    %s544 = smul.addr 4, 23
    %s545 = scalar_lea.vmem %s1, %s544
    %546 = vst [vmem:[%s545] sm:%s543] %v542
    %s547 = scalar_lea.vmem [#allocation0], 192
    %v548 = vld [vmem:[%s547] sm:%s405]
    %s549 = sshllo.u32 0, 4
    %s550 = smul.addr 4, 24
    %s551 = scalar_lea.vmem %s1, %s550
    %552 = vst [vmem:[%s551] sm:%s549] %v548
    %s553 = scalar_lea.vmem [#allocation0], 200
    %v554 = vld [vmem:[%s553] sm:%s405]
    %s555 = sshllo.u32 0, 4
    %s556 = smul.addr 4, 25
    %s557 = scalar_lea.vmem %s1, %s556
    %558 = vst [vmem:[%s557] sm:%s555] %v554
    %s559 = scalar_lea.vmem [#allocation0], 208
    %v560 = vld [vmem:[%s559] sm:%s405]
    %s561 = sshllo.u32 0, 4
    %s562 = smul.addr 4, 26
    %s563 = scalar_lea.vmem %s1, %s562
    %564 = vst [vmem:[%s563] sm:%s561] %v560
    %s565 = scalar_lea.vmem [#allocation0], 216
    %v566 = vld [vmem:[%s565] sm:%s405]
    %s567 = sshllo.u32 0, 4
    %s568 = smul.addr 4, 27
    %s569 = scalar_lea.vmem %s1, %s568
    %570 = vst [vmem:[%s569] sm:%s567] %v566
    %s571 = scalar_lea.vmem [#allocation0], 224
    %v572 = vld [vmem:[%s571] sm:%s405]
    %s573 = sshllo.u32 0, 4
    %s574 = smul.addr 4, 28
    %s575 = scalar_lea.vmem %s1, %s574
    %576 = vst [vmem:[%s575] sm:%s573] %v572
    %s577 = scalar_lea.vmem [#allocation0], 232
    %v578 = vld [vmem:[%s577] sm:%s405]
    %s579 = sshllo.u32 0, 4
    %s580 = smul.addr 4, 29
    %s581 = scalar_lea.vmem %s1, %s580
    %582 = vst [vmem:[%s581] sm:%s579] %v578
    %s583 = scalar_lea.vmem [#allocation0], 240
    %v584 = vld [vmem:[%s583] sm:%s405]
    %s585 = sshllo.u32 0, 4
    %s586 = smul.addr 4, 30
    %s587 = scalar_lea.vmem %s1, %s586
    %588 = vst [vmem:[%s587] sm:%s585] %v584
    %s589 = scalar_lea.vmem [#allocation0], 248
    %v590 = vld [vmem:[%s589] sm:%s405]
    %s591 = sshllo.u32 0, 4
    %s592 = smul.addr 4, 31
    %s593 = scalar_lea.vmem %s1, %s592
    %594 = vst [vmem:[%s593] sm:%s591] %v590
    %s595 = scalar_lea.vmem [#allocation0], 256
    %v596 = vld [vmem:[%s595] sm:%s405]
    %s597 = sshllo.u32 0, 4
    %s598 = smul.addr 4, 32
    %s599 = scalar_lea.vmem %s1, %s598
    %600 = vst [vmem:[%s599] sm:%s597] %v596
    %s601 = scalar_lea.vmem [#allocation0], 264
    %v602 = vld [vmem:[%s601] sm:%s405]
    %s603 = sshllo.u32 0, 4
    %s604 = smul.addr 4, 33
    %s605 = scalar_lea.vmem %s1, %s604
    %606 = vst [vmem:[%s605] sm:%s603] %v602
    %s607 = scalar_lea.vmem [#allocation0], 272
    %v608 = vld [vmem:[%s607] sm:%s405]
    %s609 = sshllo.u32 0, 4
    %s610 = smul.addr 4, 34
    %s611 = scalar_lea.vmem %s1, %s610
    %612 = vst [vmem:[%s611] sm:%s609] %v608
    %s613 = scalar_lea.vmem [#allocation0], 280
    %v614 = vld [vmem:[%s613] sm:%s405]
    %s615 = sshllo.u32 0, 4
    %s616 = smul.addr 4, 35
    %s617 = scalar_lea.vmem %s1, %s616
    %618 = vst [vmem:[%s617] sm:%s615] %v614
    %s619 = scalar_lea.vmem [#allocation0], 288
    %v620 = vld [vmem:[%s619] sm:%s405]
    %s621 = sshllo.u32 0, 4
    %s622 = smul.addr 4, 36
    %s623 = scalar_lea.vmem %s1, %s622
    %624 = vst [vmem:[%s623] sm:%s621] %v620
    %s625 = scalar_lea.vmem [#allocation0], 296
    %v626 = vld [vmem:[%s625] sm:%s405]
    %s627 = sshllo.u32 0, 4
    %s628 = smul.addr 4, 37
    %s629 = scalar_lea.vmem %s1, %s628
    %630 = vst [vmem:[%s629] sm:%s627] %v626
    %s631 = scalar_lea.vmem [#allocation0], 304
    %v632 = vld [vmem:[%s631] sm:%s405]
    %s633 = sshllo.u32 0, 4
    %s634 = smul.addr 4, 38
    %s635 = scalar_lea.vmem %s1, %s634
    %636 = vst [vmem:[%s635] sm:%s633] %v632
    %s637 = scalar_lea.vmem [#allocation0], 312
    %v638 = vld [vmem:[%s637] sm:%s405]
    %s639 = sshllo.u32 0, 4
    %s640 = smul.addr 4, 39
    %s641 = scalar_lea.vmem %s1, %s640
    %642 = vst [vmem:[%s641] sm:%s639] %v638
    %s643 = scalar_lea.vmem [#allocation0], 320
    %v644 = vld [vmem:[%s643] sm:%s405]
    %s645 = sshllo.u32 0, 4
    %s646 = smul.addr 4, 40
    %s647 = scalar_lea.vmem %s1, %s646
    %648 = vst [vmem:[%s647] sm:%s645] %v644
    %s649 = scalar_lea.vmem [#allocation0], 328
    %v650 = vld [vmem:[%s649] sm:%s405]
    %s651 = sshllo.u32 0, 4
    %s652 = smul.addr 4, 41
    %s653 = scalar_lea.vmem %s1, %s652
    %654 = vst [vmem:[%s653] sm:%s651] %v650
    %s655 = scalar_lea.vmem [#allocation0], 336
    %v656 = vld [vmem:[%s655] sm:%s405]
    %s657 = sshllo.u32 0, 4
    %s658 = smul.addr 4, 42
    %s659 = scalar_lea.vmem %s1, %s658
    %660 = vst [vmem:[%s659] sm:%s657] %v656
    %s661 = scalar_lea.vmem [#allocation0], 344
    %v662 = vld [vmem:[%s661] sm:%s405]
    %s663 = sshllo.u32 0, 4
    %s664 = smul.addr 4, 43
    %s665 = scalar_lea.vmem %s1, %s664
    %666 = vst [vmem:[%s665] sm:%s663] %v662
    %s667 = scalar_lea.vmem [#allocation0], 352
    %v668 = vld [vmem:[%s667] sm:%s405]
    %s669 = sshllo.u32 0, 4
    %s670 = smul.addr 4, 44
    %s671 = scalar_lea.vmem %s1, %s670
    %672 = vst [vmem:[%s671] sm:%s669] %v668
    %s673 = scalar_lea.vmem [#allocation0], 360
    %v674 = vld [vmem:[%s673] sm:%s405]
    %s675 = sshllo.u32 0, 4
    %s676 = smul.addr 4, 45
    %s677 = scalar_lea.vmem %s1, %s676
    %678 = vst [vmem:[%s677] sm:%s675] %v674
    %s679 = scalar_lea.vmem [#allocation0], 368
    %v680 = vld [vmem:[%s679] sm:%s405]
    %s681 = sshllo.u32 0, 4
    %s682 = smul.addr 4, 46
    %s683 = scalar_lea.vmem %s1, %s682
    %684 = vst [vmem:[%s683] sm:%s681] %v680
    %s685 = scalar_lea.vmem [#allocation0], 376
    %v686 = vld [vmem:[%s685] sm:%s405]
    %s687 = sshllo.u32 0, 4
    %s688 = smul.addr 4, 47
    %s689 = scalar_lea.vmem %s1, %s688
    %690 = vst [vmem:[%s689] sm:%s687] %v686
    %s691 = scalar_lea.vmem [#allocation0], 384
    %v692 = vld [vmem:[%s691] sm:%s405]
    %s693 = sshllo.u32 0, 4
    %s694 = smul.addr 4, 48
    %s695 = scalar_lea.vmem %s1, %s694
    %696 = vst [vmem:[%s695] sm:%s693] %v692
    %s697 = scalar_lea.vmem [#allocation0], 392
    %v698 = vld [vmem:[%s697] sm:%s405]
    %s699 = sshllo.u32 0, 4
    %s700 = smul.addr 4, 49
    %s701 = scalar_lea.vmem %s1, %s700
    %702 = vst [vmem:[%s701] sm:%s699] %v698
    %s703 = scalar_lea.vmem [#allocation0], 400
    %v704 = vld [vmem:[%s703] sm:%s405]
    %s705 = sshllo.u32 0, 4
    %s706 = smul.addr 4, 50
    %s707 = scalar_lea.vmem %s1, %s706
    %708 = vst [vmem:[%s707] sm:%s705] %v704
    %s709 = scalar_lea.vmem [#allocation0], 408
    %v710 = vld [vmem:[%s709] sm:%s405]
    %s711 = sshllo.u32 0, 4
    %s712 = smul.addr 4, 51
    %s713 = scalar_lea.vmem %s1, %s712
    %714 = vst [vmem:[%s713] sm:%s711] %v710
    %s715 = scalar_lea.vmem [#allocation0], 416
    %v716 = vld [vmem:[%s715] sm:%s405]
    %s717 = sshllo.u32 0, 4
    %s718 = smul.addr 4, 52
    %s719 = scalar_lea.vmem %s1, %s718
    %720 = vst [vmem:[%s719] sm:%s717] %v716
    %s721 = scalar_lea.vmem [#allocation0], 424
    %v722 = vld [vmem:[%s721] sm:%s405]
    %s723 = sshllo.u32 0, 4
    %s724 = smul.addr 4, 53
    %s725 = scalar_lea.vmem %s1, %s724
    %726 = vst [vmem:[%s725] sm:%s723] %v722
    %s727 = scalar_lea.vmem [#allocation0], 432
    %v728 = vld [vmem:[%s727] sm:%s405]
    %s729 = sshllo.u32 0, 4
    %s730 = smul.addr 4, 54
    %s731 = scalar_lea.vmem %s1, %s730
    %732 = vst [vmem:[%s731] sm:%s729] %v728
    %s733 = scalar_lea.vmem [#allocation0], 440
    %v734 = vld [vmem:[%s733] sm:%s405]
    %s735 = sshllo.u32 0, 4
    %s736 = smul.addr 4, 55
    %s737 = scalar_lea.vmem %s1, %s736
    %738 = vst [vmem:[%s737] sm:%s735] %v734
    %s739 = scalar_lea.vmem [#allocation0], 448
    %v740 = vld [vmem:[%s739] sm:%s405]
    %s741 = sshllo.u32 0, 4
    %s742 = smul.addr 4, 56
    %s743 = scalar_lea.vmem %s1, %s742
    %744 = vst [vmem:[%s743] sm:%s741] %v740
    %s745 = scalar_lea.vmem [#allocation0], 456
    %v746 = vld [vmem:[%s745] sm:%s405]
    %s747 = sshllo.u32 0, 4
    %s748 = smul.addr 4, 57
    %s749 = scalar_lea.vmem %s1, %s748
    %750 = vst [vmem:[%s749] sm:%s747] %v746
    %s751 = scalar_lea.vmem [#allocation0], 464
    %v752 = vld [vmem:[%s751] sm:%s405]
    %s753 = sshllo.u32 0, 4
    %s754 = smul.addr 4, 58
    %s755 = scalar_lea.vmem %s1, %s754
    %756 = vst [vmem:[%s755] sm:%s753] %v752
    %s757 = scalar_lea.vmem [#allocation0], 472
    %v758 = vld [vmem:[%s757] sm:%s405]
    %s759 = sshllo.u32 0, 4
    %s760 = smul.addr 4, 59
    %s761 = scalar_lea.vmem %s1, %s760
    %762 = vst [vmem:[%s761] sm:%s759] %v758
    %s763 = scalar_lea.vmem [#allocation0], 480
    %v764 = vld [vmem:[%s763] sm:%s405]
    %s765 = sshllo.u32 0, 4
    %s766 = smul.addr 4, 60
    %s767 = scalar_lea.vmem %s1, %s766
    %768 = vst [vmem:[%s767] sm:%s765] %v764
    %s769 = scalar_lea.vmem [#allocation0], 488
    %v770 = vld [vmem:[%s769] sm:%s405]
    %s771 = sshllo.u32 0, 4
    %s772 = smul.addr 4, 61
    %s773 = scalar_lea.vmem %s1, %s772
    %774 = vst [vmem:[%s773] sm:%s771] %v770
    %s775 = scalar_lea.vmem [#allocation0], 496
    %v776 = vld [vmem:[%s775] sm:%s405]
    %s777 = sshllo.u32 0, 4
    %s778 = smul.addr 4, 62
    %s779 = scalar_lea.vmem %s1, %s778
    %780 = vst [vmem:[%s779] sm:%s777] %v776
    %s781 = scalar_lea.vmem [#allocation0], 504
    %v782 = vld [vmem:[%s781] sm:%s405]
    %s783 = sshllo.u32 0, 4
    %s784 = smul.addr 4, 63
    %s785 = scalar_lea.vmem %s1, %s784
    %786 = vst [vmem:[%s785] sm:%s783] %v782
    %s787 = scalar_lea.vmem [#allocation0], 512
    %v788 = vld [vmem:[%s787] sm:%s405]
    %s789 = sshllo.u32 0, 4
    %s790 = smul.addr 4, 64
    %s791 = scalar_lea.vmem %s1, %s790
    %792 = vst [vmem:[%s791] sm:%s789] %v788
    %s793 = scalar_lea.vmem [#allocation0], 520
    %v794 = vld [vmem:[%s793] sm:%s405]
    %s795 = sshllo.u32 0, 4
    %s796 = smul.addr 4, 65
    %s797 = scalar_lea.vmem %s1, %s796
    %798 = vst [vmem:[%s797] sm:%s795] %v794
    %s799 = scalar_lea.vmem [#allocation0], 528
    %v800 = vld [vmem:[%s799] sm:%s405]
    %s801 = sshllo.u32 0, 4
    %s802 = smul.addr 4, 66
    %s803 = scalar_lea.vmem %s1, %s802
    %804 = vst [vmem:[%s803] sm:%s801] %v800
    %s805 = scalar_lea.vmem [#allocation0], 536
    %v806 = vld [vmem:[%s805] sm:%s405]
    %s807 = sshllo.u32 0, 4
    %s808 = smul.addr 4, 67
    %s809 = scalar_lea.vmem %s1, %s808
    %810 = vst [vmem:[%s809] sm:%s807] %v806
    %s811 = scalar_lea.vmem [#allocation0], 544
    %v812 = vld [vmem:[%s811] sm:%s405]
    %s813 = sshllo.u32 0, 4
    %s814 = smul.addr 4, 68
    %s815 = scalar_lea.vmem %s1, %s814
    %816 = vst [vmem:[%s815] sm:%s813] %v812
    %s817 = scalar_lea.vmem [#allocation0], 552
    %v818 = vld [vmem:[%s817] sm:%s405]
    %s819 = sshllo.u32 0, 4
    %s820 = smul.addr 4, 69
    %s821 = scalar_lea.vmem %s1, %s820
    %822 = vst [vmem:[%s821] sm:%s819] %v818
    %s823 = scalar_lea.vmem [#allocation0], 560
    %v824 = vld [vmem:[%s823] sm:%s405]
    %s825 = sshllo.u32 0, 4
    %s826 = smul.addr 4, 70
    %s827 = scalar_lea.vmem %s1, %s826
    %828 = vst [vmem:[%s827] sm:%s825] %v824
    %s829 = scalar_lea.vmem [#allocation0], 568
    %v830 = vld [vmem:[%s829] sm:%s405]
    %s831 = sshllo.u32 0, 4
    %s832 = smul.addr 4, 71
    %s833 = scalar_lea.vmem %s1, %s832
    %834 = vst [vmem:[%s833] sm:%s831] %v830
    %s835 = scalar_lea.vmem [#allocation0], 576
    %v836 = vld [vmem:[%s835] sm:%s405]
    %s837 = sshllo.u32 0, 4
    %s838 = smul.addr 4, 72
    %s839 = scalar_lea.vmem %s1, %s838
    %840 = vst [vmem:[%s839] sm:%s837] %v836
    %s841 = scalar_lea.vmem [#allocation0], 584
    %v842 = vld [vmem:[%s841] sm:%s405]
    %s843 = sshllo.u32 0, 4
    %s844 = smul.addr 4, 73
    %s845 = scalar_lea.vmem %s1, %s844
    %846 = vst [vmem:[%s845] sm:%s843] %v842
    %s847 = scalar_lea.vmem [#allocation0], 592
    %v848 = vld [vmem:[%s847] sm:%s405]
    %s849 = sshllo.u32 0, 4
    %s850 = smul.addr 4, 74
    %s851 = scalar_lea.vmem %s1, %s850
    %852 = vst [vmem:[%s851] sm:%s849] %v848
    %s853 = scalar_lea.vmem [#allocation0], 600
    %v854 = vld [vmem:[%s853] sm:%s405]
    %s855 = sshllo.u32 0, 4
    %s856 = smul.addr 4, 75
    %s857 = scalar_lea.vmem %s1, %s856
    %858 = vst [vmem:[%s857] sm:%s855] %v854
    %s859 = scalar_lea.vmem [#allocation0], 608
    %v860 = vld [vmem:[%s859] sm:%s405]
    %s861 = sshllo.u32 0, 4
    %s862 = smul.addr 4, 76
    %s863 = scalar_lea.vmem %s1, %s862
    %864 = vst [vmem:[%s863] sm:%s861] %v860
    %s865 = scalar_lea.vmem [#allocation0], 616
    %v866 = vld [vmem:[%s865] sm:%s405]
    %s867 = sshllo.u32 0, 4
    %s868 = smul.addr 4, 77
    %s869 = scalar_lea.vmem %s1, %s868
    %870 = vst [vmem:[%s869] sm:%s867] %v866
    %s871 = scalar_lea.vmem [#allocation0], 624
    %v872 = vld [vmem:[%s871] sm:%s405]
    %s873 = sshllo.u32 0, 4
    %s874 = smul.addr 4, 78
    %s875 = scalar_lea.vmem %s1, %s874
    %876 = vst [vmem:[%s875] sm:%s873] %v872
    %s877 = scalar_lea.vmem [#allocation0], 632
    %v878 = vld [vmem:[%s877] sm:%s405]
    %s879 = sshllo.u32 0, 4
    %s880 = smul.addr 4, 79
    %s881 = scalar_lea.vmem %s1, %s880
    %882 = vst [vmem:[%s881] sm:%s879] %v878
    %s883 = scalar_lea.vmem [#allocation0], 640
    %v884 = vld [vmem:[%s883] sm:%s405]
    %s885 = sshllo.u32 0, 4
    %s886 = smul.addr 4, 80
    %s887 = scalar_lea.vmem %s1, %s886
    %888 = vst [vmem:[%s887] sm:%s885] %v884
    %s889 = scalar_lea.vmem [#allocation0], 648
    %v890 = vld [vmem:[%s889] sm:%s405]
    %s891 = sshllo.u32 0, 4
    %s892 = smul.addr 4, 81
    %s893 = scalar_lea.vmem %s1, %s892
    %894 = vst [vmem:[%s893] sm:%s891] %v890
    %s895 = scalar_lea.vmem [#allocation0], 656
    %v896 = vld [vmem:[%s895] sm:%s405]
    %s897 = sshllo.u32 0, 4
    %s898 = smul.addr 4, 82
    %s899 = scalar_lea.vmem %s1, %s898
    %900 = vst [vmem:[%s899] sm:%s897] %v896
    %s901 = scalar_lea.vmem [#allocation0], 664
    %v902 = vld [vmem:[%s901] sm:%s405]
    %s903 = sshllo.u32 0, 4
    %s904 = smul.addr 4, 83
    %s905 = scalar_lea.vmem %s1, %s904
    %906 = vst [vmem:[%s905] sm:%s903] %v902
    %s907 = scalar_lea.vmem [#allocation0], 672
    %v908 = vld [vmem:[%s907] sm:%s405]
    %s909 = sshllo.u32 0, 4
    %s910 = smul.addr 4, 84
    %s911 = scalar_lea.vmem %s1, %s910
    %912 = vst [vmem:[%s911] sm:%s909] %v908
    %s913 = scalar_lea.vmem [#allocation0], 680
    %v914 = vld [vmem:[%s913] sm:%s405]
    %s915 = sshllo.u32 0, 4
    %s916 = smul.addr 4, 85
    %s917 = scalar_lea.vmem %s1, %s916
    %918 = vst [vmem:[%s917] sm:%s915] %v914
    %s919 = scalar_lea.vmem [#allocation0], 688
    %v920 = vld [vmem:[%s919] sm:%s405]
    %s921 = sshllo.u32 0, 4
    %s922 = smul.addr 4, 86
    %s923 = scalar_lea.vmem %s1, %s922
    %924 = vst [vmem:[%s923] sm:%s921] %v920
    %s925 = scalar_lea.vmem [#allocation0], 696
    %v926 = vld [vmem:[%s925] sm:%s405]
    %s927 = sshllo.u32 0, 4
    %s928 = smul.addr 4, 87
    %s929 = scalar_lea.vmem %s1, %s928
    %930 = vst [vmem:[%s929] sm:%s927] %v926
    %s931 = scalar_lea.vmem [#allocation0], 704
    %v932 = vld [vmem:[%s931] sm:%s405]
    %s933 = sshllo.u32 0, 4
    %s934 = smul.addr 4, 88
    %s935 = scalar_lea.vmem %s1, %s934
    %936 = vst [vmem:[%s935] sm:%s933] %v932
    %s937 = scalar_lea.vmem [#allocation0], 712
    %v938 = vld [vmem:[%s937] sm:%s405]
    %s939 = sshllo.u32 0, 4
    %s940 = smul.addr 4, 89
    %s941 = scalar_lea.vmem %s1, %s940
    %942 = vst [vmem:[%s941] sm:%s939] %v938
    %s943 = scalar_lea.vmem [#allocation0], 720
    %v944 = vld [vmem:[%s943] sm:%s405]
    %s945 = sshllo.u32 0, 4
    %s946 = smul.addr 4, 90
    %s947 = scalar_lea.vmem %s1, %s946
    %948 = vst [vmem:[%s947] sm:%s945] %v944
    %s949 = scalar_lea.vmem [#allocation0], 728
    %v950 = vld [vmem:[%s949] sm:%s405]
    %s951 = sshllo.u32 0, 4
    %s952 = smul.addr 4, 91
    %s953 = scalar_lea.vmem %s1, %s952
    %954 = vst [vmem:[%s953] sm:%s951] %v950
    %s955 = scalar_lea.vmem [#allocation0], 736
    %v956 = vld [vmem:[%s955] sm:%s405]
    %s957 = sshllo.u32 0, 4
    %s958 = smul.addr 4, 92
    %s959 = scalar_lea.vmem %s1, %s958
    %960 = vst [vmem:[%s959] sm:%s957] %v956
    %s961 = scalar_lea.vmem [#allocation0], 744
    %v962 = vld [vmem:[%s961] sm:%s405]
    %s963 = sshllo.u32 0, 4
    %s964 = smul.addr 4, 93
    %s965 = scalar_lea.vmem %s1, %s964
    %966 = vst [vmem:[%s965] sm:%s963] %v962
    %s967 = scalar_lea.vmem [#allocation0], 752
    %v968 = vld [vmem:[%s967] sm:%s405]
    %s969 = sshllo.u32 0, 4
    %s970 = smul.addr 4, 94
    %s971 = scalar_lea.vmem %s1, %s970
    %972 = vst [vmem:[%s971] sm:%s969] %v968
    %s973 = scalar_lea.vmem [#allocation0], 760
    %v974 = vld [vmem:[%s973] sm:%s405]
    %s975 = sshllo.u32 0, 4
    %s976 = smul.addr 4, 95
    %s977 = scalar_lea.vmem %s1, %s976
    %978 = vst [vmem:[%s977] sm:%s975] %v974

// kernel: forward.1
$region0: #{forward.1}
  #allocation0 [shape = 'u32[]', space=smem, size = 0x4, offset = 0x4, fixed_abs, tag = 'smem constant byte address 0x4 - core index']
  #allocation1 [shape = 'u32[144,128]{1,0:T(1,128)}', space=vmem, size = 0x12000, scoped, tag = 'internal scratch']
  %s0 = inlined_call_operand.vmem [shape: f32[32,48], index: 0, kind: input, shape index: {}]
  %s1 = inlined_call_operand.vmem [shape: f32[2,8], index: 1, kind: input, shape index: {}]
  %s2 = inlined_call_operand.vmem [shape: f32[1,32], index: 2, kind: input, shape index: {}]
  %s3 = inlined_call_operand.vmem [shape: f32[16,32], index: 3, kind: input, shape index: {}]
  %s4 = inlined_call_operand.vmem [shape: f32[48,32], index: 4, kind: input, shape index: {}]
  %s5 = inlined_call_operand.vmem [shape: f32[68,32], index: 5, kind: input, shape index: {}]
  %s6 = inlined_call_operand.vmem [shape: f32[2,1,32], index: 6, kind: input, shape index: {}]
  %s7 = inlined_call_operand.vmem [shape: f32[2,1,32], index: 7, kind: input, shape index: {}]
  %s8 = inlined_call_operand.vmem [shape: f32[2,32,32], index: 8, kind: input, shape index: {}]
  %s9 = inlined_call_operand.vmem [shape: f32[2,1,32], index: 9, kind: input, shape index: {}]
  %s10 = inlined_call_operand.vmem [shape: f32[2,32,32], index: 10, kind: input, shape index: {}]
  %s11 = inlined_call_operand.vmem [shape: f32[2,1,32], index: 11, kind: input, shape index: {}]
  %s12 = inlined_call_operand.vmem [shape: f32[2,32,32], index: 12, kind: input, shape index: {}]
  %s13 = inlined_call_operand.vmem [shape: f32[2,1,32], index: 13, kind: input, shape index: {}]
  %s14 = inlined_call_operand.vmem [shape: f32[2,32,32], index: 14, kind: input, shape index: {}]
  %s15 = inlined_call_operand.vmem [shape: f32[2,1,32], index: 15, kind: input, shape index: {}]
  %s16 = inlined_call_operand.vmem [shape: f32[2,1,32], index: 16, kind: input, shape index: {}]
  %s17 = inlined_call_operand.vmem [shape: f32[2,1,32], index: 17, kind: input, shape index: {}]
  %s18 = inlined_call_operand.vmem [shape: f32[2,32,128], index: 18, kind: input, shape index: {}]
  %s19 = inlined_call_operand.vmem [shape: f32[2,1,128], index: 19, kind: input, shape index: {}]
  %s20 = inlined_call_operand.vmem [shape: f32[2,128,32], index: 20, kind: input, shape index: {}]
  %s21 = inlined_call_operand.vmem [shape: f32[2,1,32], index: 21, kind: input, shape index: {}]
  %s22 = inlined_call_operand.vmem [shape: f32[1,32], index: 22, kind: input, shape index: {}]
  %s23 = inlined_call_operand.vmem [shape: f32[1,32], index: 23, kind: input, shape index: {}]
  %s24 = inlined_call_operand.vmem [shape: f32[32,5], index: 24, kind: input, shape index: {}]
  %s25 = inlined_call_operand.vmem [shape: f32[8,5], index: 25, kind: input, shape index: {}]
  %s26 = inlined_call_operand.vmem [shape: f32[1,5], index: 26, kind: input, shape index: {}]
  %s27 = inlined_call_operand.hbm [shape: f32[2,5], index: 27, kind: output, shape index: {}]
  %s28 = sld [smem:[#allocation0]]
  $region118: #{forward.1} parent=0
    _
  %s30 = ssub.s32 1, %s28
  %s31 = scalar_select 0, %s30, %s28
  $region1: #{forward.1} parent=0
    #allocation2 [shape = 'u8[1024]{0}', space=vmem, size = 0x400, scoped, tag = 'output window, operand 0, single buffered']
    #allocation3 [shape = 's32[1]{0}', space=sflag, size = 0x4, scoped, tag = 'scoped memory for forward.1']
    %32 = vsyncpa [#allocation3], 0
    // Predicated region
    $region2: #{forward.1} parent=1 // pred_check
      _
    $region3: #{forward.1} parent=1 // pred_check_branch
      %34 = sbr.rel (0) target = $region5
    $region4: #{forward.1} parent=1 // pred_region
      _
    $region5: #{forward.1} parent=1 // pred_fallthru
      _
    // Predicated region
    $region6: #{forward.1} parent=1 // pred_check
      _
    $region7: #{forward.1} parent=1 // pred_check_branch
      %36 = sbr.rel (0) target = $region9
    $region8: #{forward.1} parent=1 // pred_region
      _
    $region9: #{forward.1} parent=1 // pred_fallthru
      _
    // Predicated region
    $region10: #{forward.1} parent=1 // pred_check
      _
    $region11: #{forward.1} parent=1 // pred_check_branch
      %38 = sbr.rel (0) target = $region13
    $region12: #{forward.1} parent=1 // pred_region
      _
    $region13: #{forward.1} parent=1 // pred_fallthru
      _
    // Predicated region
    $region14: #{forward.1} parent=1 // pred_check
      _
    $region15: #{forward.1} parent=1 // pred_check_branch
      %40 = sbr.rel (0) target = $region17
    $region16: #{forward.1} parent=1 // pred_region
      _
    $region17: #{forward.1} parent=1 // pred_fallthru
      _
    // Predicated region
    $region18: #{forward.1} parent=1 // pred_check
      _
    $region19: #{forward.1} parent=1 // pred_check_branch
      %42 = sbr.rel (0) target = $region21
    $region20: #{forward.1} parent=1 // pred_region
      _
    $region21: #{forward.1} parent=1 // pred_fallthru
      _
    // Predicated region
    $region22: #{forward.1} parent=1 // pred_check
      _
    $region23: #{forward.1} parent=1 // pred_check_branch
      %44 = sbr.rel (0) target = $region25
    $region24: #{forward.1} parent=1 // pred_region
      _
    $region25: #{forward.1} parent=1 // pred_fallthru
      _
    // Predicated region
    $region26: #{forward.1} parent=1 // pred_check
      _
    $region27: #{forward.1} parent=1 // pred_check_branch
      %46 = sbr.rel (0) target = $region29
    $region28: #{forward.1} parent=1 // pred_region
      _
    $region29: #{forward.1} parent=1 // pred_fallthru
      _
    // Predicated region
    $region30: #{forward.1} parent=1 // pred_check
      _
    $region31: #{forward.1} parent=1 // pred_check_branch
      %48 = sbr.rel (0) target = $region33
    $region32: #{forward.1} parent=1 // pred_region
      _
    $region33: #{forward.1} parent=1 // pred_fallthru
      _
    // Predicated region
    $region34: #{forward.1} parent=1 // pred_check
      _
    $region35: #{forward.1} parent=1 // pred_check_branch
      %50 = sbr.rel (0) target = $region37
    $region36: #{forward.1} parent=1 // pred_region
      _
    $region37: #{forward.1} parent=1 // pred_fallthru
      _
    // Predicated region
    $region38: #{forward.1} parent=1 // pred_check
      _
    $region39: #{forward.1} parent=1 // pred_check_branch
      %52 = sbr.rel (0) target = $region41
    $region40: #{forward.1} parent=1 // pred_region
      _
    $region41: #{forward.1} parent=1 // pred_fallthru
      _
    // Predicated region
    $region42: #{forward.1} parent=1 // pred_check
      _
    $region43: #{forward.1} parent=1 // pred_check_branch
      %54 = sbr.rel (0) target = $region45
    $region44: #{forward.1} parent=1 // pred_region
      _
    $region45: #{forward.1} parent=1 // pred_fallthru
      _
    // Predicated region
    $region46: #{forward.1} parent=1 // pred_check
      _
    $region47: #{forward.1} parent=1 // pred_check_branch
      %56 = sbr.rel (0) target = $region49
    $region48: #{forward.1} parent=1 // pred_region
      _
    $region49: #{forward.1} parent=1 // pred_fallthru
      _
    // Predicated region
    $region50: #{forward.1} parent=1 // pred_check
      _
    $region51: #{forward.1} parent=1 // pred_check_branch
      %58 = sbr.rel (0) target = $region53
    $region52: #{forward.1} parent=1 // pred_region
      _
    $region53: #{forward.1} parent=1 // pred_fallthru
      _
    // Predicated region
    $region54: #{forward.1} parent=1 // pred_check
      _
    $region55: #{forward.1} parent=1 // pred_check_branch
      %60 = sbr.rel (0) target = $region57
    $region56: #{forward.1} parent=1 // pred_region
      _
    $region57: #{forward.1} parent=1 // pred_fallthru
      _
    // Predicated region
    $region58: #{forward.1} parent=1 // pred_check
      _
    $region59: #{forward.1} parent=1 // pred_check_branch
      %62 = sbr.rel (0) target = $region61
    $region60: #{forward.1} parent=1 // pred_region
      _
    $region61: #{forward.1} parent=1 // pred_fallthru
      _
    // Predicated region
    $region62: #{forward.1} parent=1 // pred_check
      _
    $region63: #{forward.1} parent=1 // pred_check_branch
      %64 = sbr.rel (0) target = $region65
    $region64: #{forward.1} parent=1 // pred_region
      _
    $region65: #{forward.1} parent=1 // pred_fallthru
      _
    // Predicated region
    $region66: #{forward.1} parent=1 // pred_check
      _
    $region67: #{forward.1} parent=1 // pred_check_branch
      %66 = sbr.rel (0) target = $region69
    $region68: #{forward.1} parent=1 // pred_region
      _
    $region69: #{forward.1} parent=1 // pred_fallthru
      _
    // Predicated region
    $region70: #{forward.1} parent=1 // pred_check
      _
    $region71: #{forward.1} parent=1 // pred_check_branch
      %68 = sbr.rel (0) target = $region73
    $region72: #{forward.1} parent=1 // pred_region
      _
    $region73: #{forward.1} parent=1 // pred_fallthru
      _
    // Predicated region
    $region74: #{forward.1} parent=1 // pred_check
      _
    $region75: #{forward.1} parent=1 // pred_check_branch
      %70 = sbr.rel (0) target = $region77
    $region76: #{forward.1} parent=1 // pred_region
      _
    $region77: #{forward.1} parent=1 // pred_fallthru
      _
    // Predicated region
    $region78: #{forward.1} parent=1 // pred_check
      _
    $region79: #{forward.1} parent=1 // pred_check_branch
      %72 = sbr.rel (0) target = $region81
    $region80: #{forward.1} parent=1 // pred_region
      _
    $region81: #{forward.1} parent=1 // pred_fallthru
      _
    // Predicated region
    $region82: #{forward.1} parent=1 // pred_check
      _
    $region83: #{forward.1} parent=1 // pred_check_branch
      %74 = sbr.rel (0) target = $region85
    $region84: #{forward.1} parent=1 // pred_region
      _
    $region85: #{forward.1} parent=1 // pred_fallthru
      _
    // Predicated region
    $region86: #{forward.1} parent=1 // pred_check
      _
    $region87: #{forward.1} parent=1 // pred_check_branch
      %76 = sbr.rel (0) target = $region89
    $region88: #{forward.1} parent=1 // pred_region
      _
    $region89: #{forward.1} parent=1 // pred_fallthru
      _
    // Predicated region
    $region90: #{forward.1} parent=1 // pred_check
      _
    $region91: #{forward.1} parent=1 // pred_check_branch
      %78 = sbr.rel (0) target = $region93
    $region92: #{forward.1} parent=1 // pred_region
      _
    $region93: #{forward.1} parent=1 // pred_fallthru
      _
    // Predicated region
    $region94: #{forward.1} parent=1 // pred_check
      _
    $region95: #{forward.1} parent=1 // pred_check_branch
      %80 = sbr.rel (0) target = $region97
    $region96: #{forward.1} parent=1 // pred_region
      _
    $region97: #{forward.1} parent=1 // pred_fallthru
      _
    // Predicated region
    $region98: #{forward.1} parent=1 // pred_check
      _
    $region99: #{forward.1} parent=1 // pred_check_branch
      %82 = sbr.rel (0) target = $region101
    $region100: #{forward.1} parent=1 // pred_region
      _
    $region101: #{forward.1} parent=1 // pred_fallthru
      _
    // Predicated region
    $region102: #{forward.1} parent=1 // pred_check
      _
    $region103: #{forward.1} parent=1 // pred_check_branch
      %84 = sbr.rel (0) target = $region105
    $region104: #{forward.1} parent=1 // pred_region
      _
    $region105: #{forward.1} parent=1 // pred_fallthru
      _
    // Predicated region
    $region106: #{forward.1} parent=1 // pred_check
      _
    $region107: #{forward.1} parent=1 // pred_check_branch
      %86 = sbr.rel (0) target = $region109
    $region108: #{forward.1} parent=1 // pred_region
      _
    $region109: #{forward.1} parent=1 // pred_fallthru
      _
    %v87 = vld [vmem:[%s5] sm:$0xff]
    %v88 = vld [vmem:[%s5 + $0x8] sm:$0xff]
    %v89 = vld [vmem:[%s5 + $0x10] sm:$0xff]
    %v90 = vld [vmem:[%s5 + $0x18] sm:$0xff]
    %v91 = vld [vmem:[%s5 + $0x20] sm:$0xff]
    %v92 = vld [vmem:[%s5 + $0x28] sm:$0xff]
    %v93 = vld [vmem:[%s5 + $0x30] sm:$0xff]
    %v94 = vld [vmem:[%s5 + $0x38] sm:$0xff]
    %v95 = vld [vmem:[%s5 + $0x40] sm:$0xf]
    %v96 = vld [vmem:[%s2] sm:$0x1]
    %v97 = vld [vmem:[%s3] sm:$0xff]
    %v98 = vld [vmem:[%s3 + $0x8] sm:$0xff]
    %v99 = vld [vmem:[%s0] sm:$0xff]
    %v100 = vld [vmem:[%s0 + $0x8] sm:$0xff]
    %v101 = vld [vmem:[%s0 + $0x10] sm:$0xff]
    %v102 = vld [vmem:[%s0 + $0x18] sm:$0xff]
    %v103 = vld [vmem:[%s4] sm:$0xff]
    %v104 = vld [vmem:[%s4 + $0x8] sm:$0xff]
    %v105 = vld [vmem:[%s4 + $0x10] sm:$0xff]
    %v106 = vld [vmem:[%s4 + $0x18] sm:$0xff]
    %v107 = vld [vmem:[%s4 + $0x20] sm:$0xff]
    %v108 = vld [vmem:[%s4 + $0x28] sm:$0xff]
    %vm109 = vcmask 392192
    %v111 = vsel %vm109, %v99, 0
    %v114 = vsel %vm109, %v100, 0
    %v117 = vsel %vm109, %v101, 0
    %v120 = vsel %vm109, %v102, 0
    %122 = vmatprep.subr.mxu0 0.0
    %123 = vmatpush1.msra.mxu0 %v103
    %124 = vmatprep.subr.mxu0 0.0
    %125 = vmatpush1.msra.mxu0 %v104
    %126 = vmatprep.subr.mxu0 0.0
    %127 = vmatpush1.msra.mxu0 %v105
    %128 = vmatprep.subr.mxu0 0.0
    %129 = vmatpush1.msra.mxu0 %v106
    %130 = vmatprep.subr.mxu0 0.0
    %131 = vmatpush1.msra.mxu0 %v107
    %132 = vmatprep.subr.mxu0 0.0
    %133 = vmatpush1.msra.mxu0 %v108
    %134 = vmatprep.subr.mxu0 0.0
    %135 = vmatpush1.msra.mxu0 0.0
    %136 = vmatprep.subr.mxu0 0.0
    %137 = vmatpush1.msra.mxu0 0.0
    %138 = vmatprep.subr.mxu0 0.0
    %139 = vmatpush1.msra.mxu0 0.0
    %140 = vmatprep.subr.mxu0 0.0
    %141 = vmatpush1.msra.mxu0 0.0
    %142 = vmatprep.subr.mxu0 0.0
    %143 = vmatpush1.msra.mxu0 0.0
    %144 = vmatprep.subr.mxu0 0.0
    %145 = vmatpush1.msra.mxu0 0.0
    %146 = vmatprep.subr.mxu0 0.0
    %147 = vmatpush1.msra.mxu0 0.0
    %148 = vmatprep.subr.mxu0 0.0
    %149 = vmatpush1.msra.mxu0 0.0
    %150 = vmatprep.subr.mxu0 0.0
    %151 = vmatpush1.msra.mxu0 0.0
    %152 = vmatprep.subr.mxu0 0.0
    %153 = vmatpush1.msra.mxu0 0.0
    %154 = vmatprep.subr.mxu0 0.0
    %155 = vmatpush1.msra.mxu0 0.0
    %156 = vmatprep.subr.mxu0 0.0
    %157 = vmatpush1.msra.mxu0 0.0
    %158 = vmatprep.subr.mxu0 0.0
    %159 = vmatpush1.msra.mxu0 0.0
    %160 = vmatprep.subr.mxu0 0.0
    %161 = vmatpush1.msra.mxu0 0.0
    %162 = vmatprep.subr.mxu0 0.0
    %163 = vmatpush1.msra.mxu0 0.0
    %164 = vmatprep.subr.mxu0 0.0
    %165 = vmatpush1.msra.mxu0 0.0
    %166 = vmatprep.subr.mxu0 0.0
    %167 = vmatpush1.msra.mxu0 0.0
    %168 = vmatprep.subr.mxu0 0.0
    %169 = vmatpush1.msra.mxu0 0.0
    %170 = vmatprep.subr.mxu0 0.0
    %171 = vmatpush1.msra.mxu0 0.0
    %172 = vmatprep.subr.mxu0 0.0
    %173 = vmatpush1.msra.mxu0 0.0
    %174 = vmatprep.subr.mxu0 0.0
    %175 = vmatpush1.msra.mxu0 0.0
    %176 = vmatprep.subr.mxu0 0.0
    %177 = vmatpush1.msra.mxu0 0.0
    %178 = vmatprep.subr.mxu0 0.0
    %179 = vmatpush1.msra.mxu0 0.0
    %180 = vmatprep.subr.mxu0 0.0
    %181 = vmatpush1.msra.mxu0 0.0
    %182 = vmatprep.subr.mxu0 0.0
    %183 = vmatpush1.msra.mxu0 0.0
    %184 = vmatprep.subr.mxu0 0.0
    %185 = vmatpush1.msra.mxu0 0.0
    %186 = vmatprep.mubr.f32.mxu0 0.0
    %187 = vmatmul.mubr.f32.gmra.mrb[0].mxu0 %v111
    %v188 = vpop.f32.mrb[0].mxu0
    %v189 = vadd.f32 0.0, %v188
    %v190 = vpop.f32.mrb[0].mxu0
    %191 = vmatprep.mubr.f32.mxu0 0.0
    %192 = vmatmul.mubr.f32.gmra.mrb[0].mxu0 %v114
    %v193 = vpop.f32.mrb[0].mxu0
    %v194 = vadd.f32 0.0, %v193
    %v195 = vpop.f32.mrb[0].mxu0
    %196 = vmatprep.mubr.f32.mxu0 0.0
    %197 = vmatmul.mubr.f32.gmra.mrb[0].mxu0 %v117
    %v198 = vpop.f32.mrb[0].mxu0
    %v199 = vadd.f32 0.0, %v198
    %v200 = vpop.f32.mrb[0].mxu0
    %201 = vmatprep.mubr.f32.mxu0 0.0
    %202 = vmatmul.mubr.f32.gmra.mrb[0].mxu0 %v120
    %v203 = vpop.f32.mrb[0].mxu0
    %v204 = vadd.f32 0.0, %v203
    %v205 = vpop.f32.mrb[0].mxu0
    %206 = vdwg.mxu0
    %v207 = vadd.f32 %v189, %v97
    %v208 = vadd.f32 %v194, %v98
    %v209 = vadd.f32 %v199, %v97
    %v210 = vadd.f32 %v204, %v98
    %vm213 = vcmask 1040384
    %v214 = vrot.slane %v207, 7
    %v215 = vrot.slane %v208, 7
    %v216 = vsel %vm213, %v214, %v215
    %v221 = vlaneseq
    %v222 = vshrl.u32 %v221, 7
    %v223 = vsub.s32 0, %v222
    %v224 = vrot.slane %v96, %v223
    %vm228 = vcmask 1041408
    %v229 = vrot.slane %v209, 6
    %v230 = vrot.slane %v210, 6
    %v231 = vsel %vm228, %v229, %v230
    %v235 = vsel %vm213, %v96, %v214
    %v236 = vsel %vm213, %v215, %v224
    %v237 = vsel %vm228, %v236, %v229
    %v238 = vld [vmem:[%s6] sm:$0x1]
    %v239 = vld [vmem:[%s7] sm:$0x1]
    %vm240 = vcmask 261120
    %v241 = vsel %vm240, %v235, 0.0
    %242 = vadd.xlane.f32.xlu0 %v241
    %v243 = vpop.xlane.xlu0 %242
    %v244 = vsel %vm240, %v216, 0.0
    %245 = vadd.xlane.f32.xlu0 %v244
    %v246 = vpop.xlane.xlu0 %245
    %v247 = vsel %vm240, %v237, 0.0
    %248 = vadd.xlane.f32.xlu0 %v247
    %v249 = vpop.xlane.xlu0 %248
    %v250 = vsel %vm240, %v231, 0.0
    %251 = vadd.xlane.f32.xlu0 %v250
    %v252 = vpop.xlane.xlu0 %251
    %vm253 = vcmask 254976
    %v254 = vsel %vm253, %v230, 0.0
    %255 = vadd.xlane.f32.xlu0 %v254
    %v256 = vpop.xlane.xlu0 %255
    %v257 = vrcp.pop 32.0
    %v258 = vmul.f32 %v243, %v257
    %v259 = vmul.f32 %v246, %v257
    %v260 = vmul.f32 %v249, %v257
    %v261 = vmul.f32 %v252, %v257
    %v262 = vmul.f32 %v256, %v257
    %v263 = vsub.f32 %v235, %v258
    %v264 = vsub.f32 %v216, %v259
    %v265 = vsub.f32 %v237, %v260
    %v266 = vsub.f32 %v231, %v261
    %v267 = vsub.f32 %v230, %v262
    %v268 = vmul.f32 %v263, %v263
    %v269 = vmul.f32 %v264, %v264
    %v270 = vmul.f32 %v265, %v265
    %v271 = vmul.f32 %v266, %v266
    %v272 = vmul.f32 %v267, %v267
    %v273 = vsel %vm240, %v268, 0.0
    %274 = vadd.xlane.f32.xlu0 %v273
    %v275 = vpop.xlane.xlu0 %274
    %v276 = vsel %vm240, %v269, 0.0
    %277 = vadd.xlane.f32.xlu0 %v276
    %v278 = vpop.xlane.xlu0 %277
    %v279 = vsel %vm240, %v270, 0.0
    %280 = vadd.xlane.f32.xlu0 %v279
    %v281 = vpop.xlane.xlu0 %280
    %v282 = vsel %vm240, %v271, 0.0
    %283 = vadd.xlane.f32.xlu0 %v282
    %v284 = vpop.xlane.xlu0 %283
    %v285 = vsel %vm253, %v272, 0.0
    %286 = vadd.xlane.f32.xlu0 %v285
    %v287 = vpop.xlane.xlu0 %286
    %v288 = vmul.f32 %v275, %v257
    %v289 = vmul.f32 %v278, %v257
    %v290 = vmul.f32 %v281, %v257
    %v291 = vmul.f32 %v284, %v257
    %v292 = vmul.f32 %v287, %v257
    %v293 = vadd.f32 %v288, 1e-06
    %v294 = vadd.f32 %v289, 1e-06
    %v295 = vadd.f32 %v290, 1e-06
    %v296 = vadd.f32 %v291, 1e-06
    %v297 = vadd.f32 %v292, 1e-06
    %v298 = vrsqrt.pop %v293
    %v299 = vrsqrt.pop %v294
    %v300 = vrsqrt.pop %v295
    %v301 = vrsqrt.pop %v296
    %v302 = vrsqrt.pop %v297
    %v303 = vmul.f32 %v263, %v298
    %v304 = vmul.f32 %v264, %v299
    %v305 = vmul.f32 %v265, %v300
    %v306 = vmul.f32 %v266, %v301
    %v307 = vmul.f32 %v267, %v302
    %v309 = vlaneseq
    %v310 = vshrl.u32 %v309, 7
    %v311 = vsub.s32 0, %v310
    %v312 = vrot.slane %v238, %v311
    %v314 = vmul.f32 %v303, %v312
    %v315 = vmul.f32 %v304, %v312
    %v316 = vmul.f32 %v305, %v312
    %v317 = vmul.f32 %v306, %v312
    %v318 = vmul.f32 %v307, %v312
    %v320 = vlaneseq
    %v321 = vshrl.u32 %v320, 7
    %v322 = vsub.s32 0, %v321
    %v323 = vrot.slane %v239, %v322
    %v325 = vadd.f32 %v314, %v323
    %v326 = vadd.f32 %v315, %v323
    %v327 = vadd.f32 %v316, %v323
    %v328 = vadd.f32 %v317, %v323
    %v329 = vadd.f32 %v318, %v323
    %v330 = vld [vmem:[%s8] sm:$0xff]
    %v331 = vld [vmem:[%s8 + $0x8] sm:$0xff]
    %v332 = vld [vmem:[%s8 + $0x10] sm:$0xff]
    %v333 = vld [vmem:[%s8 + $0x18] sm:$0xff]
    %v334 = vld [vmem:[%s9] sm:$0x1]
    %v336 = vlaneseq
    %v337 = vshrl.u32 %v336, 7
    %v338 = vsub.s32 0, %v337
    %v339 = vrot.slane %v334, %v338
    %v342 = vsel %vm240, %v325, 0
    %v345 = vsel %vm240, %v326, 0
    %v348 = vsel %vm240, %v327, 0
    %v351 = vsel %vm240, %v328, 0
    %v354 = vsel %vm240, %v329, 0
    %356 = vmatprep.subr.mxu0 0.0
    %357 = vmatpush1.msra.mxu0 %v330
    %358 = vmatprep.subr.mxu0 0.0
    %359 = vmatpush1.msra.mxu0 %v331
    %360 = vmatprep.subr.mxu0 0.0
    %361 = vmatpush1.msra.mxu0 %v332
    %362 = vmatprep.subr.mxu0 0.0
    %363 = vmatpush1.msra.mxu0 %v333
    %364 = vmatprep.subr.mxu0 0.0
    %365 = vmatpush1.msra.mxu0 0.0
    %366 = vmatprep.subr.mxu0 0.0
    %367 = vmatpush1.msra.mxu0 0.0
    %368 = vmatprep.subr.mxu0 0.0
    %369 = vmatpush1.msra.mxu0 0.0
    %370 = vmatprep.subr.mxu0 0.0
    %371 = vmatpush1.msra.mxu0 0.0
    %372 = vmatprep.subr.mxu0 0.0
    %373 = vmatpush1.msra.mxu0 0.0
    %374 = vmatprep.subr.mxu0 0.0
    %375 = vmatpush1.msra.mxu0 0.0
    %376 = vmatprep.subr.mxu0 0.0
    %377 = vmatpush1.msra.mxu0 0.0
    %378 = vmatprep.subr.mxu0 0.0
    %379 = vmatpush1.msra.mxu0 0.0
    %380 = vmatprep.subr.mxu0 0.0
    %381 = vmatpush1.msra.mxu0 0.0
    %382 = vmatprep.subr.mxu0 0.0
    %383 = vmatpush1.msra.mxu0 0.0
    %384 = vmatprep.subr.mxu0 0.0
    %385 = vmatpush1.msra.mxu0 0.0
    %386 = vmatprep.subr.mxu0 0.0
    %387 = vmatpush1.msra.mxu0 0.0
    %388 = vmatprep.subr.mxu0 0.0
    %389 = vmatpush1.msra.mxu0 0.0
    %390 = vmatprep.subr.mxu0 0.0
    %391 = vmatpush1.msra.mxu0 0.0
    %392 = vmatprep.subr.mxu0 0.0
    %393 = vmatpush1.msra.mxu0 0.0
    %394 = vmatprep.subr.mxu0 0.0
    %395 = vmatpush1.msra.mxu0 0.0
    %396 = vmatprep.subr.mxu0 0.0
    %397 = vmatpush1.msra.mxu0 0.0
    %398 = vmatprep.subr.mxu0 0.0
    %399 = vmatpush1.msra.mxu0 0.0
    %400 = vmatprep.subr.mxu0 0.0
    %401 = vmatpush1.msra.mxu0 0.0
    %402 = vmatprep.subr.mxu0 0.0
    %403 = vmatpush1.msra.mxu0 0.0
    %404 = vmatprep.subr.mxu0 0.0
    %405 = vmatpush1.msra.mxu0 0.0
    %406 = vmatprep.subr.mxu0 0.0
    %407 = vmatpush1.msra.mxu0 0.0
    %408 = vmatprep.subr.mxu0 0.0
    %409 = vmatpush1.msra.mxu0 0.0
    %410 = vmatprep.subr.mxu0 0.0
    %411 = vmatpush1.msra.mxu0 0.0
    %412 = vmatprep.subr.mxu0 0.0
    %413 = vmatpush1.msra.mxu0 0.0
    %414 = vmatprep.subr.mxu0 0.0
    %415 = vmatpush1.msra.mxu0 0.0
    %416 = vmatprep.subr.mxu0 0.0
    %417 = vmatpush1.msra.mxu0 0.0
    %418 = vmatprep.subr.mxu0 0.0
    %419 = vmatpush1.msra.mxu0 0.0
    %420 = vmatprep.mubr.f32.mxu0 0.0
    %421 = vmatmul.mubr.f32.gmra.mrb[0].mxu0 %v342
    %v422 = vpop.f32.mrb[0].mxu0
    %v423 = vadd.f32 %v339, %v422
    %v424 = vpop.f32.mrb[0].mxu0
    %425 = vmatprep.mubr.f32.mxu0 0.0
    %426 = vmatmul.mubr.f32.gmra.mrb[0].mxu0 %v345
    %v427 = vpop.f32.mrb[0].mxu0
    %v428 = vadd.f32 %v339, %v427
    %v429 = vpop.f32.mrb[0].mxu0
    %430 = vmatprep.mubr.f32.mxu0 0.0
    %431 = vmatmul.mubr.f32.gmra.mrb[0].mxu0 %v348
    %v432 = vpop.f32.mrb[0].mxu0
    %v433 = vadd.f32 %v339, %v432
    %v434 = vpop.f32.mrb[0].mxu0
    %435 = vmatprep.mubr.f32.mxu0 0.0
    %436 = vmatmul.mubr.f32.gmra.mrb[0].mxu0 %v351
    %v437 = vpop.f32.mrb[0].mxu0
    %v438 = vadd.f32 %v339, %v437
    %v439 = vpop.f32.mrb[0].mxu0
    %440 = vmatprep.mubr.f32.mxu0 0.0
    %441 = vmatmul.mubr.f32.gmra.mrb[0].mxu0 %v354
    %v442 = vpop.f32.mrb[0].mxu0
    %v443 = vadd.f32 %v339, %v442
    %v444 = vpop.f32.mrb[0].mxu0
    %445 = vdwg.mxu0
    %v446 = vld [vmem:[%s10] sm:$0xff]
    %v447 = vld [vmem:[%s10 + $0x8] sm:$0xff]
    %v448 = vld [vmem:[%s10 + $0x10] sm:$0xff]
    %v449 = vld [vmem:[%s10 + $0x18] sm:$0xff]
    %v450 = vld [vmem:[%s11] sm:$0x1]
    %v452 = vlaneseq
    %v453 = vshrl.u32 %v452, 7
    %v454 = vsub.s32 0, %v453
    %v455 = vrot.slane %v450, %v454
    %457 = vmatprep.subr.mxu0 0.0
    %458 = vmatpush1.msra.mxu0 %v446
    %459 = vmatprep.subr.mxu0 0.0
    %460 = vmatpush1.msra.mxu0 %v447
    %461 = vmatprep.subr.mxu0 0.0
    %462 = vmatpush1.msra.mxu0 %v448
    %463 = vmatprep.subr.mxu0 0.0
    %464 = vmatpush1.msra.mxu0 %v449
    %465 = vmatprep.subr.mxu0 0.0
    %466 = vmatpush1.msra.mxu0 0.0
    %467 = vmatprep.subr.mxu0 0.0
    %468 = vmatpush1.msra.mxu0 0.0
    %469 = vmatprep.subr.mxu0 0.0
    %470 = vmatpush1.msra.mxu0 0.0
    %471 = vmatprep.subr.mxu0 0.0
    %472 = vmatpush1.msra.mxu0 0.0
    %473 = vmatprep.subr.mxu0 0.0
    %474 = vmatpush1.msra.mxu0 0.0
    %475 = vmatprep.subr.mxu0 0.0
    %476 = vmatpush1.msra.mxu0 0.0
    %477 = vmatprep.subr.mxu0 0.0
    %478 = vmatpush1.msra.mxu0 0.0
    %479 = vmatprep.subr.mxu0 0.0
    %480 = vmatpush1.msra.mxu0 0.0
    %481 = vmatprep.subr.mxu0 0.0
    %482 = vmatpush1.msra.mxu0 0.0
    %483 = vmatprep.subr.mxu0 0.0
    %484 = vmatpush1.msra.mxu0 0.0
    %485 = vmatprep.subr.mxu0 0.0
    %486 = vmatpush1.msra.mxu0 0.0
    %487 = vmatprep.subr.mxu0 0.0
    %488 = vmatpush1.msra.mxu0 0.0
    %489 = vmatprep.subr.mxu0 0.0
    %490 = vmatpush1.msra.mxu0 0.0
    %491 = vmatprep.subr.mxu0 0.0
    %492 = vmatpush1.msra.mxu0 0.0
    %493 = vmatprep.subr.mxu0 0.0
    %494 = vmatpush1.msra.mxu0 0.0
    %495 = vmatprep.subr.mxu0 0.0
    %496 = vmatpush1.msra.mxu0 0.0
    %497 = vmatprep.subr.mxu0 0.0
    %498 = vmatpush1.msra.mxu0 0.0
    %499 = vmatprep.subr.mxu0 0.0
    %500 = vmatpush1.msra.mxu0 0.0
    %501 = vmatprep.subr.mxu0 0.0
    %502 = vmatpush1.msra.mxu0 0.0
    %503 = vmatprep.subr.mxu0 0.0
    %504 = vmatpush1.msra.mxu0 0.0
    %505 = vmatprep.subr.mxu0 0.0
    %506 = vmatpush1.msra.mxu0 0.0
    %507 = vmatprep.subr.mxu0 0.0
    %508 = vmatpush1.msra.mxu0 0.0
    %509 = vmatprep.subr.mxu0 0.0
    %510 = vmatpush1.msra.mxu0 0.0
    %511 = vmatprep.subr.mxu0 0.0
    %512 = vmatpush1.msra.mxu0 0.0
    %513 = vmatprep.subr.mxu0 0.0
    %514 = vmatpush1.msra.mxu0 0.0
    %515 = vmatprep.subr.mxu0 0.0
    %516 = vmatpush1.msra.mxu0 0.0
    %517 = vmatprep.subr.mxu0 0.0
    %518 = vmatpush1.msra.mxu0 0.0
    %519 = vmatprep.subr.mxu0 0.0
    %520 = vmatpush1.msra.mxu0 0.0
    %521 = vmatprep.mubr.f32.mxu0 0.0
    %522 = vmatmul.mubr.f32.gmra.mrb[0].mxu0 %v342
    %v523 = vpop.f32.mrb[0].mxu0
    %v524 = vadd.f32 %v455, %v523
    %v525 = vpop.f32.mrb[0].mxu0
    %526 = vmatprep.mubr.f32.mxu0 0.0
    %527 = vmatmul.mubr.f32.gmra.mrb[0].mxu0 %v345
    %v528 = vpop.f32.mrb[0].mxu0
    %v529 = vadd.f32 %v455, %v528
    %v530 = vpop.f32.mrb[0].mxu0
    %531 = vmatprep.mubr.f32.mxu0 0.0
    %532 = vmatmul.mubr.f32.gmra.mrb[0].mxu0 %v348
    %v533 = vpop.f32.mrb[0].mxu0
    %v534 = vadd.f32 %v455, %v533
    %v535 = vpop.f32.mrb[0].mxu0
    %536 = vmatprep.mubr.f32.mxu0 0.0
    %537 = vmatmul.mubr.f32.gmra.mrb[0].mxu0 %v351
    %v538 = vpop.f32.mrb[0].mxu0
    %v539 = vadd.f32 %v455, %v538
    %v540 = vpop.f32.mrb[0].mxu0
    %541 = vmatprep.mubr.f32.mxu0 0.0
    %542 = vmatmul.mubr.f32.gmra.mrb[0].mxu0 %v354
    %v543 = vpop.f32.mrb[0].mxu0
    %v544 = vadd.f32 %v455, %v543
    %v545 = vpop.f32.mrb[0].mxu0
    %546 = vdwg.mxu0
    %v547 = vld [vmem:[%s12] sm:$0xff]
    %v548 = vld [vmem:[%s12 + $0x8] sm:$0xff]
    %v549 = vld [vmem:[%s12 + $0x10] sm:$0xff]
    %v550 = vld [vmem:[%s12 + $0x18] sm:$0xff]
    %v551 = vld [vmem:[%s13] sm:$0x1]
    %v553 = vlaneseq
    %v554 = vshrl.u32 %v553, 7
    %v555 = vsub.s32 0, %v554
    %v556 = vrot.slane %v551, %v555
    %558 = vmatprep.subr.mxu0 0.0
    %559 = vmatpush1.msra.mxu0 %v547
    %560 = vmatprep.subr.mxu0 0.0
    %561 = vmatpush1.msra.mxu0 %v548
    %562 = vmatprep.subr.mxu0 0.0
    %563 = vmatpush1.msra.mxu0 %v549
    %564 = vmatprep.subr.mxu0 0.0
    %565 = vmatpush1.msra.mxu0 %v550
    %566 = vmatprep.subr.mxu0 0.0
    %567 = vmatpush1.msra.mxu0 0.0
    %568 = vmatprep.subr.mxu0 0.0
    %569 = vmatpush1.msra.mxu0 0.0
    %570 = vmatprep.subr.mxu0 0.0
    %571 = vmatpush1.msra.mxu0 0.0
    %572 = vmatprep.subr.mxu0 0.0
    %573 = vmatpush1.msra.mxu0 0.0
    %574 = vmatprep.subr.mxu0 0.0
    %575 = vmatpush1.msra.mxu0 0.0
    %576 = vmatprep.subr.mxu0 0.0
    %577 = vmatpush1.msra.mxu0 0.0
    %578 = vmatprep.subr.mxu0 0.0
    %579 = vmatpush1.msra.mxu0 0.0
    %580 = vmatprep.subr.mxu0 0.0
    %581 = vmatpush1.msra.mxu0 0.0
    %582 = vmatprep.subr.mxu0 0.0
    %583 = vmatpush1.msra.mxu0 0.0
    %584 = vmatprep.subr.mxu0 0.0
    %585 = vmatpush1.msra.mxu0 0.0
    %586 = vmatprep.subr.mxu0 0.0
    %587 = vmatpush1.msra.mxu0 0.0
    %588 = vmatprep.subr.mxu0 0.0
    %589 = vmatpush1.msra.mxu0 0.0
    %590 = vmatprep.subr.mxu0 0.0
    %591 = vmatpush1.msra.mxu0 0.0
    %592 = vmatprep.subr.mxu0 0.0
    %593 = vmatpush1.msra.mxu0 0.0
    %594 = vmatprep.subr.mxu0 0.0
    %595 = vmatpush1.msra.mxu0 0.0
    %596 = vmatprep.subr.mxu0 0.0
    %597 = vmatpush1.msra.mxu0 0.0
    %598 = vmatprep.subr.mxu0 0.0
    %599 = vmatpush1.msra.mxu0 0.0
    %600 = vmatprep.subr.mxu0 0.0
    %601 = vmatpush1.msra.mxu0 0.0
    %602 = vmatprep.subr.mxu0 0.0
    %603 = vmatpush1.msra.mxu0 0.0
    %604 = vmatprep.subr.mxu0 0.0
    %605 = vmatpush1.msra.mxu0 0.0
    %606 = vmatprep.subr.mxu0 0.0
    %607 = vmatpush1.msra.mxu0 0.0
    %608 = vmatprep.subr.mxu0 0.0
    %609 = vmatpush1.msra.mxu0 0.0
    %610 = vmatprep.subr.mxu0 0.0
    %611 = vmatpush1.msra.mxu0 0.0
    %612 = vmatprep.subr.mxu0 0.0
    %613 = vmatpush1.msra.mxu0 0.0
    %614 = vmatprep.subr.mxu0 0.0
    %615 = vmatpush1.msra.mxu0 0.0
    %616 = vmatprep.subr.mxu0 0.0
    %617 = vmatpush1.msra.mxu0 0.0
    %618 = vmatprep.subr.mxu0 0.0
    %619 = vmatpush1.msra.mxu0 0.0
    %620 = vmatprep.subr.mxu0 0.0
    %621 = vmatpush1.msra.mxu0 0.0
    %622 = vmatprep.mubr.f32.mxu0 0.0
    %623 = vmatmul.mubr.f32.gmra.mrb[0].mxu0 %v342
    %v624 = vpop.f32.mrb[0].mxu0
    %v625 = vadd.f32 %v556, %v624
    %v626 = vpop.f32.mrb[0].mxu0
    %627 = vmatprep.mubr.f32.mxu0 0.0
    %628 = vmatmul.mubr.f32.gmra.mrb[0].mxu0 %v345
    %v629 = vpop.f32.mrb[0].mxu0
    %v630 = vadd.f32 %v556, %v629
    %v631 = vpop.f32.mrb[0].mxu0
    %632 = vmatprep.mubr.f32.mxu0 0.0
    %633 = vmatmul.mubr.f32.gmra.mrb[0].mxu0 %v348
    %v634 = vpop.f32.mrb[0].mxu0
    %v635 = vadd.f32 %v556, %v634
    %v636 = vpop.f32.mrb[0].mxu0
    %637 = vmatprep.mubr.f32.mxu0 0.0
    %638 = vmatmul.mubr.f32.gmra.mrb[0].mxu0 %v351
    %v639 = vpop.f32.mrb[0].mxu0
    %v640 = vadd.f32 %v556, %v639
    %v641 = vpop.f32.mrb[0].mxu0
    %642 = vmatprep.mubr.f32.mxu0 0.0
    %643 = vmatmul.mubr.f32.gmra.mrb[0].mxu0 %v354
    %v644 = vpop.f32.mrb[0].mxu0
    %v645 = vadd.f32 %v556, %v644
    %v646 = vpop.f32.mrb[0].mxu0
    %647 = vdwg.mxu0
    %v651 = vrot.slane %v423, 7
    %v652 = vrot.slane %v428, 7
    %v653 = vsel %vm213, %v651, %v652
    %v654 = vrot.slane %v433, 7
    %v655 = vsel %vm213, %v652, %v654
    %v659 = vrot.slane %v423, 6
    %v660 = vrot.slane %v428, 6
    %v661 = vsel %vm228, %v659, %v660
    %v662 = vrot.slane %v433, 6
    %v663 = vsel %vm228, %v660, %v662
    %vm667 = vcmask 1042432
    %v668 = vrot.slane %v423, 5
    %v669 = vrot.slane %v428, 5
    %v670 = vsel %vm667, %v668, %v669
    %v671 = vrot.slane %v433, 5
    %v672 = vsel %vm667, %v669, %v671
    %v676 = vsel %vm213, %v433, %v651
    %v677 = vsel %vm228, %v655, %v659
    %v678 = vsel %vm667, %v663, %v668
    %v679 = vmul.f32 %v423, %v87
    %v680 = vmul.f32 %v428, %v88
    %v681 = vmul.f32 %v676, %v89
    %v682 = vmul.f32 %v653, %v90
    %v683 = vmul.f32 %v677, %v91
    %v684 = vmul.f32 %v661, %v92
    %v685 = vmul.f32 %v678, %v93
    %v686 = vmul.f32 %v670, %v94
    %v687 = vmul.f32 %v672, %v95
    %v689 = vsel %vm240, %v679, 0
    %v692 = vsel %vm240, %v680, 0
    %v695 = vsel %vm240, %v681, 0
    %v698 = vsel %vm240, %v682, 0
    %v701 = vsel %vm240, %v683, 0
    %v704 = vsel %vm240, %v684, 0
    %v707 = vsel %vm240, %v685, 0
    %v710 = vsel %vm240, %v686, 0
    %v713 = vsel %vm240, %v687, 0
    %v716 = vsel %vm240, %v524, 0
    %v719 = vsel %vm240, %v529, 0
    %v722 = vsel %vm240, %v534, 0
    %724 = vmatprep.subr.mxu0 0.0
    %725 = vmatpush1.xpose.msra.mxu0 %v716
    %726 = vmatprep.subr.mxu0 0.0
    %727 = vmatpush1.xpose.msra.mxu0 %v719
    %728 = vmatprep.subr.mxu0 0.0
    %729 = vmatpush1.xpose.msra.mxu0 %v722
    %730 = vmatprep.subr.mxu0 0.0
    %731 = vmatpush1.xpose.msra.mxu0 0.0
    %732 = vmatprep.subr.mxu0 0.0
    %733 = vmatpush1.xpose.msra.mxu0 0.0
    %734 = vmatprep.subr.mxu0 0.0
    %735 = vmatpush1.xpose.msra.mxu0 0.0
    %736 = vmatprep.subr.mxu0 0.0
    %737 = vmatpush1.xpose.msra.mxu0 0.0
    %738 = vmatprep.subr.mxu0 0.0
    %739 = vmatpush1.xpose.msra.mxu0 0.0
    %740 = vmatprep.subr.mxu0 0.0
    %741 = vmatpush1.xpose.msra.mxu0 0.0
    %742 = vmatprep.subr.mxu0 0.0
    %743 = vmatpush1.xpose.msra.mxu0 0.0
    %744 = vmatprep.subr.mxu0 0.0
    %745 = vmatpush1.xpose.msra.mxu0 0.0
    %746 = vmatprep.subr.mxu0 0.0
    %747 = vmatpush1.xpose.msra.mxu0 0.0
    %748 = vmatprep.subr.mxu0 0.0
    %749 = vmatpush1.xpose.msra.mxu0 0.0
    %750 = vmatprep.subr.mxu0 0.0
    %751 = vmatpush1.xpose.msra.mxu0 0.0
    %752 = vmatprep.subr.mxu0 0.0
    %753 = vmatpush1.xpose.msra.mxu0 0.0
    %754 = vmatprep.subr.mxu0 0.0
    %755 = vmatpush1.xpose.msra.mxu0 0.0
    %756 = vmatprep.subr.mxu0 0.0
    %757 = vmatpush1.xpose.msra.mxu0 0.0
    %758 = vmatprep.subr.mxu0 0.0
    %759 = vmatpush1.xpose.msra.mxu0 0.0
    %760 = vmatprep.subr.mxu0 0.0
    %761 = vmatpush1.xpose.msra.mxu0 0.0
    %762 = vmatprep.subr.mxu0 0.0
    %763 = vmatpush1.xpose.msra.mxu0 0.0
    %764 = vmatprep.subr.mxu0 0.0
    %765 = vmatpush1.xpose.msra.mxu0 0.0
    %766 = vmatprep.subr.mxu0 0.0
    %767 = vmatpush1.xpose.msra.mxu0 0.0
    %768 = vmatprep.subr.mxu0 0.0
    %769 = vmatpush1.xpose.msra.mxu0 0.0
    %770 = vmatprep.subr.mxu0 0.0
    %771 = vmatpush1.xpose.msra.mxu0 0.0
    %772 = vmatprep.subr.mxu0 0.0
    %773 = vmatpush1.xpose.msra.mxu0 0.0
    %774 = vmatprep.subr.mxu0 0.0
    %775 = vmatpush1.xpose.msra.mxu0 0.0
    %776 = vmatprep.subr.mxu0 0.0
    %777 = vmatpush1.xpose.msra.mxu0 0.0
    %778 = vmatprep.subr.mxu0 0.0
    %779 = vmatpush1.xpose.msra.mxu0 0.0
    %780 = vmatprep.subr.mxu0 0.0
    %781 = vmatpush1.xpose.msra.mxu0 0.0
    %782 = vmatprep.subr.mxu0 0.0
    %783 = vmatpush1.xpose.msra.mxu0 0.0
    %784 = vmatprep.subr.mxu0 0.0
    %785 = vmatpush1.xpose.msra.mxu0 0.0
    %786 = vmatprep.subr.mxu0 0.0
    %787 = vmatpush1.xpose.msra.mxu0 0.0
    %788 = vmatprep.mubr.f32.mxu0 0.0
    %789 = vmatmul.mubr.f32.gmra.mrb[0].mxu0 %v689
    %v790 = vpop.f32.mrb[0].mxu0
    %v791 = vadd.f32 0.0, %v790
    %v792 = vpop.f32.mrb[0].mxu0
    %793 = vmatprep.mubr.f32.mxu0 0.0
    %794 = vmatmul.mubr.f32.gmra.mrb[0].mxu0 %v692
    %v795 = vpop.f32.mrb[0].mxu0
    %v796 = vadd.f32 0.0, %v795
    %v797 = vpop.f32.mrb[0].mxu0
    %798 = vmatprep.mubr.f32.mxu0 0.0
    %799 = vmatmul.mubr.f32.gmra.mrb[0].mxu0 %v695
    %v800 = vpop.f32.mrb[0].mxu0
    %v801 = vadd.f32 0.0, %v800
    %v802 = vpop.f32.mrb[0].mxu0
    %803 = vmatprep.mubr.f32.mxu0 0.0
    %804 = vmatmul.mubr.f32.gmra.mrb[0].mxu0 %v698
    %v805 = vpop.f32.mrb[0].mxu0
    %v806 = vadd.f32 0.0, %v805
    %v807 = vpop.f32.mrb[0].mxu0
    %808 = vmatprep.mubr.f32.mxu0 0.0
    %809 = vmatmul.mubr.f32.gmra.mrb[0].mxu0 %v701
    %v810 = vpop.f32.mrb[0].mxu0
    %v811 = vadd.f32 0.0, %v810
    %v812 = vpop.f32.mrb[0].mxu0
    %813 = vmatprep.mubr.f32.mxu0 0.0
    %814 = vmatmul.mubr.f32.gmra.mrb[0].mxu0 %v704
    %v815 = vpop.f32.mrb[0].mxu0
    %v816 = vadd.f32 0.0, %v815
    %v817 = vpop.f32.mrb[0].mxu0
    %818 = vmatprep.mubr.f32.mxu0 0.0
    %819 = vmatmul.mubr.f32.gmra.mrb[0].mxu0 %v707
    %v820 = vpop.f32.mrb[0].mxu0
    %v821 = vadd.f32 0.0, %v820
    %v822 = vpop.f32.mrb[0].mxu0
    %823 = vmatprep.mubr.f32.mxu0 0.0
    %824 = vmatmul.mubr.f32.gmra.mrb[0].mxu0 %v710
    %v825 = vpop.f32.mrb[0].mxu0
    %v826 = vadd.f32 0.0, %v825
    %v827 = vpop.f32.mrb[0].mxu0
    %828 = vmatprep.mubr.f32.mxu0 0.0
    %829 = vmatmul.mubr.f32.gmra.mrb[0].mxu0 %v713
    %v830 = vpop.f32.mrb[0].mxu0
    %v831 = vadd.f32 0.0, %v830
    %v832 = vpop.f32.mrb[0].mxu0
    %833 = vdwg.mxu0
    %vm834 = vcmask 138240
    %v835 = vsel %vm834, %v791, -inf
    %836 = vmax.xlane.f32.xlu0 %v835
    %v837 = vpop.xlane.xlu0 %836
    %v838 = vsel %vm834, %v796, -inf
    %839 = vmax.xlane.f32.xlu0 %v838
    %v840 = vpop.xlane.xlu0 %839
    %v841 = vsel %vm834, %v801, -inf
    %842 = vmax.xlane.f32.xlu0 %v841
    %v843 = vpop.xlane.xlu0 %842
    %v844 = vsel %vm834, %v806, -inf
    %845 = vmax.xlane.f32.xlu0 %v844
    %v846 = vpop.xlane.xlu0 %845
    %v847 = vsel %vm834, %v811, -inf
    %848 = vmax.xlane.f32.xlu0 %v847
    %v849 = vpop.xlane.xlu0 %848
    %v850 = vsel %vm834, %v816, -inf
    %851 = vmax.xlane.f32.xlu0 %v850
    %v852 = vpop.xlane.xlu0 %851
    %v853 = vsel %vm834, %v821, -inf
    %854 = vmax.xlane.f32.xlu0 %v853
    %v855 = vpop.xlane.xlu0 %854
    %v856 = vsel %vm834, %v826, -inf
    %857 = vmax.xlane.f32.xlu0 %v856
    %v858 = vpop.xlane.xlu0 %857
    %vm859 = vcmask 134144
    %v860 = vsel %vm859, %v831, -inf
    %861 = vmax.xlane.f32.xlu0 %v860
    %v862 = vpop.xlane.xlu0 %861
    %v863 = vsub.f32 %v791, %v837
    %v864 = vsub.f32 %v796, %v840
    %v865 = vsub.f32 %v801, %v843
    %v866 = vsub.f32 %v806, %v846
    %v867 = vsub.f32 %v811, %v849
    %v868 = vsub.f32 %v816, %v852
    %v869 = vsub.f32 %v821, %v855
    %v870 = vsub.f32 %v826, %v858
    %v871 = vsub.f32 %v831, %v862
    %v872 = vmul.f32 %v863, 1.442695
    %v873 = vpow.pop %v872
    %v874 = vmul.f32 %v864, 1.442695
    %v875 = vpow.pop %v874
    %v876 = vmul.f32 %v865, 1.442695
    %v877 = vpow.pop %v876
    %v878 = vmul.f32 %v866, 1.442695
    %v879 = vpow.pop %v878
    %v880 = vmul.f32 %v867, 1.442695
    %v881 = vpow.pop %v880
    %v882 = vmul.f32 %v868, 1.442695
    %v883 = vpow.pop %v882
    %v884 = vmul.f32 %v869, 1.442695
    %v885 = vpow.pop %v884
    %v886 = vmul.f32 %v870, 1.442695
    %v887 = vpow.pop %v886
    %v888 = vmul.f32 %v871, 1.442695
    %v889 = vpow.pop %v888
    %v890 = vsel %vm834, %v873, 0.0
    %891 = vadd.xlane.f32.xlu0 %v890
    %v892 = vpop.xlane.xlu0 %891
    %v893 = vsel %vm834, %v875, 0.0
    %894 = vadd.xlane.f32.xlu0 %v893
    %v895 = vpop.xlane.xlu0 %894
    %v896 = vsel %vm834, %v877, 0.0
    %897 = vadd.xlane.f32.xlu0 %v896
    %v898 = vpop.xlane.xlu0 %897
    %v899 = vsel %vm834, %v879, 0.0
    %900 = vadd.xlane.f32.xlu0 %v899
    %v901 = vpop.xlane.xlu0 %900
    %v902 = vsel %vm834, %v881, 0.0
    %903 = vadd.xlane.f32.xlu0 %v902
    %v904 = vpop.xlane.xlu0 %903
    %v905 = vsel %vm834, %v883, 0.0
    %906 = vadd.xlane.f32.xlu0 %v905
    %v907 = vpop.xlane.xlu0 %906
    %v908 = vsel %vm834, %v885, 0.0
    %909 = vadd.xlane.f32.xlu0 %v908
    %v910 = vpop.xlane.xlu0 %909
    %v911 = vsel %vm834, %v887, 0.0
    %912 = vadd.xlane.f32.xlu0 %v911
    %v913 = vpop.xlane.xlu0 %912
    %v914 = vsel %vm859, %v889, 0.0
    %915 = vadd.xlane.f32.xlu0 %v914
    %v916 = vpop.xlane.xlu0 %915
    %v917 = vrcp.pop %v892
    %v918 = vrcp.pop %v895
    %v919 = vrcp.pop %v898
    %v920 = vrcp.pop %v901
    %v921 = vrcp.pop %v904
    %v922 = vrcp.pop %v907
    %v923 = vrcp.pop %v910
    %v924 = vrcp.pop %v913
    %v925 = vrcp.pop %v916
    %v926 = vmul.f32 %v873, %v917
    %v927 = vmul.f32 %v875, %v918
    %v928 = vmul.f32 %v877, %v919
    %v929 = vmul.f32 %v879, %v920
    %v930 = vmul.f32 %v881, %v921
    %v931 = vmul.f32 %v883, %v922
    %v932 = vmul.f32 %v885, %v923
    %v933 = vmul.f32 %v887, %v924
    %v934 = vmul.f32 %v889, %v925
    %v936 = vsel %vm834, %v926, 0
    %v939 = vsel %vm834, %v927, 0
    %v942 = vsel %vm834, %v928, 0
    %v945 = vsel %vm834, %v929, 0
    %v948 = vsel %vm834, %v930, 0
    %v951 = vsel %vm834, %v931, 0
    %v954 = vsel %vm834, %v932, 0
    %v957 = vsel %vm834, %v933, 0
    %v960 = vsel %vm834, %v934, 0
    %v963 = vsel %vm213, %v635, 0
    %965 = vmatprep.subr.mxu0 0.0
    %966 = vmatpush1.msra.mxu0 %v625
    %967 = vmatprep.subr.mxu0 0.0
    %968 = vmatpush1.msra.mxu0 %v630
    %969 = vmatprep.subr.mxu0 0.0
    %970 = vmatpush1.msra.mxu0 %v963
    %971 = vmatprep.subr.mxu0 0.0
    %972 = vmatpush1.msra.mxu0 0.0
    %973 = vmatprep.subr.mxu0 0.0
    %974 = vmatpush1.msra.mxu0 0.0
    %975 = vmatprep.subr.mxu0 0.0
    %976 = vmatpush1.msra.mxu0 0.0
    %977 = vmatprep.subr.mxu0 0.0
    %978 = vmatpush1.msra.mxu0 0.0
    %979 = vmatprep.subr.mxu0 0.0
    %980 = vmatpush1.msra.mxu0 0.0
    %981 = vmatprep.subr.mxu0 0.0
    %982 = vmatpush1.msra.mxu0 0.0
    %983 = vmatprep.subr.mxu0 0.0
    %984 = vmatpush1.msra.mxu0 0.0
    %985 = vmatprep.subr.mxu0 0.0
    %986 = vmatpush1.msra.mxu0 0.0
    %987 = vmatprep.subr.mxu0 0.0
    %988 = vmatpush1.msra.mxu0 0.0
    %989 = vmatprep.subr.mxu0 0.0
    %990 = vmatpush1.msra.mxu0 0.0
    %991 = vmatprep.subr.mxu0 0.0
    %992 = vmatpush1.msra.mxu0 0.0
    %993 = vmatprep.subr.mxu0 0.0
    %994 = vmatpush1.msra.mxu0 0.0
    %995 = vmatprep.subr.mxu0 0.0
    %996 = vmatpush1.msra.mxu0 0.0
    %997 = vmatprep.subr.mxu0 0.0
    %998 = vmatpush1.msra.mxu0 0.0
    %999 = vmatprep.subr.mxu0 0.0
    %1000 = vmatpush1.msra.mxu0 0.0
    %1001 = vmatprep.subr.mxu0 0.0
    %1002 = vmatpush1.msra.mxu0 0.0
    %1003 = vmatprep.subr.mxu0 0.0
    %1004 = vmatpush1.msra.mxu0 0.0
    %1005 = vmatprep.subr.mxu0 0.0
    %1006 = vmatpush1.msra.mxu0 0.0
    %1007 = vmatprep.subr.mxu0 0.0
    %1008 = vmatpush1.msra.mxu0 0.0
    %1009 = vmatprep.subr.mxu0 0.0
    %1010 = vmatpush1.msra.mxu0 0.0
    %1011 = vmatprep.subr.mxu0 0.0
    %1012 = vmatpush1.msra.mxu0 0.0
    %1013 = vmatprep.subr.mxu0 0.0
    %1014 = vmatpush1.msra.mxu0 0.0
    %1015 = vmatprep.subr.mxu0 0.0
    %1016 = vmatpush1.msra.mxu0 0.0
    %1017 = vmatprep.subr.mxu0 0.0
    %1018 = vmatpush1.msra.mxu0 0.0
    %1019 = vmatprep.subr.mxu0 0.0
    %1020 = vmatpush1.msra.mxu0 0.0
    %1021 = vmatprep.subr.mxu0 0.0
    %1022 = vmatpush1.msra.mxu0 0.0
    %1023 = vmatprep.subr.mxu0 0.0
    %1024 = vmatpush1.msra.mxu0 0.0
    %1025 = vmatprep.subr.mxu0 0.0
    %1026 = vmatpush1.msra.mxu0 0.0
    %1027 = vmatprep.subr.mxu0 0.0
    %1028 = vmatpush1.msra.mxu0 0.0
    %1029 = vmatprep.mubr.f32.mxu0 0.0
    %1030 = vmatmul.mubr.f32.gmra.mrb[0].mxu0 %v936
    %v1031 = vpop.f32.mrb[0].mxu0
    %v1032 = vadd.f32 0.0, %v1031
    %v1033 = vpop.f32.mrb[0].mxu0
    %1034 = vmatprep.mubr.f32.mxu0 0.0
    %1035 = vmatmul.mubr.f32.gmra.mrb[0].mxu0 %v939
    %v1036 = vpop.f32.mrb[0].mxu0
    %v1037 = vadd.f32 0.0, %v1036
    %v1038 = vpop.f32.mrb[0].mxu0
    %1039 = vmatprep.mubr.f32.mxu0 0.0
    %1040 = vmatmul.mubr.f32.gmra.mrb[0].mxu0 %v942
    %v1041 = vpop.f32.mrb[0].mxu0
    %v1042 = vadd.f32 0.0, %v1041
    %v1043 = vpop.f32.mrb[0].mxu0
    %1044 = vmatprep.mubr.f32.mxu0 0.0
    %1045 = vmatmul.mubr.f32.gmra.mrb[0].mxu0 %v945
    %v1046 = vpop.f32.mrb[0].mxu0
    %v1047 = vadd.f32 0.0, %v1046
    %v1048 = vpop.f32.mrb[0].mxu0
    %1049 = vmatprep.mubr.f32.mxu0 0.0
    %1050 = vmatmul.mubr.f32.gmra.mrb[0].mxu0 %v948
    %v1051 = vpop.f32.mrb[0].mxu0
    %v1052 = vadd.f32 0.0, %v1051
    %v1053 = vpop.f32.mrb[0].mxu0
    %1054 = vmatprep.mubr.f32.mxu0 0.0
    %1055 = vmatmul.mubr.f32.gmra.mrb[0].mxu0 %v951
    %v1056 = vpop.f32.mrb[0].mxu0
    %v1057 = vadd.f32 0.0, %v1056
    %v1058 = vpop.f32.mrb[0].mxu0
    %1059 = vmatprep.mubr.f32.mxu0 0.0
    %1060 = vmatmul.mubr.f32.gmra.mrb[0].mxu0 %v954
    %v1061 = vpop.f32.mrb[0].mxu0
    %v1062 = vadd.f32 0.0, %v1061
    %v1063 = vpop.f32.mrb[0].mxu0
    %1064 = vmatprep.mubr.f32.mxu0 0.0
    %1065 = vmatmul.mubr.f32.gmra.mrb[0].mxu0 %v957
    %v1066 = vpop.f32.mrb[0].mxu0
    %v1067 = vadd.f32 0.0, %v1066
    %v1068 = vpop.f32.mrb[0].mxu0
    %1069 = vmatprep.mubr.f32.mxu0 0.0
    %1070 = vmatmul.mubr.f32.gmra.mrb[0].mxu0 %v960
    %v1071 = vpop.f32.mrb[0].mxu0
    %v1072 = vadd.f32 0.0, %v1071
    %v1073 = vpop.f32.mrb[0].mxu0
    %1074 = vdwg.mxu0
    %v1075 = vmul.f32 %v1032, %v87
    %v1076 = vmul.f32 %v1037, %v88
    %v1077 = vmul.f32 %v1042, %v89
    %v1078 = vmul.f32 %v1047, %v90
    %v1079 = vmul.f32 %v1052, %v91
    %v1080 = vmul.f32 %v1057, %v92
    %v1081 = vmul.f32 %v1062, %v93
    %v1082 = vmul.f32 %v1067, %v94
    %v1083 = vmul.f32 %v1072, %v95
    %vm1087 = vcmask 1046528
    %v1088 = vrot.slane %v1077, 1
    %v1089 = vrot.slane %v1078, 1
    %v1090 = vsel %vm1087, %v1088, %v1089
    %v1091 = vrot.slane %v1079, 1
    %v1092 = vsel %vm1087, %v1089, %v1091
    %v1096 = vadd.f32 %v1075, %v1090
    %v1097 = vadd.f32 %v1076, %v1092
    %v1098 = vadd.f32 %v1077, %v1091
    %vm1101 = vcmask 1045504
    %v1102 = vrot.slane %v1079, 2
    %v1103 = vrot.slane %v1080, 2
    %v1104 = vsel %vm1101, %v1102, %v1103
    %v1105 = vrot.slane %v1081, 2
    %v1106 = vsel %vm1101, %v1103, %v1105
    %v1110 = vadd.f32 %v1096, %v1104
    %v1111 = vadd.f32 %v1097, %v1106
    %v1112 = vadd.f32 %v1098, %v1105
    %vm1115 = vcmask 1044480
    %v1116 = vrot.slane %v1081, 3
    %v1117 = vrot.slane %v1082, 3
    %v1118 = vsel %vm1115, %v1116, %v1117
    %v1119 = vrot.slane %v1083, 3
    %v1120 = vsel %vm1115, %v1117, %v1119
    %v1124 = vadd.f32 %v1110, %v1118
    %v1125 = vadd.f32 %v1111, %v1120
    %v1126 = vadd.f32 %v1112, %v1119
    %v1129 = vrot.slane %v433, 1
    %v1130 = vrot.slane %v438, 1
    %v1131 = vsel %vm1087, %v1129, %v1130
    %v1132 = vrot.slane %v443, 1
    %v1133 = vsel %vm1087, %v1130, %v1132
    %v1137 = vrot.slane %v438, 7
    %v1138 = vsel %vm213, %v654, %v1137
    %v1139 = vrot.slane %v443, 7
    %v1140 = vsel %vm213, %v1137, %v1139
    %v1144 = vrot.slane %v438, 6
    %v1145 = vsel %vm228, %v662, %v1144
    %v1146 = vrot.slane %v443, 6
    %v1147 = vsel %vm228, %v1144, %v1146
    %v1151 = vsel %vm213, %v1132, %v433
    %v1152 = vsel %vm228, %v443, %v654
    %v1153 = vsel %vm667, %v1140, %v662
    %v1154 = vmul.f32 %v1131, %v87
    %v1155 = vmul.f32 %v1133, %v88
    %v1156 = vmul.f32 %v1151, %v89
    %v1157 = vmul.f32 %v438, %v90
    %v1158 = vmul.f32 %v1152, %v91
    %v1159 = vmul.f32 %v1138, %v92
    %v1160 = vmul.f32 %v1153, %v93
    %v1161 = vmul.f32 %v1145, %v94
    %v1162 = vmul.f32 %v1147, %v95
    %v1165 = vrot.slane %v534, 1
    %v1166 = vrot.slane %v539, 1
    %v1167 = vsel %vm1087, %v1165, %v1166
    %v1168 = vrot.slane %v544, 1
    %v1169 = vsel %vm1087, %v1166, %v1168
    %v1171 = vsel %vm240, %v1154, 0
    %v1174 = vsel %vm240, %v1155, 0
    %v1177 = vsel %vm240, %v1156, 0
    %v1180 = vsel %vm240, %v1157, 0
    %v1183 = vsel %vm240, %v1158, 0
    %v1186 = vsel %vm240, %v1159, 0
    %v1189 = vsel %vm240, %v1160, 0
    %v1192 = vsel %vm240, %v1161, 0
    %v1195 = vsel %vm240, %v1162, 0
    %v1197 = vsel %vm240, %v1167, 0
    %v1199 = vsel %vm240, %v1169, 0
    %v1201 = vsel %vm240, %v1168, 0
    %1203 = vmatprep.subr.mxu0 0.0
    %1204 = vmatpush1.xpose.msra.mxu0 %v1197
    %1205 = vmatprep.subr.mxu0 0.0
    %1206 = vmatpush1.xpose.msra.mxu0 %v1199
    %1207 = vmatprep.subr.mxu0 0.0
    %1208 = vmatpush1.xpose.msra.mxu0 %v1201
    %1209 = vmatprep.subr.mxu0 0.0
    %1210 = vmatpush1.xpose.msra.mxu0 0.0
    %1211 = vmatprep.subr.mxu0 0.0
    %1212 = vmatpush1.xpose.msra.mxu0 0.0
    %1213 = vmatprep.subr.mxu0 0.0
    %1214 = vmatpush1.xpose.msra.mxu0 0.0
    %1215 = vmatprep.subr.mxu0 0.0
    %1216 = vmatpush1.xpose.msra.mxu0 0.0
    %1217 = vmatprep.subr.mxu0 0.0
    %1218 = vmatpush1.xpose.msra.mxu0 0.0
    %1219 = vmatprep.subr.mxu0 0.0
    %1220 = vmatpush1.xpose.msra.mxu0 0.0
    %1221 = vmatprep.subr.mxu0 0.0
    %1222 = vmatpush1.xpose.msra.mxu0 0.0
    %1223 = vmatprep.subr.mxu0 0.0
    %1224 = vmatpush1.xpose.msra.mxu0 0.0
    %1225 = vmatprep.subr.mxu0 0.0
    %1226 = vmatpush1.xpose.msra.mxu0 0.0
    %1227 = vmatprep.subr.mxu0 0.0
    %1228 = vmatpush1.xpose.msra.mxu0 0.0
    %1229 = vmatprep.subr.mxu0 0.0
    %1230 = vmatpush1.xpose.msra.mxu0 0.0
    %1231 = vmatprep.subr.mxu0 0.0
    %1232 = vmatpush1.xpose.msra.mxu0 0.0
    %1233 = vmatprep.subr.mxu0 0.0
    %1234 = vmatpush1.xpose.msra.mxu0 0.0
    %1235 = vmatprep.subr.mxu0 0.0
    %1236 = vmatpush1.xpose.msra.mxu0 0.0
    %1237 = vmatprep.subr.mxu0 0.0
    %1238 = vmatpush1.xpose.msra.mxu0 0.0
    %1239 = vmatprep.subr.mxu0 0.0
    %1240 = vmatpush1.xpose.msra.mxu0 0.0
    %1241 = vmatprep.subr.mxu0 0.0
    %1242 = vmatpush1.xpose.msra.mxu0 0.0
    %1243 = vmatprep.subr.mxu0 0.0
    %1244 = vmatpush1.xpose.msra.mxu0 0.0
    %1245 = vmatprep.subr.mxu0 0.0
    %1246 = vmatpush1.xpose.msra.mxu0 0.0
    %1247 = vmatprep.subr.mxu0 0.0
    %1248 = vmatpush1.xpose.msra.mxu0 0.0
    %1249 = vmatprep.subr.mxu0 0.0
    %1250 = vmatpush1.xpose.msra.mxu0 0.0
    %1251 = vmatprep.subr.mxu0 0.0
    %1252 = vmatpush1.xpose.msra.mxu0 0.0
    %1253 = vmatprep.subr.mxu0 0.0
    %1254 = vmatpush1.xpose.msra.mxu0 0.0
    %1255 = vmatprep.subr.mxu0 0.0
    %1256 = vmatpush1.xpose.msra.mxu0 0.0
    %1257 = vmatprep.subr.mxu0 0.0
    %1258 = vmatpush1.xpose.msra.mxu0 0.0
    %1259 = vmatprep.subr.mxu0 0.0
    %1260 = vmatpush1.xpose.msra.mxu0 0.0
    %1261 = vmatprep.subr.mxu0 0.0
    %1262 = vmatpush1.xpose.msra.mxu0 0.0
    %1263 = vmatprep.subr.mxu0 0.0
    %1264 = vmatpush1.xpose.msra.mxu0 0.0
    %1265 = vmatprep.subr.mxu0 0.0
    %1266 = vmatpush1.xpose.msra.mxu0 0.0
    %1267 = vmatprep.mubr.f32.mxu0 0.0
    %1268 = vmatmul.mubr.f32.gmra.mrb[0].mxu0 %v1171
    %v1269 = vpop.f32.mrb[0].mxu0
    %v1270 = vadd.f32 0.0, %v1269
    %v1271 = vpop.f32.mrb[0].mxu0
    %1272 = vmatprep.mubr.f32.mxu0 0.0
    %1273 = vmatmul.mubr.f32.gmra.mrb[0].mxu0 %v1174
    %v1274 = vpop.f32.mrb[0].mxu0
    %v1275 = vadd.f32 0.0, %v1274
    %v1276 = vpop.f32.mrb[0].mxu0
    %1277 = vmatprep.mubr.f32.mxu0 0.0
    %1278 = vmatmul.mubr.f32.gmra.mrb[0].mxu0 %v1177
    %v1279 = vpop.f32.mrb[0].mxu0
    %v1280 = vadd.f32 0.0, %v1279
    %v1281 = vpop.f32.mrb[0].mxu0
    %1282 = vmatprep.mubr.f32.mxu0 0.0
    %1283 = vmatmul.mubr.f32.gmra.mrb[0].mxu0 %v1180
    %v1284 = vpop.f32.mrb[0].mxu0
    %v1285 = vadd.f32 0.0, %v1284
    %v1286 = vpop.f32.mrb[0].mxu0
    %1287 = vmatprep.mubr.f32.mxu0 0.0
    %1288 = vmatmul.mubr.f32.gmra.mrb[0].mxu0 %v1183
    %v1289 = vpop.f32.mrb[0].mxu0
    %v1290 = vadd.f32 0.0, %v1289
    %v1291 = vpop.f32.mrb[0].mxu0
    %1292 = vmatprep.mubr.f32.mxu0 0.0
    %1293 = vmatmul.mubr.f32.gmra.mrb[0].mxu0 %v1186
    %v1294 = vpop.f32.mrb[0].mxu0
    %v1295 = vadd.f32 0.0, %v1294
    %v1296 = vpop.f32.mrb[0].mxu0
    %1297 = vmatprep.mubr.f32.mxu0 0.0
    %1298 = vmatmul.mubr.f32.gmra.mrb[0].mxu0 %v1189
    %v1299 = vpop.f32.mrb[0].mxu0
    %v1300 = vadd.f32 0.0, %v1299
    %v1301 = vpop.f32.mrb[0].mxu0
    %1302 = vmatprep.mubr.f32.mxu0 0.0
    %1303 = vmatmul.mubr.f32.gmra.mrb[0].mxu0 %v1192
    %v1304 = vpop.f32.mrb[0].mxu0
    %v1305 = vadd.f32 0.0, %v1304
    %v1306 = vpop.f32.mrb[0].mxu0
    %1307 = vmatprep.mubr.f32.mxu0 0.0
    %1308 = vmatmul.mubr.f32.gmra.mrb[0].mxu0 %v1195
    %v1309 = vpop.f32.mrb[0].mxu0
    %v1310 = vadd.f32 0.0, %v1309
    %v1311 = vpop.f32.mrb[0].mxu0
    %1312 = vdwg.mxu0
    %v1313 = vsel %vm834, %v1270, -inf
    %1314 = vmax.xlane.f32.xlu0 %v1313
    %v1315 = vpop.xlane.xlu0 %1314
    %v1316 = vsel %vm834, %v1275, -inf
    %1317 = vmax.xlane.f32.xlu0 %v1316
    %v1318 = vpop.xlane.xlu0 %1317
    %v1319 = vsel %vm834, %v1280, -inf
    %1320 = vmax.xlane.f32.xlu0 %v1319
    %v1321 = vpop.xlane.xlu0 %1320
    %v1322 = vsel %vm834, %v1285, -inf
    %1323 = vmax.xlane.f32.xlu0 %v1322
    %v1324 = vpop.xlane.xlu0 %1323
    %v1325 = vsel %vm834, %v1290, -inf
    %1326 = vmax.xlane.f32.xlu0 %v1325
    %v1327 = vpop.xlane.xlu0 %1326
    %v1328 = vsel %vm834, %v1295, -inf
    %1329 = vmax.xlane.f32.xlu0 %v1328
    %v1330 = vpop.xlane.xlu0 %1329
    %v1331 = vsel %vm834, %v1300, -inf
    %1332 = vmax.xlane.f32.xlu0 %v1331
    %v1333 = vpop.xlane.xlu0 %1332
    %v1334 = vsel %vm834, %v1305, -inf
    %1335 = vmax.xlane.f32.xlu0 %v1334
    %v1336 = vpop.xlane.xlu0 %1335
    %v1337 = vsel %vm859, %v1310, -inf
    %1338 = vmax.xlane.f32.xlu0 %v1337
    %v1339 = vpop.xlane.xlu0 %1338
    %v1340 = vsub.f32 %v1270, %v1315
    %v1341 = vsub.f32 %v1275, %v1318
    %v1342 = vsub.f32 %v1280, %v1321
    %v1343 = vsub.f32 %v1285, %v1324
    %v1344 = vsub.f32 %v1290, %v1327
    %v1345 = vsub.f32 %v1295, %v1330
    %v1346 = vsub.f32 %v1300, %v1333
    %v1347 = vsub.f32 %v1305, %v1336
    %v1348 = vsub.f32 %v1310, %v1339
    %v1349 = vmul.f32 %v1340, 1.442695
    %v1350 = vpow.pop %v1349
    %v1351 = vmul.f32 %v1341, 1.442695
    %v1352 = vpow.pop %v1351
    %v1353 = vmul.f32 %v1342, 1.442695
    %v1354 = vpow.pop %v1353
    %v1355 = vmul.f32 %v1343, 1.442695
    %v1356 = vpow.pop %v1355
    %v1357 = vmul.f32 %v1344, 1.442695
    %v1358 = vpow.pop %v1357
    %v1359 = vmul.f32 %v1345, 1.442695
    %v1360 = vpow.pop %v1359
    %v1361 = vmul.f32 %v1346, 1.442695
    %v1362 = vpow.pop %v1361
    %v1363 = vmul.f32 %v1347, 1.442695
    %v1364 = vpow.pop %v1363
    %v1365 = vmul.f32 %v1348, 1.442695
    %v1366 = vpow.pop %v1365
    %v1367 = vsel %vm834, %v1350, 0.0
    %1368 = vadd.xlane.f32.xlu0 %v1367
    %v1369 = vpop.xlane.xlu0 %1368
    %v1370 = vsel %vm834, %v1352, 0.0
    %1371 = vadd.xlane.f32.xlu0 %v1370
    %v1372 = vpop.xlane.xlu0 %1371
    %v1373 = vsel %vm834, %v1354, 0.0
    %1374 = vadd.xlane.f32.xlu0 %v1373
    %v1375 = vpop.xlane.xlu0 %1374
    %v1376 = vsel %vm834, %v1356, 0.0
    %1377 = vadd.xlane.f32.xlu0 %v1376
    %v1378 = vpop.xlane.xlu0 %1377
    %v1379 = vsel %vm834, %v1358, 0.0
    %1380 = vadd.xlane.f32.xlu0 %v1379
    %v1381 = vpop.xlane.xlu0 %1380
    %v1382 = vsel %vm834, %v1360, 0.0
    %1383 = vadd.xlane.f32.xlu0 %v1382
    %v1384 = vpop.xlane.xlu0 %1383
    %v1385 = vsel %vm834, %v1362, 0.0
    %1386 = vadd.xlane.f32.xlu0 %v1385
    %v1387 = vpop.xlane.xlu0 %1386
    %v1388 = vsel %vm834, %v1364, 0.0
    %1389 = vadd.xlane.f32.xlu0 %v1388
    %v1390 = vpop.xlane.xlu0 %1389
    %v1391 = vsel %vm859, %v1366, 0.0
    %1392 = vadd.xlane.f32.xlu0 %v1391
    %v1393 = vpop.xlane.xlu0 %1392
    %v1394 = vrcp.pop %v1369
    %v1395 = vrcp.pop %v1372
    %v1396 = vrcp.pop %v1375
    %v1397 = vrcp.pop %v1378
    %v1398 = vrcp.pop %v1381
    %v1399 = vrcp.pop %v1384
    %v1400 = vrcp.pop %v1387
    %v1401 = vrcp.pop %v1390
    %v1402 = vrcp.pop %v1393
    %v1403 = vmul.f32 %v1350, %v1394
    %v1404 = vmul.f32 %v1352, %v1395
    %v1405 = vmul.f32 %v1354, %v1396
    %v1406 = vmul.f32 %v1356, %v1397
    %v1407 = vmul.f32 %v1358, %v1398
    %v1408 = vmul.f32 %v1360, %v1399
    %v1409 = vmul.f32 %v1362, %v1400
    %v1410 = vmul.f32 %v1364, %v1401
    %v1411 = vmul.f32 %v1366, %v1402
    %v1414 = vrot.slane %v635, 1
    %v1415 = vrot.slane %v640, 1
    %v1416 = vsel %vm1087, %v1414, %v1415
    %v1417 = vrot.slane %v645, 1
    %v1418 = vsel %vm1087, %v1415, %v1417
    %v1422 = vsel %vm834, %v1403, 0
    %v1425 = vsel %vm834, %v1404, 0
    %v1428 = vsel %vm834, %v1405, 0
    %v1431 = vsel %vm834, %v1406, 0
    %v1434 = vsel %vm834, %v1407, 0
    %v1437 = vsel %vm834, %v1408, 0
    %v1440 = vsel %vm834, %v1409, 0
    %v1443 = vsel %vm834, %v1410, 0
    %v1446 = vsel %vm834, %v1411, 0
    %v1448 = vsel %vm213, %v1417, 0
    %1450 = vmatprep.subr.mxu0 0.0
    %1451 = vmatpush1.msra.mxu0 %v1416
    %1452 = vmatprep.subr.mxu0 0.0
    %1453 = vmatpush1.msra.mxu0 %v1418
    %1454 = vmatprep.subr.mxu0 0.0
    %1455 = vmatpush1.msra.mxu0 %v1448
    %1456 = vmatprep.subr.mxu0 0.0
    %1457 = vmatpush1.msra.mxu0 0.0
    %1458 = vmatprep.subr.mxu0 0.0
    %1459 = vmatpush1.msra.mxu0 0.0
    %1460 = vmatprep.subr.mxu0 0.0
    %1461 = vmatpush1.msra.mxu0 0.0
    %1462 = vmatprep.subr.mxu0 0.0
    %1463 = vmatpush1.msra.mxu0 0.0
    %1464 = vmatprep.subr.mxu0 0.0
    %1465 = vmatpush1.msra.mxu0 0.0
    %1466 = vmatprep.subr.mxu0 0.0
    %1467 = vmatpush1.msra.mxu0 0.0
    %1468 = vmatprep.subr.mxu0 0.0
    %1469 = vmatpush1.msra.mxu0 0.0
    %1470 = vmatprep.subr.mxu0 0.0
    %1471 = vmatpush1.msra.mxu0 0.0
    %1472 = vmatprep.subr.mxu0 0.0
    %1473 = vmatpush1.msra.mxu0 0.0
    %1474 = vmatprep.subr.mxu0 0.0
    %1475 = vmatpush1.msra.mxu0 0.0
    %1476 = vmatprep.subr.mxu0 0.0
    %1477 = vmatpush1.msra.mxu0 0.0
    %1478 = vmatprep.subr.mxu0 0.0
    %1479 = vmatpush1.msra.mxu0 0.0
    %1480 = vmatprep.subr.mxu0 0.0
    %1481 = vmatpush1.msra.mxu0 0.0
    %1482 = vmatprep.subr.mxu0 0.0
    %1483 = vmatpush1.msra.mxu0 0.0
    %1484 = vmatprep.subr.mxu0 0.0
    %1485 = vmatpush1.msra.mxu0 0.0
    %1486 = vmatprep.subr.mxu0 0.0
    %1487 = vmatpush1.msra.mxu0 0.0
    %1488 = vmatprep.subr.mxu0 0.0
    %1489 = vmatpush1.msra.mxu0 0.0
    %1490 = vmatprep.subr.mxu0 0.0
    %1491 = vmatpush1.msra.mxu0 0.0
    %1492 = vmatprep.subr.mxu0 0.0
    %1493 = vmatpush1.msra.mxu0 0.0
    %1494 = vmatprep.subr.mxu0 0.0
    %1495 = vmatpush1.msra.mxu0 0.0
    %1496 = vmatprep.subr.mxu0 0.0
    %1497 = vmatpush1.msra.mxu0 0.0
    %1498 = vmatprep.subr.mxu0 0.0
    %1499 = vmatpush1.msra.mxu0 0.0
    %1500 = vmatprep.subr.mxu0 0.0
    %1501 = vmatpush1.msra.mxu0 0.0
    %1502 = vmatprep.subr.mxu0 0.0
    %1503 = vmatpush1.msra.mxu0 0.0
    %1504 = vmatprep.subr.mxu0 0.0
    %1505 = vmatpush1.msra.mxu0 0.0
    %1506 = vmatprep.subr.mxu0 0.0
    %1507 = vmatpush1.msra.mxu0 0.0
    %1508 = vmatprep.subr.mxu0 0.0
    %1509 = vmatpush1.msra.mxu0 0.0
    %1510 = vmatprep.subr.mxu0 0.0
    %1511 = vmatpush1.msra.mxu0 0.0
    %1512 = vmatprep.subr.mxu0 0.0
    %1513 = vmatpush1.msra.mxu0 0.0
    %1514 = vmatprep.mubr.f32.mxu0 0.0
    %1515 = vmatmul.mubr.f32.gmra.mrb[0].mxu0 %v1422
    %v1516 = vpop.f32.mrb[0].mxu0
    %v1517 = vadd.f32 0.0, %v1516
    %v1518 = vpop.f32.mrb[0].mxu0
    %1519 = vmatprep.mubr.f32.mxu0 0.0
    %1520 = vmatmul.mubr.f32.gmra.mrb[0].mxu0 %v1425
    %v1521 = vpop.f32.mrb[0].mxu0
    %v1522 = vadd.f32 0.0, %v1521
    %v1523 = vpop.f32.mrb[0].mxu0
    %1524 = vmatprep.mubr.f32.mxu0 0.0
    %1525 = vmatmul.mubr.f32.gmra.mrb[0].mxu0 %v1428
    %v1526 = vpop.f32.mrb[0].mxu0
    %v1527 = vadd.f32 0.0, %v1526
    %v1528 = vpop.f32.mrb[0].mxu0
    %1529 = vmatprep.mubr.f32.mxu0 0.0
    %1530 = vmatmul.mubr.f32.gmra.mrb[0].mxu0 %v1431
    %v1531 = vpop.f32.mrb[0].mxu0
    %v1532 = vadd.f32 0.0, %v1531
    %v1533 = vpop.f32.mrb[0].mxu0
    %1534 = vmatprep.mubr.f32.mxu0 0.0
    %1535 = vmatmul.mubr.f32.gmra.mrb[0].mxu0 %v1434
    %v1536 = vpop.f32.mrb[0].mxu0
    %v1537 = vadd.f32 0.0, %v1536
    %v1538 = vpop.f32.mrb[0].mxu0
    %1539 = vmatprep.mubr.f32.mxu0 0.0
    %1540 = vmatmul.mubr.f32.gmra.mrb[0].mxu0 %v1437
    %v1541 = vpop.f32.mrb[0].mxu0
    %v1542 = vadd.f32 0.0, %v1541
    %v1543 = vpop.f32.mrb[0].mxu0
    %1544 = vmatprep.mubr.f32.mxu0 0.0
    %1545 = vmatmul.mubr.f32.gmra.mrb[0].mxu0 %v1440
    %v1546 = vpop.f32.mrb[0].mxu0
    %v1547 = vadd.f32 0.0, %v1546
    %v1548 = vpop.f32.mrb[0].mxu0
    %1549 = vmatprep.mubr.f32.mxu0 0.0
    %1550 = vmatmul.mubr.f32.gmra.mrb[0].mxu0 %v1443
    %v1551 = vpop.f32.mrb[0].mxu0
    %v1552 = vadd.f32 0.0, %v1551
    %v1553 = vpop.f32.mrb[0].mxu0
    %1554 = vmatprep.mubr.f32.mxu0 0.0
    %1555 = vmatmul.mubr.f32.gmra.mrb[0].mxu0 %v1446
    %v1556 = vpop.f32.mrb[0].mxu0
    %v1557 = vadd.f32 0.0, %v1556
    %v1558 = vpop.f32.mrb[0].mxu0
    %1559 = vdwg.mxu0
    %v1560 = vmul.f32 %v1517, %v87
    %v1561 = vmul.f32 %v1522, %v88
    %v1562 = vmul.f32 %v1527, %v89
    %v1563 = vmul.f32 %v1532, %v90
    %v1564 = vmul.f32 %v1537, %v91
    %v1565 = vmul.f32 %v1542, %v92
    %v1566 = vmul.f32 %v1547, %v93
    %v1567 = vmul.f32 %v1552, %v94
    %v1568 = vmul.f32 %v1557, %v95
    %v1572 = vrot.slane %v1562, 1
    %v1573 = vrot.slane %v1563, 1
    %v1574 = vsel %vm1087, %v1572, %v1573
    %v1575 = vrot.slane %v1564, 1
    %v1576 = vsel %vm1087, %v1573, %v1575
    %v1580 = vadd.f32 %v1560, %v1574
    %v1581 = vadd.f32 %v1561, %v1576
    %v1582 = vadd.f32 %v1562, %v1575
    %v1585 = vrot.slane %v1564, 2
    %v1586 = vrot.slane %v1565, 2
    %v1587 = vsel %vm1101, %v1585, %v1586
    %v1588 = vrot.slane %v1566, 2
    %v1589 = vsel %vm1101, %v1586, %v1588
    %v1593 = vadd.f32 %v1580, %v1587
    %v1594 = vadd.f32 %v1581, %v1589
    %v1595 = vadd.f32 %v1582, %v1588
    %v1598 = vrot.slane %v1566, 3
    %v1599 = vrot.slane %v1567, 3
    %v1600 = vsel %vm1115, %v1598, %v1599
    %v1601 = vrot.slane %v1568, 3
    %v1602 = vsel %vm1115, %v1599, %v1601
    %v1606 = vadd.f32 %v1593, %v1600
    %v1607 = vadd.f32 %v1594, %v1602
    %v1608 = vadd.f32 %v1595, %v1601
    %v1612 = vrot.slane %v1606, 7
    %v1613 = vrot.slane %v1607, 7
    %v1614 = vsel %vm213, %v1612, %v1613
    %v1615 = vrot.slane %v1608, 7
    %v1616 = vsel %vm213, %v1613, %v1615
    %v1618 = vsel %vm213, %v1126, %v1612
    %v1619 = vld [vmem:[%s14] sm:$0xff]
    %v1620 = vld [vmem:[%s14 + $0x8] sm:$0xff]
    %v1621 = vld [vmem:[%s14 + $0x10] sm:$0xff]
    %v1622 = vld [vmem:[%s14 + $0x18] sm:$0xff]
    %v1624 = vsel %vm240, %v1124, 0
    %v1627 = vsel %vm240, %v1125, 0
    %v1630 = vsel %vm240, %v1618, 0
    %v1632 = vsel %vm240, %v1614, 0
    %v1634 = vsel %vm240, %v1616, 0
    %1636 = vmatprep.subr.mxu0 0.0
    %1637 = vmatpush1.msra.mxu0 %v1619
    %1638 = vmatprep.subr.mxu0 0.0
    %1639 = vmatpush1.msra.mxu0 %v1620
    %1640 = vmatprep.subr.mxu0 0.0
    %1641 = vmatpush1.msra.mxu0 %v1621
    %1642 = vmatprep.subr.mxu0 0.0
    %1643 = vmatpush1.msra.mxu0 %v1622
    %1644 = vmatprep.subr.mxu0 0.0
    %1645 = vmatpush1.msra.mxu0 0.0
    %1646 = vmatprep.subr.mxu0 0.0
    %1647 = vmatpush1.msra.mxu0 0.0
    %1648 = vmatprep.subr.mxu0 0.0
    %1649 = vmatpush1.msra.mxu0 0.0
    %1650 = vmatprep.subr.mxu0 0.0
    %1651 = vmatpush1.msra.mxu0 0.0
    %1652 = vmatprep.subr.mxu0 0.0
    %1653 = vmatpush1.msra.mxu0 0.0
    %1654 = vmatprep.subr.mxu0 0.0
    %1655 = vmatpush1.msra.mxu0 0.0
    %1656 = vmatprep.subr.mxu0 0.0
    %1657 = vmatpush1.msra.mxu0 0.0
    %1658 = vmatprep.subr.mxu0 0.0
    %1659 = vmatpush1.msra.mxu0 0.0
    %1660 = vmatprep.subr.mxu0 0.0
    %1661 = vmatpush1.msra.mxu0 0.0
    %1662 = vmatprep.subr.mxu0 0.0
    %1663 = vmatpush1.msra.mxu0 0.0
    %1664 = vmatprep.subr.mxu0 0.0
    %1665 = vmatpush1.msra.mxu0 0.0
    %1666 = vmatprep.subr.mxu0 0.0
    %1667 = vmatpush1.msra.mxu0 0.0
    %1668 = vmatprep.subr.mxu0 0.0
    %1669 = vmatpush1.msra.mxu0 0.0
    %1670 = vmatprep.subr.mxu0 0.0
    %1671 = vmatpush1.msra.mxu0 0.0
    %1672 = vmatprep.subr.mxu0 0.0
    %1673 = vmatpush1.msra.mxu0 0.0
    %1674 = vmatprep.subr.mxu0 0.0
    %1675 = vmatpush1.msra.mxu0 0.0
    %1676 = vmatprep.subr.mxu0 0.0
    %1677 = vmatpush1.msra.mxu0 0.0
    %1678 = vmatprep.subr.mxu0 0.0
    %1679 = vmatpush1.msra.mxu0 0.0
    %1680 = vmatprep.subr.mxu0 0.0
    %1681 = vmatpush1.msra.mxu0 0.0
    %1682 = vmatprep.subr.mxu0 0.0
    %1683 = vmatpush1.msra.mxu0 0.0
    %1684 = vmatprep.subr.mxu0 0.0
    %1685 = vmatpush1.msra.mxu0 0.0
    %1686 = vmatprep.subr.mxu0 0.0
    %1687 = vmatpush1.msra.mxu0 0.0
    %1688 = vmatprep.subr.mxu0 0.0
    %1689 = vmatpush1.msra.mxu0 0.0
    %1690 = vmatprep.subr.mxu0 0.0
    %1691 = vmatpush1.msra.mxu0 0.0
    %1692 = vmatprep.subr.mxu0 0.0
    %1693 = vmatpush1.msra.mxu0 0.0
    %1694 = vmatprep.subr.mxu0 0.0
    %1695 = vmatpush1.msra.mxu0 0.0
    %1696 = vmatprep.subr.mxu0 0.0
    %1697 = vmatpush1.msra.mxu0 0.0
    %1698 = vmatprep.subr.mxu0 0.0
    %1699 = vmatpush1.msra.mxu0 0.0
    %1700 = vmatprep.mubr.f32.mxu0 0.0
    %1701 = vmatmul.mubr.f32.gmra.mrb[0].mxu0 %v1624
    %v1702 = vpop.f32.mrb[0].mxu0
    %v1703 = vadd.f32 0.0, %v1702
    %v1704 = vpop.f32.mrb[0].mxu0
    %1705 = vmatprep.mubr.f32.mxu0 0.0
    %1706 = vmatmul.mubr.f32.gmra.mrb[0].mxu0 %v1627
    %v1707 = vpop.f32.mrb[0].mxu0
    %v1708 = vadd.f32 0.0, %v1707
    %v1709 = vpop.f32.mrb[0].mxu0
    %1710 = vmatprep.mubr.f32.mxu0 0.0
    %1711 = vmatmul.mubr.f32.gmra.mrb[0].mxu0 %v1630
    %v1712 = vpop.f32.mrb[0].mxu0
    %v1713 = vadd.f32 0.0, %v1712
    %v1714 = vpop.f32.mrb[0].mxu0
    %1715 = vmatprep.mubr.f32.mxu0 0.0
    %1716 = vmatmul.mubr.f32.gmra.mrb[0].mxu0 %v1632
    %v1717 = vpop.f32.mrb[0].mxu0
    %v1718 = vadd.f32 0.0, %v1717
    %v1719 = vpop.f32.mrb[0].mxu0
    %1720 = vmatprep.mubr.f32.mxu0 0.0
    %1721 = vmatmul.mubr.f32.gmra.mrb[0].mxu0 %v1634
    %v1722 = vpop.f32.mrb[0].mxu0
    %v1723 = vadd.f32 0.0, %v1722
    %v1724 = vpop.f32.mrb[0].mxu0
    %1725 = vdwg.mxu0
    %v1726 = vadd.f32 %v235, %v1703
    %v1727 = vadd.f32 %v216, %v1708
    %v1728 = vadd.f32 %v237, %v1713
    %v1729 = vadd.f32 %v231, %v1718
    %v1730 = vadd.f32 %v230, %v1723
    %v1731 = vld [vmem:[%s15] sm:$0x1]
    %v1733 = vlaneseq
    %v1734 = vshrl.u32 %v1733, 7
    %v1735 = vsub.s32 0, %v1734
    %v1736 = vrot.slane %v1731, %v1735
    %v1738 = vadd.f32 %v1726, %v1736
    %v1739 = vadd.f32 %v1727, %v1736
    %v1740 = vadd.f32 %v1728, %v1736
    %v1741 = vadd.f32 %v1729, %v1736
    %v1742 = vadd.f32 %v1730, %v1736
    %v1743 = vld [vmem:[%s16] sm:$0x1]
    %v1744 = vld [vmem:[%s17] sm:$0x1]
    %v1745 = vsel %vm240, %v1738, 0.0
    %1746 = vadd.xlane.f32.xlu0 %v1745
    %v1747 = vpop.xlane.xlu0 %1746
    %v1748 = vsel %vm240, %v1739, 0.0
    %1749 = vadd.xlane.f32.xlu0 %v1748
    %v1750 = vpop.xlane.xlu0 %1749
    %v1751 = vsel %vm240, %v1740, 0.0
    %1752 = vadd.xlane.f32.xlu0 %v1751
    %v1753 = vpop.xlane.xlu0 %1752
    %v1754 = vsel %vm240, %v1741, 0.0
    %1755 = vadd.xlane.f32.xlu0 %v1754
    %v1756 = vpop.xlane.xlu0 %1755
    %v1757 = vsel %vm253, %v1742, 0.0
    %1758 = vadd.xlane.f32.xlu0 %v1757
    %v1759 = vpop.xlane.xlu0 %1758
    %v1760 = vmul.f32 %v1747, %v257
    %v1761 = vmul.f32 %v1750, %v257
    %v1762 = vmul.f32 %v1753, %v257
    %v1763 = vmul.f32 %v1756, %v257
    %v1764 = vmul.f32 %v1759, %v257
    %v1765 = vsub.f32 %v1738, %v1760
    %v1766 = vsub.f32 %v1739, %v1761
    %v1767 = vsub.f32 %v1740, %v1762
    %v1768 = vsub.f32 %v1741, %v1763
    %v1769 = vsub.f32 %v1742, %v1764
    %v1770 = vmul.f32 %v1765, %v1765
    %v1771 = vmul.f32 %v1766, %v1766
    %v1772 = vmul.f32 %v1767, %v1767
    %v1773 = vmul.f32 %v1768, %v1768
    %v1774 = vmul.f32 %v1769, %v1769
    %v1775 = vsel %vm240, %v1770, 0.0
    %1776 = vadd.xlane.f32.xlu0 %v1775
    %v1777 = vpop.xlane.xlu0 %1776
    %v1778 = vsel %vm240, %v1771, 0.0
    %1779 = vadd.xlane.f32.xlu0 %v1778
    %v1780 = vpop.xlane.xlu0 %1779
    %v1781 = vsel %vm240, %v1772, 0.0
    %1782 = vadd.xlane.f32.xlu0 %v1781
    %v1783 = vpop.xlane.xlu0 %1782
    %v1784 = vsel %vm240, %v1773, 0.0
    %1785 = vadd.xlane.f32.xlu0 %v1784
    %v1786 = vpop.xlane.xlu0 %1785
    %v1787 = vsel %vm253, %v1774, 0.0
    %1788 = vadd.xlane.f32.xlu0 %v1787
    %v1789 = vpop.xlane.xlu0 %1788
    %v1790 = vmul.f32 %v1777, %v257
    %v1791 = vmul.f32 %v1780, %v257
    %v1792 = vmul.f32 %v1783, %v257
    %v1793 = vmul.f32 %v1786, %v257
    %v1794 = vmul.f32 %v1789, %v257
    %v1795 = vadd.f32 %v1790, 1e-06
    %v1796 = vadd.f32 %v1791, 1e-06
    %v1797 = vadd.f32 %v1792, 1e-06
    %v1798 = vadd.f32 %v1793, 1e-06
    %v1799 = vadd.f32 %v1794, 1e-06
    %v1800 = vrsqrt.pop %v1795
    %v1801 = vrsqrt.pop %v1796
    %v1802 = vrsqrt.pop %v1797
    %v1803 = vrsqrt.pop %v1798
    %v1804 = vrsqrt.pop %v1799
    %v1805 = vmul.f32 %v1765, %v1800
    %v1806 = vmul.f32 %v1766, %v1801
    %v1807 = vmul.f32 %v1767, %v1802
    %v1808 = vmul.f32 %v1768, %v1803
    %v1809 = vmul.f32 %v1769, %v1804
    %v1811 = vlaneseq
    %v1812 = vshrl.u32 %v1811, 7
    %v1813 = vsub.s32 0, %v1812
    %v1814 = vrot.slane %v1743, %v1813
    %v1816 = vmul.f32 %v1805, %v1814
    %v1817 = vmul.f32 %v1806, %v1814
    %v1818 = vmul.f32 %v1807, %v1814
    %v1819 = vmul.f32 %v1808, %v1814
    %v1820 = vmul.f32 %v1809, %v1814
    %v1822 = vlaneseq
    %v1823 = vshrl.u32 %v1822, 7
    %v1824 = vsub.s32 0, %v1823
    %v1825 = vrot.slane %v1744, %v1824
    %v1827 = vadd.f32 %v1816, %v1825
    %v1828 = vadd.f32 %v1817, %v1825
    %v1829 = vadd.f32 %v1818, %v1825
    %v1830 = vadd.f32 %v1819, %v1825
    %v1831 = vadd.f32 %v1820, %v1825
    %v1832 = vld [vmem:[%s18] sm:$0xff]
    %v1833 = vld [vmem:[%s18 + $0x8] sm:$0xff]
    %v1834 = vld [vmem:[%s18 + $0x10] sm:$0xff]
    %v1835 = vld [vmem:[%s18 + $0x18] sm:$0xff]
    %v1836 = vld [vmem:[%s19] sm:$0x1]
    %v1838 = vlaneseq
    %v1839 = vshrl.u32 %v1838, 7
    %v1840 = vsub.s32 0, %v1839
    %v1841 = vrot.slane %v1836, %v1840
    %v1844 = vsel %vm240, %v1827, 0
    %v1847 = vsel %vm240, %v1828, 0
    %v1850 = vsel %vm240, %v1829, 0
    %v1853 = vsel %vm240, %v1830, 0
    %v1856 = vsel %vm240, %v1831, 0
    %1858 = vmatprep.subr.mxu0 0.0
    %1859 = vmatpush1.msra.mxu0 %v1832
    %1860 = vmatprep.subr.mxu0 0.0
    %1861 = vmatpush1.msra.mxu0 %v1833
    %1862 = vmatprep.subr.mxu0 0.0
    %1863 = vmatpush1.msra.mxu0 %v1834
    %1864 = vmatprep.subr.mxu0 0.0
    %1865 = vmatpush1.msra.mxu0 %v1835
    %1866 = vmatprep.subr.mxu0 0.0
    %1867 = vmatpush1.msra.mxu0 0.0
    %1868 = vmatprep.subr.mxu0 0.0
    %1869 = vmatpush1.msra.mxu0 0.0
    %1870 = vmatprep.subr.mxu0 0.0
    %1871 = vmatpush1.msra.mxu0 0.0
    %1872 = vmatprep.subr.mxu0 0.0
    %1873 = vmatpush1.msra.mxu0 0.0
    %1874 = vmatprep.subr.mxu0 0.0
    %1875 = vmatpush1.msra.mxu0 0.0
    %1876 = vmatprep.subr.mxu0 0.0
    %1877 = vmatpush1.msra.mxu0 0.0
    %1878 = vmatprep.subr.mxu0 0.0
    %1879 = vmatpush1.msra.mxu0 0.0
    %1880 = vmatprep.subr.mxu0 0.0
    %1881 = vmatpush1.msra.mxu0 0.0
    %1882 = vmatprep.subr.mxu0 0.0
    %1883 = vmatpush1.msra.mxu0 0.0
    %1884 = vmatprep.subr.mxu0 0.0
    %1885 = vmatpush1.msra.mxu0 0.0
    %1886 = vmatprep.subr.mxu0 0.0
    %1887 = vmatpush1.msra.mxu0 0.0
    %1888 = vmatprep.subr.mxu0 0.0
    %1889 = vmatpush1.msra.mxu0 0.0
    %1890 = vmatprep.subr.mxu0 0.0
    %1891 = vmatpush1.msra.mxu0 0.0
    %1892 = vmatprep.subr.mxu0 0.0
    %1893 = vmatpush1.msra.mxu0 0.0
    %1894 = vmatprep.subr.mxu0 0.0
    %1895 = vmatpush1.msra.mxu0 0.0
    %1896 = vmatprep.subr.mxu0 0.0
    %1897 = vmatpush1.msra.mxu0 0.0
    %1898 = vmatprep.subr.mxu0 0.0
    %1899 = vmatpush1.msra.mxu0 0.0
    %1900 = vmatprep.subr.mxu0 0.0
    %1901 = vmatpush1.msra.mxu0 0.0
    %1902 = vmatprep.subr.mxu0 0.0
    %1903 = vmatpush1.msra.mxu0 0.0
    %1904 = vmatprep.subr.mxu0 0.0
    %1905 = vmatpush1.msra.mxu0 0.0
    %1906 = vmatprep.subr.mxu0 0.0
    %1907 = vmatpush1.msra.mxu0 0.0
    %1908 = vmatprep.subr.mxu0 0.0
    %1909 = vmatpush1.msra.mxu0 0.0
    %1910 = vmatprep.subr.mxu0 0.0
    %1911 = vmatpush1.msra.mxu0 0.0
    %1912 = vmatprep.subr.mxu0 0.0
    %1913 = vmatpush1.msra.mxu0 0.0
    %1914 = vmatprep.subr.mxu0 0.0
    %1915 = vmatpush1.msra.mxu0 0.0
    %1916 = vmatprep.subr.mxu0 0.0
    %1917 = vmatpush1.msra.mxu0 0.0
    %1918 = vmatprep.subr.mxu0 0.0
    %1919 = vmatpush1.msra.mxu0 0.0
    %1920 = vmatprep.subr.mxu0 0.0
    %1921 = vmatpush1.msra.mxu0 0.0
    %1922 = vmatprep.mubr.f32.mxu0 0.0
    %1923 = vmatmul.mubr.f32.gmra.mrb[0].mxu0 %v1844
    %v1924 = vpop.f32.mrb[0].mxu0
    %v1925 = vadd.f32 %v1841, %v1924
    %v1926 = vpop.f32.mrb[0].mxu0
    %1927 = vmatprep.mubr.f32.mxu0 0.0
    %1928 = vmatmul.mubr.f32.gmra.mrb[0].mxu0 %v1847
    %v1929 = vpop.f32.mrb[0].mxu0
    %v1930 = vadd.f32 %v1841, %v1929
    %v1931 = vpop.f32.mrb[0].mxu0
    %1932 = vmatprep.mubr.f32.mxu0 0.0
    %1933 = vmatmul.mubr.f32.gmra.mrb[0].mxu0 %v1850
    %v1934 = vpop.f32.mrb[0].mxu0
    %v1935 = vadd.f32 %v1841, %v1934
    %v1936 = vpop.f32.mrb[0].mxu0
    %1937 = vmatprep.mubr.f32.mxu0 0.0
    %1938 = vmatmul.mubr.f32.gmra.mrb[0].mxu0 %v1853
    %v1939 = vpop.f32.mrb[0].mxu0
    %v1940 = vadd.f32 %v1841, %v1939
    %v1941 = vpop.f32.mrb[0].mxu0
    %1942 = vmatprep.mubr.f32.mxu0 0.0
    %1943 = vmatmul.mubr.f32.gmra.mrb[0].mxu0 %v1856
    %v1944 = vpop.f32.mrb[0].mxu0
    %v1945 = vadd.f32 %v1841, %v1944
    %v1946 = vpop.f32.mrb[0].mxu0
    %1947 = vdwg.mxu0
    %v1948 = vmul.f32 %v1925, 0.5
    %v1949 = vmul.f32 %v1930, 0.5
    %v1950 = vmul.f32 %v1935, 0.5
    %v1951 = vmul.f32 %v1940, 0.5
    %v1952 = vmul.f32 %v1945, 0.5
    %v1953 = vmul.f32 %v1925, 0.044715
    %v1954 = vmul.f32 %v1930, 0.044715
    %v1955 = vmul.f32 %v1935, 0.044715
    %v1956 = vmul.f32 %v1940, 0.044715
    %v1957 = vmul.f32 %v1945, 0.044715
    %v1958 = vmul.f32 %v1953, %v1925
    %v1959 = vmul.f32 %v1954, %v1930
    %v1960 = vmul.f32 %v1955, %v1935
    %v1961 = vmul.f32 %v1956, %v1940
    %v1962 = vmul.f32 %v1957, %v1945
    %v1963 = vmul.f32 %v1958, %v1925
    %v1964 = vmul.f32 %v1959, %v1930
    %v1965 = vmul.f32 %v1960, %v1935
    %v1966 = vmul.f32 %v1961, %v1940
    %v1967 = vmul.f32 %v1962, %v1945
    %v1968 = vadd.f32 %v1925, %v1963
    %v1969 = vadd.f32 %v1930, %v1964
    %v1970 = vadd.f32 %v1935, %v1965
    %v1971 = vadd.f32 %v1940, %v1966
    %v1972 = vadd.f32 %v1945, %v1967
    %v1973 = vmul.f32 %v1968, 0.7978846
    %v1974 = vmul.f32 %v1969, 0.7978846
    %v1975 = vmul.f32 %v1970, 0.7978846
    %v1976 = vmul.f32 %v1971, 0.7978846
    %v1977 = vmul.f32 %v1972, 0.7978846
    %v1978 = vtanh.pop %v1973
    %v1979 = vtanh.pop %v1974
    %v1980 = vtanh.pop %v1975
    %v1981 = vtanh.pop %v1976
    %v1982 = vtanh.pop %v1977
    %v1983 = vadd.f32 %v1978, 1.0
    %v1984 = vadd.f32 %v1979, 1.0
    %v1985 = vadd.f32 %v1980, 1.0
    %v1986 = vadd.f32 %v1981, 1.0
    %v1987 = vadd.f32 %v1982, 1.0
    %v1988 = vmul.f32 %v1948, %v1983
    %v1989 = vmul.f32 %v1949, %v1984
    %v1990 = vmul.f32 %v1950, %v1985
    %v1991 = vmul.f32 %v1951, %v1986
    %v1992 = vmul.f32 %v1952, %v1987
    %v1993 = vld [vmem:[%s20] sm:$0xff]
    %v1994 = vld [vmem:[%s20 + $0x8] sm:$0xff]
    %v1995 = vld [vmem:[%s20 + $0x10] sm:$0xff]
    %v1996 = vld [vmem:[%s20 + $0x18] sm:$0xff]
    %v1997 = vld [vmem:[%s20 + $0x20] sm:$0xff]
    %v1998 = vld [vmem:[%s20 + $0x28] sm:$0xff]
    %v1999 = vld [vmem:[%s20 + $0x30] sm:$0xff]
    %v2000 = vld [vmem:[%s20 + $0x38] sm:$0xff]
    %v2001 = vld [vmem:[%s20 + $0x40] sm:$0xff]
    %v2002 = vld [vmem:[%s20 + $0x48] sm:$0xff]
    %v2003 = vld [vmem:[%s20 + $0x50] sm:$0xff]
    %v2004 = vld [vmem:[%s20 + $0x58] sm:$0xff]
    %v2005 = vld [vmem:[%s20 + $0x60] sm:$0xff]
    %v2006 = vld [vmem:[%s20 + $0x68] sm:$0xff]
    %v2007 = vld [vmem:[%s20 + $0x70] sm:$0xff]
    %v2008 = vld [vmem:[%s20 + $0x78] sm:$0xff]
    %2009 = vmatprep.subr.mxu0 0.0
    %2010 = vmatpush1.msra.mxu0 %v1993
    %2011 = vmatprep.subr.mxu0 0.0
    %2012 = vmatpush1.msra.mxu0 %v1994
    %2013 = vmatprep.subr.mxu0 0.0
    %2014 = vmatpush1.msra.mxu0 %v1995
    %2015 = vmatprep.subr.mxu0 0.0
    %2016 = vmatpush1.msra.mxu0 %v1996
    %2017 = vmatprep.subr.mxu0 0.0
    %2018 = vmatpush1.msra.mxu0 %v1997
    %2019 = vmatprep.subr.mxu0 0.0
    %2020 = vmatpush1.msra.mxu0 %v1998
    %2021 = vmatprep.subr.mxu0 0.0
    %2022 = vmatpush1.msra.mxu0 %v1999
    %2023 = vmatprep.subr.mxu0 0.0
    %2024 = vmatpush1.msra.mxu0 %v2000
    %2025 = vmatprep.subr.mxu0 0.0
    %2026 = vmatpush1.msra.mxu0 %v2001
    %2027 = vmatprep.subr.mxu0 0.0
    %2028 = vmatpush1.msra.mxu0 %v2002
    %2029 = vmatprep.subr.mxu0 0.0
    %2030 = vmatpush1.msra.mxu0 %v2003
    %2031 = vmatprep.subr.mxu0 0.0
    %2032 = vmatpush1.msra.mxu0 %v2004
    %2033 = vmatprep.subr.mxu0 0.0
    %2034 = vmatpush1.msra.mxu0 %v2005
    %2035 = vmatprep.subr.mxu0 0.0
    %2036 = vmatpush1.msra.mxu0 %v2006
    %2037 = vmatprep.subr.mxu0 0.0
    %2038 = vmatpush1.msra.mxu0 %v2007
    %2039 = vmatprep.subr.mxu0 0.0
    %2040 = vmatpush1.msra.mxu0 %v2008
    %2041 = vmatprep.subr.mxu0 0.0
    %2042 = vmatpush1.msra.mxu0 0.0
    %2043 = vmatprep.subr.mxu0 0.0
    %2044 = vmatpush1.msra.mxu0 0.0
    %2045 = vmatprep.subr.mxu0 0.0
    %2046 = vmatpush1.msra.mxu0 0.0
    %2047 = vmatprep.subr.mxu0 0.0
    %2048 = vmatpush1.msra.mxu0 0.0
    %2049 = vmatprep.subr.mxu0 0.0
    %2050 = vmatpush1.msra.mxu0 0.0
    %2051 = vmatprep.subr.mxu0 0.0
    %2052 = vmatpush1.msra.mxu0 0.0
    %2053 = vmatprep.subr.mxu0 0.0
    %2054 = vmatpush1.msra.mxu0 0.0
    %2055 = vmatprep.subr.mxu0 0.0
    %2056 = vmatpush1.msra.mxu0 0.0
    %2057 = vmatprep.subr.mxu0 0.0
    %2058 = vmatpush1.msra.mxu0 0.0
    %2059 = vmatprep.subr.mxu0 0.0
    %2060 = vmatpush1.msra.mxu0 0.0
    %2061 = vmatprep.subr.mxu0 0.0
    %2062 = vmatpush1.msra.mxu0 0.0
    %2063 = vmatprep.subr.mxu0 0.0
    %2064 = vmatpush1.msra.mxu0 0.0
    %2065 = vmatprep.subr.mxu0 0.0
    %2066 = vmatpush1.msra.mxu0 0.0
    %2067 = vmatprep.subr.mxu0 0.0
    %2068 = vmatpush1.msra.mxu0 0.0
    %2069 = vmatprep.subr.mxu0 0.0
    %2070 = vmatpush1.msra.mxu0 0.0
    %2071 = vmatprep.subr.mxu0 0.0
    %2072 = vmatpush1.msra.mxu0 0.0
    %2073 = vmatprep.mubr.f32.mxu0 0.0
    %2074 = vmatmul.mubr.f32.gmra.mrb[0].mxu0 %v1988
    %v2075 = vpop.f32.mrb[0].mxu0
    %v2076 = vadd.f32 0.0, %v2075
    %v2077 = vpop.f32.mrb[0].mxu0
    %2078 = vmatprep.mubr.f32.mxu0 0.0
    %2079 = vmatmul.mubr.f32.gmra.mrb[0].mxu0 %v1989
    %v2080 = vpop.f32.mrb[0].mxu0
    %v2081 = vadd.f32 0.0, %v2080
    %v2082 = vpop.f32.mrb[0].mxu0
    %2083 = vmatprep.mubr.f32.mxu0 0.0
    %2084 = vmatmul.mubr.f32.gmra.mrb[0].mxu0 %v1990
    %v2085 = vpop.f32.mrb[0].mxu0
    %v2086 = vadd.f32 0.0, %v2085
    %v2087 = vpop.f32.mrb[0].mxu0
    %2088 = vmatprep.mubr.f32.mxu0 0.0
    %2089 = vmatmul.mubr.f32.gmra.mrb[0].mxu0 %v1991
    %v2090 = vpop.f32.mrb[0].mxu0
    %v2091 = vadd.f32 0.0, %v2090
    %v2092 = vpop.f32.mrb[0].mxu0
    %2093 = vmatprep.mubr.f32.mxu0 0.0
    %2094 = vmatmul.mubr.f32.gmra.mrb[0].mxu0 %v1992
    %v2095 = vpop.f32.mrb[0].mxu0
    %v2096 = vadd.f32 0.0, %v2095
    %v2097 = vpop.f32.mrb[0].mxu0
    %2098 = vdwg.mxu0
    %v2099 = vadd.f32 %v1738, %v2076
    %v2100 = vadd.f32 %v1739, %v2081
    %v2101 = vadd.f32 %v1740, %v2086
    %v2102 = vadd.f32 %v1741, %v2091
    %v2103 = vadd.f32 %v1742, %v2096
    %v2104 = vld [vmem:[%s21] sm:$0x1]
    %v2106 = vlaneseq
    %v2107 = vshrl.u32 %v2106, 7
    %v2108 = vsub.s32 0, %v2107
    %v2109 = vrot.slane %v2104, %v2108
    %v2111 = vadd.f32 %v2099, %v2109
    %v2112 = vadd.f32 %v2100, %v2109
    %v2113 = vadd.f32 %v2101, %v2109
    %v2114 = vadd.f32 %v2102, %v2109
    %v2115 = vadd.f32 %v2103, %v2109
    %s2116 = scalar_lea.vmem %s6, 1
    %v2117 = vld [vmem:[%s2116] sm:$0x1]
    %s2118 = scalar_lea.vmem %s7, 1
    %v2119 = vld [vmem:[%s2118] sm:$0x1]
    %v2120 = vsel %vm240, %v2111, 0.0
    %2121 = vadd.xlane.f32.xlu0 %v2120
    %v2122 = vpop.xlane.xlu0 %2121
    %v2123 = vsel %vm240, %v2112, 0.0
    %2124 = vadd.xlane.f32.xlu0 %v2123
    %v2125 = vpop.xlane.xlu0 %2124
    %v2126 = vsel %vm240, %v2113, 0.0
    %2127 = vadd.xlane.f32.xlu0 %v2126
    %v2128 = vpop.xlane.xlu0 %2127
    %v2129 = vsel %vm240, %v2114, 0.0
    %2130 = vadd.xlane.f32.xlu0 %v2129
    %v2131 = vpop.xlane.xlu0 %2130
    %v2132 = vsel %vm253, %v2115, 0.0
    %2133 = vadd.xlane.f32.xlu0 %v2132
    %v2134 = vpop.xlane.xlu0 %2133
    %v2135 = vmul.f32 %v2122, %v257
    %v2136 = vmul.f32 %v2125, %v257
    %v2137 = vmul.f32 %v2128, %v257
    %v2138 = vmul.f32 %v2131, %v257
    %v2139 = vmul.f32 %v2134, %v257
    %v2140 = vsub.f32 %v2111, %v2135
    %v2141 = vsub.f32 %v2112, %v2136
    %v2142 = vsub.f32 %v2113, %v2137
    %v2143 = vsub.f32 %v2114, %v2138
    %v2144 = vsub.f32 %v2115, %v2139
    %v2145 = vmul.f32 %v2140, %v2140
    %v2146 = vmul.f32 %v2141, %v2141
    %v2147 = vmul.f32 %v2142, %v2142
    %v2148 = vmul.f32 %v2143, %v2143
    %v2149 = vmul.f32 %v2144, %v2144
    %v2150 = vsel %vm240, %v2145, 0.0
    %2151 = vadd.xlane.f32.xlu0 %v2150
    %v2152 = vpop.xlane.xlu0 %2151
    %v2153 = vsel %vm240, %v2146, 0.0
    %2154 = vadd.xlane.f32.xlu0 %v2153
    %v2155 = vpop.xlane.xlu0 %2154
    %v2156 = vsel %vm240, %v2147, 0.0
    %2157 = vadd.xlane.f32.xlu0 %v2156
    %v2158 = vpop.xlane.xlu0 %2157
    %v2159 = vsel %vm240, %v2148, 0.0
    %2160 = vadd.xlane.f32.xlu0 %v2159
    %v2161 = vpop.xlane.xlu0 %2160
    %v2162 = vsel %vm253, %v2149, 0.0
    %2163 = vadd.xlane.f32.xlu0 %v2162
    %v2164 = vpop.xlane.xlu0 %2163
    %v2165 = vmul.f32 %v2152, %v257
    %v2166 = vmul.f32 %v2155, %v257
    %v2167 = vmul.f32 %v2158, %v257
    %v2168 = vmul.f32 %v2161, %v257
    %v2169 = vmul.f32 %v2164, %v257
    %v2170 = vadd.f32 %v2165, 1e-06
    %v2171 = vadd.f32 %v2166, 1e-06
    %v2172 = vadd.f32 %v2167, 1e-06
    %v2173 = vadd.f32 %v2168, 1e-06
    %v2174 = vadd.f32 %v2169, 1e-06
    %v2175 = vrsqrt.pop %v2170
    %v2176 = vrsqrt.pop %v2171
    %v2177 = vrsqrt.pop %v2172
    %v2178 = vrsqrt.pop %v2173
    %v2179 = vrsqrt.pop %v2174
    %v2180 = vmul.f32 %v2140, %v2175
    %v2181 = vmul.f32 %v2141, %v2176
    %v2182 = vmul.f32 %v2142, %v2177
    %v2183 = vmul.f32 %v2143, %v2178
    %v2184 = vmul.f32 %v2144, %v2179
    %v2186 = vlaneseq
    %v2187 = vshrl.u32 %v2186, 7
    %v2188 = vsub.s32 0, %v2187
    %v2189 = vrot.slane %v2117, %v2188
    %v2191 = vmul.f32 %v2180, %v2189
    %v2192 = vmul.f32 %v2181, %v2189
    %v2193 = vmul.f32 %v2182, %v2189
    %v2194 = vmul.f32 %v2183, %v2189
    %v2195 = vmul.f32 %v2184, %v2189
    %v2197 = vlaneseq
    %v2198 = vshrl.u32 %v2197, 7
    %v2199 = vsub.s32 0, %v2198
    %v2200 = vrot.slane %v2119, %v2199
    %v2202 = vadd.f32 %v2191, %v2200
    %v2203 = vadd.f32 %v2192, %v2200
    %v2204 = vadd.f32 %v2193, %v2200
    %v2205 = vadd.f32 %v2194, %v2200
    %v2206 = vadd.f32 %v2195, %v2200
    %s2207 = scalar_lea.vmem %s8, 32
    %v2208 = vld [vmem:[%s2207] sm:$0xff]
    %v2209 = vld [vmem:[%s2207 + $0x8] sm:$0xff]
    %v2210 = vld [vmem:[%s2207 + $0x10] sm:$0xff]
    %v2211 = vld [vmem:[%s2207 + $0x18] sm:$0xff]
    %s2212 = scalar_lea.vmem %s9, 1
    %v2213 = vld [vmem:[%s2212] sm:$0x1]
    %v2215 = vlaneseq
    %v2216 = vshrl.u32 %v2215, 7
    %v2217 = vsub.s32 0, %v2216
    %v2218 = vrot.slane %v2213, %v2217
    %v2221 = vsel %vm240, %v2202, 0
    %v2224 = vsel %vm240, %v2203, 0
    %v2227 = vsel %vm240, %v2204, 0
    %v2230 = vsel %vm240, %v2205, 0
    %v2233 = vsel %vm240, %v2206, 0
    %2235 = vmatprep.subr.mxu0 0.0
    %2236 = vmatpush1.msra.mxu0 %v2208
    %2237 = vmatprep.subr.mxu0 0.0
    %2238 = vmatpush1.msra.mxu0 %v2209
    %2239 = vmatprep.subr.mxu0 0.0
    %2240 = vmatpush1.msra.mxu0 %v2210
    %2241 = vmatprep.subr.mxu0 0.0
    %2242 = vmatpush1.msra.mxu0 %v2211
    %2243 = vmatprep.subr.mxu0 0.0
    %2244 = vmatpush1.msra.mxu0 0.0
    %2245 = vmatprep.subr.mxu0 0.0
    %2246 = vmatpush1.msra.mxu0 0.0
    %2247 = vmatprep.subr.mxu0 0.0
    %2248 = vmatpush1.msra.mxu0 0.0
    %2249 = vmatprep.subr.mxu0 0.0
    %2250 = vmatpush1.msra.mxu0 0.0
    %2251 = vmatprep.subr.mxu0 0.0
    %2252 = vmatpush1.msra.mxu0 0.0
    %2253 = vmatprep.subr.mxu0 0.0
    %2254 = vmatpush1.msra.mxu0 0.0
    %2255 = vmatprep.subr.mxu0 0.0
    %2256 = vmatpush1.msra.mxu0 0.0
    %2257 = vmatprep.subr.mxu0 0.0
    %2258 = vmatpush1.msra.mxu0 0.0
    %2259 = vmatprep.subr.mxu0 0.0
    %2260 = vmatpush1.msra.mxu0 0.0
    %2261 = vmatprep.subr.mxu0 0.0
    %2262 = vmatpush1.msra.mxu0 0.0
    %2263 = vmatprep.subr.mxu0 0.0
    %2264 = vmatpush1.msra.mxu0 0.0
    %2265 = vmatprep.subr.mxu0 0.0
    %2266 = vmatpush1.msra.mxu0 0.0
    %2267 = vmatprep.subr.mxu0 0.0
    %2268 = vmatpush1.msra.mxu0 0.0
    %2269 = vmatprep.subr.mxu0 0.0
    %2270 = vmatpush1.msra.mxu0 0.0
    %2271 = vmatprep.subr.mxu0 0.0
    %2272 = vmatpush1.msra.mxu0 0.0
    %2273 = vmatprep.subr.mxu0 0.0
    %2274 = vmatpush1.msra.mxu0 0.0
    %2275 = vmatprep.subr.mxu0 0.0
    %2276 = vmatpush1.msra.mxu0 0.0
    %2277 = vmatprep.subr.mxu0 0.0
    %2278 = vmatpush1.msra.mxu0 0.0
    %2279 = vmatprep.subr.mxu0 0.0
    %2280 = vmatpush1.msra.mxu0 0.0
    %2281 = vmatprep.subr.mxu0 0.0
    %2282 = vmatpush1.msra.mxu0 0.0
    %2283 = vmatprep.subr.mxu0 0.0
    %2284 = vmatpush1.msra.mxu0 0.0
    %2285 = vmatprep.subr.mxu0 0.0
    %2286 = vmatpush1.msra.mxu0 0.0
    %2287 = vmatprep.subr.mxu0 0.0
    %2288 = vmatpush1.msra.mxu0 0.0
    %2289 = vmatprep.subr.mxu0 0.0
    %2290 = vmatpush1.msra.mxu0 0.0
    %2291 = vmatprep.subr.mxu0 0.0
    %2292 = vmatpush1.msra.mxu0 0.0
    %2293 = vmatprep.subr.mxu0 0.0
    %2294 = vmatpush1.msra.mxu0 0.0
    %2295 = vmatprep.subr.mxu0 0.0
    %2296 = vmatpush1.msra.mxu0 0.0
    %2297 = vmatprep.subr.mxu0 0.0
    %2298 = vmatpush1.msra.mxu0 0.0
    %2299 = vmatprep.mubr.f32.mxu0 0.0
    %2300 = vmatmul.mubr.f32.gmra.mrb[0].mxu0 %v2221
    %v2301 = vpop.f32.mrb[0].mxu0
    %v2302 = vadd.f32 %v2218, %v2301
    %v2303 = vpop.f32.mrb[0].mxu0
    %2304 = vmatprep.mubr.f32.mxu0 0.0
    %2305 = vmatmul.mubr.f32.gmra.mrb[0].mxu0 %v2224
    %v2306 = vpop.f32.mrb[0].mxu0
    %v2307 = vadd.f32 %v2218, %v2306
    %v2308 = vpop.f32.mrb[0].mxu0
    %2309 = vmatprep.mubr.f32.mxu0 0.0
    %2310 = vmatmul.mubr.f32.gmra.mrb[0].mxu0 %v2227
    %v2311 = vpop.f32.mrb[0].mxu0
    %v2312 = vadd.f32 %v2218, %v2311
    %v2313 = vpop.f32.mrb[0].mxu0
    %2314 = vmatprep.mubr.f32.mxu0 0.0
    %2315 = vmatmul.mubr.f32.gmra.mrb[0].mxu0 %v2230
    %v2316 = vpop.f32.mrb[0].mxu0
    %v2317 = vadd.f32 %v2218, %v2316
    %v2318 = vpop.f32.mrb[0].mxu0
    %2319 = vmatprep.mubr.f32.mxu0 0.0
    %2320 = vmatmul.mubr.f32.gmra.mrb[0].mxu0 %v2233
    %v2321 = vpop.f32.mrb[0].mxu0
    %v2322 = vadd.f32 %v2218, %v2321
    %v2323 = vpop.f32.mrb[0].mxu0
    %2324 = vdwg.mxu0
    %s2325 = scalar_lea.vmem %s10, 32
    %v2326 = vld [vmem:[%s2325] sm:$0xff]
    %v2327 = vld [vmem:[%s2325 + $0x8] sm:$0xff]
    %v2328 = vld [vmem:[%s2325 + $0x10] sm:$0xff]
    %v2329 = vld [vmem:[%s2325 + $0x18] sm:$0xff]
    %s2330 = scalar_lea.vmem %s11, 1
    %v2331 = vld [vmem:[%s2330] sm:$0x1]
    %v2333 = vlaneseq
    %v2334 = vshrl.u32 %v2333, 7
    %v2335 = vsub.s32 0, %v2334
    %v2336 = vrot.slane %v2331, %v2335
    %2338 = vmatprep.subr.mxu0 0.0
    %2339 = vmatpush1.msra.mxu0 %v2326
    %2340 = vmatprep.subr.mxu0 0.0
    %2341 = vmatpush1.msra.mxu0 %v2327
    %2342 = vmatprep.subr.mxu0 0.0
    %2343 = vmatpush1.msra.mxu0 %v2328
    %2344 = vmatprep.subr.mxu0 0.0
    %2345 = vmatpush1.msra.mxu0 %v2329
    %2346 = vmatprep.subr.mxu0 0.0
    %2347 = vmatpush1.msra.mxu0 0.0
    %2348 = vmatprep.subr.mxu0 0.0
    %2349 = vmatpush1.msra.mxu0 0.0
    %2350 = vmatprep.subr.mxu0 0.0
    %2351 = vmatpush1.msra.mxu0 0.0
    %2352 = vmatprep.subr.mxu0 0.0
    %2353 = vmatpush1.msra.mxu0 0.0
    %2354 = vmatprep.subr.mxu0 0.0
    %2355 = vmatpush1.msra.mxu0 0.0
    %2356 = vmatprep.subr.mxu0 0.0
    %2357 = vmatpush1.msra.mxu0 0.0
    %2358 = vmatprep.subr.mxu0 0.0
    %2359 = vmatpush1.msra.mxu0 0.0
    %2360 = vmatprep.subr.mxu0 0.0
    %2361 = vmatpush1.msra.mxu0 0.0
    %2362 = vmatprep.subr.mxu0 0.0
    %2363 = vmatpush1.msra.mxu0 0.0
    %2364 = vmatprep.subr.mxu0 0.0
    %2365 = vmatpush1.msra.mxu0 0.0
    %2366 = vmatprep.subr.mxu0 0.0
    %2367 = vmatpush1.msra.mxu0 0.0
    %2368 = vmatprep.subr.mxu0 0.0
    %2369 = vmatpush1.msra.mxu0 0.0
    %2370 = vmatprep.subr.mxu0 0.0
    %2371 = vmatpush1.msra.mxu0 0.0
    %2372 = vmatprep.subr.mxu0 0.0
    %2373 = vmatpush1.msra.mxu0 0.0
    %2374 = vmatprep.subr.mxu0 0.0
    %2375 = vmatpush1.msra.mxu0 0.0
    %2376 = vmatprep.subr.mxu0 0.0
    %2377 = vmatpush1.msra.mxu0 0.0
    %2378 = vmatprep.subr.mxu0 0.0
    %2379 = vmatpush1.msra.mxu0 0.0
    %2380 = vmatprep.subr.mxu0 0.0
    %2381 = vmatpush1.msra.mxu0 0.0
    %2382 = vmatprep.subr.mxu0 0.0
    %2383 = vmatpush1.msra.mxu0 0.0
    %2384 = vmatprep.subr.mxu0 0.0
    %2385 = vmatpush1.msra.mxu0 0.0
    %2386 = vmatprep.subr.mxu0 0.0
    %2387 = vmatpush1.msra.mxu0 0.0
    %2388 = vmatprep.subr.mxu0 0.0
    %2389 = vmatpush1.msra.mxu0 0.0
    %2390 = vmatprep.subr.mxu0 0.0
    %2391 = vmatpush1.msra.mxu0 0.0
    %2392 = vmatprep.subr.mxu0 0.0
    %2393 = vmatpush1.msra.mxu0 0.0
    %2394 = vmatprep.subr.mxu0 0.0
    %2395 = vmatpush1.msra.mxu0 0.0
    %2396 = vmatprep.subr.mxu0 0.0
    %2397 = vmatpush1.msra.mxu0 0.0
    %2398 = vmatprep.subr.mxu0 0.0
    %2399 = vmatpush1.msra.mxu0 0.0
    %2400 = vmatprep.subr.mxu0 0.0
    %2401 = vmatpush1.msra.mxu0 0.0
    %2402 = vmatprep.mubr.f32.mxu0 0.0
    %2403 = vmatmul.mubr.f32.gmra.mrb[0].mxu0 %v2221
    %v2404 = vpop.f32.mrb[0].mxu0
    %v2405 = vadd.f32 %v2336, %v2404
    %v2406 = vpop.f32.mrb[0].mxu0
    %2407 = vmatprep.mubr.f32.mxu0 0.0
    %2408 = vmatmul.mubr.f32.gmra.mrb[0].mxu0 %v2224
    %v2409 = vpop.f32.mrb[0].mxu0
    %v2410 = vadd.f32 %v2336, %v2409
    %v2411 = vpop.f32.mrb[0].mxu0
    %2412 = vmatprep.mubr.f32.mxu0 0.0
    %2413 = vmatmul.mubr.f32.gmra.mrb[0].mxu0 %v2227
    %v2414 = vpop.f32.mrb[0].mxu0
    %v2415 = vadd.f32 %v2336, %v2414
    %v2416 = vpop.f32.mrb[0].mxu0
    %2417 = vmatprep.mubr.f32.mxu0 0.0
    %2418 = vmatmul.mubr.f32.gmra.mrb[0].mxu0 %v2230
    %v2419 = vpop.f32.mrb[0].mxu0
    %v2420 = vadd.f32 %v2336, %v2419
    %v2421 = vpop.f32.mrb[0].mxu0
    %2422 = vmatprep.mubr.f32.mxu0 0.0
    %2423 = vmatmul.mubr.f32.gmra.mrb[0].mxu0 %v2233
    %v2424 = vpop.f32.mrb[0].mxu0
    %v2425 = vadd.f32 %v2336, %v2424
    %v2426 = vpop.f32.mrb[0].mxu0
    %2427 = vdwg.mxu0
    %s2428 = scalar_lea.vmem %s12, 32
    %v2429 = vld [vmem:[%s2428] sm:$0xff]
    %v2430 = vld [vmem:[%s2428 + $0x8] sm:$0xff]
    %v2431 = vld [vmem:[%s2428 + $0x10] sm:$0xff]
    %v2432 = vld [vmem:[%s2428 + $0x18] sm:$0xff]
    %s2433 = scalar_lea.vmem %s13, 1
    %v2434 = vld [vmem:[%s2433] sm:$0x1]
    %v2436 = vlaneseq
    %v2437 = vshrl.u32 %v2436, 7
    %v2438 = vsub.s32 0, %v2437
    %v2439 = vrot.slane %v2434, %v2438
    %2441 = vmatprep.subr.mxu0 0.0
    %2442 = vmatpush1.msra.mxu0 %v2429
    %2443 = vmatprep.subr.mxu0 0.0
    %2444 = vmatpush1.msra.mxu0 %v2430
    %2445 = vmatprep.subr.mxu0 0.0
    %2446 = vmatpush1.msra.mxu0 %v2431
    %2447 = vmatprep.subr.mxu0 0.0
    %2448 = vmatpush1.msra.mxu0 %v2432
    %2449 = vmatprep.subr.mxu0 0.0
    %2450 = vmatpush1.msra.mxu0 0.0
    %2451 = vmatprep.subr.mxu0 0.0
    %2452 = vmatpush1.msra.mxu0 0.0
    %2453 = vmatprep.subr.mxu0 0.0
    %2454 = vmatpush1.msra.mxu0 0.0
    %2455 = vmatprep.subr.mxu0 0.0
    %2456 = vmatpush1.msra.mxu0 0.0
    %2457 = vmatprep.subr.mxu0 0.0
    %2458 = vmatpush1.msra.mxu0 0.0
    %2459 = vmatprep.subr.mxu0 0.0
    %2460 = vmatpush1.msra.mxu0 0.0
    %2461 = vmatprep.subr.mxu0 0.0
    %2462 = vmatpush1.msra.mxu0 0.0
    %2463 = vmatprep.subr.mxu0 0.0
    %2464 = vmatpush1.msra.mxu0 0.0
    %2465 = vmatprep.subr.mxu0 0.0
    %2466 = vmatpush1.msra.mxu0 0.0
    %2467 = vmatprep.subr.mxu0 0.0
    %2468 = vmatpush1.msra.mxu0 0.0
    %2469 = vmatprep.subr.mxu0 0.0
    %2470 = vmatpush1.msra.mxu0 0.0
    %2471 = vmatprep.subr.mxu0 0.0
    %2472 = vmatpush1.msra.mxu0 0.0
    %2473 = vmatprep.subr.mxu0 0.0
    %2474 = vmatpush1.msra.mxu0 0.0
    %2475 = vmatprep.subr.mxu0 0.0
    %2476 = vmatpush1.msra.mxu0 0.0
    %2477 = vmatprep.subr.mxu0 0.0
    %2478 = vmatpush1.msra.mxu0 0.0
    %2479 = vmatprep.subr.mxu0 0.0
    %2480 = vmatpush1.msra.mxu0 0.0
    %2481 = vmatprep.subr.mxu0 0.0
    %2482 = vmatpush1.msra.mxu0 0.0
    %2483 = vmatprep.subr.mxu0 0.0
    %2484 = vmatpush1.msra.mxu0 0.0
    %2485 = vmatprep.subr.mxu0 0.0
    %2486 = vmatpush1.msra.mxu0 0.0
    %2487 = vmatprep.subr.mxu0 0.0
    %2488 = vmatpush1.msra.mxu0 0.0
    %2489 = vmatprep.subr.mxu0 0.0
    %2490 = vmatpush1.msra.mxu0 0.0
    %2491 = vmatprep.subr.mxu0 0.0
    %2492 = vmatpush1.msra.mxu0 0.0
    %2493 = vmatprep.subr.mxu0 0.0
    %2494 = vmatpush1.msra.mxu0 0.0
    %2495 = vmatprep.subr.mxu0 0.0
    %2496 = vmatpush1.msra.mxu0 0.0
    %2497 = vmatprep.subr.mxu0 0.0
    %2498 = vmatpush1.msra.mxu0 0.0
    %2499 = vmatprep.subr.mxu0 0.0
    %2500 = vmatpush1.msra.mxu0 0.0
    %2501 = vmatprep.subr.mxu0 0.0
    %2502 = vmatpush1.msra.mxu0 0.0
    %2503 = vmatprep.subr.mxu0 0.0
    %2504 = vmatpush1.msra.mxu0 0.0
    %2505 = vmatprep.mubr.f32.mxu0 0.0
    %2506 = vmatmul.mubr.f32.gmra.mrb[0].mxu0 %v2221
    %v2507 = vpop.f32.mrb[0].mxu0
    %v2508 = vadd.f32 %v2439, %v2507
    %v2509 = vpop.f32.mrb[0].mxu0
    %2510 = vmatprep.mubr.f32.mxu0 0.0
    %2511 = vmatmul.mubr.f32.gmra.mrb[0].mxu0 %v2224
    %v2512 = vpop.f32.mrb[0].mxu0
    %v2513 = vadd.f32 %v2439, %v2512
    %v2514 = vpop.f32.mrb[0].mxu0
    %2515 = vmatprep.mubr.f32.mxu0 0.0
    %2516 = vmatmul.mubr.f32.gmra.mrb[0].mxu0 %v2227
    %v2517 = vpop.f32.mrb[0].mxu0
    %v2518 = vadd.f32 %v2439, %v2517
    %v2519 = vpop.f32.mrb[0].mxu0
    %2520 = vmatprep.mubr.f32.mxu0 0.0
    %2521 = vmatmul.mubr.f32.gmra.mrb[0].mxu0 %v2230
    %v2522 = vpop.f32.mrb[0].mxu0
    %v2523 = vadd.f32 %v2439, %v2522
    %v2524 = vpop.f32.mrb[0].mxu0
    %2525 = vmatprep.mubr.f32.mxu0 0.0
    %2526 = vmatmul.mubr.f32.gmra.mrb[0].mxu0 %v2233
    %v2527 = vpop.f32.mrb[0].mxu0
    %v2528 = vadd.f32 %v2439, %v2527
    %v2529 = vpop.f32.mrb[0].mxu0
    %2530 = vdwg.mxu0
    %v2534 = vrot.slane %v2302, 7
    %v2535 = vrot.slane %v2307, 7
    %v2536 = vsel %vm213, %v2534, %v2535
    %v2537 = vrot.slane %v2312, 7
    %v2538 = vsel %vm213, %v2535, %v2537
    %v2542 = vrot.slane %v2302, 6
    %v2543 = vrot.slane %v2307, 6
    %v2544 = vsel %vm228, %v2542, %v2543
    %v2545 = vrot.slane %v2312, 6
    %v2546 = vsel %vm228, %v2543, %v2545
    %v2550 = vrot.slane %v2302, 5
    %v2551 = vrot.slane %v2307, 5
    %v2552 = vsel %vm667, %v2550, %v2551
    %v2553 = vrot.slane %v2312, 5
    %v2554 = vsel %vm667, %v2551, %v2553
    %v2558 = vsel %vm213, %v2312, %v2534
    %v2559 = vsel %vm228, %v2538, %v2542
    %v2560 = vsel %vm667, %v2546, %v2550
    %v2561 = vmul.f32 %v2302, %v87
    %v2562 = vmul.f32 %v2307, %v88
    %v2563 = vmul.f32 %v2558, %v89
    %v2564 = vmul.f32 %v2536, %v90
    %v2565 = vmul.f32 %v2559, %v91
    %v2566 = vmul.f32 %v2544, %v92
    %v2567 = vmul.f32 %v2560, %v93
    %v2568 = vmul.f32 %v2552, %v94
    %v2569 = vmul.f32 %v2554, %v95
    %v2571 = vsel %vm240, %v2561, 0
    %v2574 = vsel %vm240, %v2562, 0
    %v2577 = vsel %vm240, %v2563, 0
    %v2580 = vsel %vm240, %v2564, 0
    %v2583 = vsel %vm240, %v2565, 0
    %v2586 = vsel %vm240, %v2566, 0
    %v2589 = vsel %vm240, %v2567, 0
    %v2592 = vsel %vm240, %v2568, 0
    %v2595 = vsel %vm240, %v2569, 0
    %v2598 = vsel %vm240, %v2405, 0
    %v2601 = vsel %vm240, %v2410, 0
    %v2604 = vsel %vm240, %v2415, 0
    %2606 = vmatprep.subr.mxu0 0.0
    %2607 = vmatpush1.xpose.msra.mxu0 %v2598
    %2608 = vmatprep.subr.mxu0 0.0
    %2609 = vmatpush1.xpose.msra.mxu0 %v2601
    %2610 = vmatprep.subr.mxu0 0.0
    %2611 = vmatpush1.xpose.msra.mxu0 %v2604
    %2612 = vmatprep.subr.mxu0 0.0
    %2613 = vmatpush1.xpose.msra.mxu0 0.0
    %2614 = vmatprep.subr.mxu0 0.0
    %2615 = vmatpush1.xpose.msra.mxu0 0.0
    %2616 = vmatprep.subr.mxu0 0.0
    %2617 = vmatpush1.xpose.msra.mxu0 0.0
    %2618 = vmatprep.subr.mxu0 0.0
    %2619 = vmatpush1.xpose.msra.mxu0 0.0
    %2620 = vmatprep.subr.mxu0 0.0
    %2621 = vmatpush1.xpose.msra.mxu0 0.0
    %2622 = vmatprep.subr.mxu0 0.0
    %2623 = vmatpush1.xpose.msra.mxu0 0.0
    %2624 = vmatprep.subr.mxu0 0.0
    %2625 = vmatpush1.xpose.msra.mxu0 0.0
    %2626 = vmatprep.subr.mxu0 0.0
    %2627 = vmatpush1.xpose.msra.mxu0 0.0
    %2628 = vmatprep.subr.mxu0 0.0
    %2629 = vmatpush1.xpose.msra.mxu0 0.0
    %2630 = vmatprep.subr.mxu0 0.0
    %2631 = vmatpush1.xpose.msra.mxu0 0.0
    %2632 = vmatprep.subr.mxu0 0.0
    %2633 = vmatpush1.xpose.msra.mxu0 0.0
    %2634 = vmatprep.subr.mxu0 0.0
    %2635 = vmatpush1.xpose.msra.mxu0 0.0
    %2636 = vmatprep.subr.mxu0 0.0
    %2637 = vmatpush1.xpose.msra.mxu0 0.0
    %2638 = vmatprep.subr.mxu0 0.0
    %2639 = vmatpush1.xpose.msra.mxu0 0.0
    %2640 = vmatprep.subr.mxu0 0.0
    %2641 = vmatpush1.xpose.msra.mxu0 0.0
    %2642 = vmatprep.subr.mxu0 0.0
    %2643 = vmatpush1.xpose.msra.mxu0 0.0
    %2644 = vmatprep.subr.mxu0 0.0
    %2645 = vmatpush1.xpose.msra.mxu0 0.0
    %2646 = vmatprep.subr.mxu0 0.0
    %2647 = vmatpush1.xpose.msra.mxu0 0.0
    %2648 = vmatprep.subr.mxu0 0.0
    %2649 = vmatpush1.xpose.msra.mxu0 0.0
    %2650 = vmatprep.subr.mxu0 0.0
    %2651 = vmatpush1.xpose.msra.mxu0 0.0
    %2652 = vmatprep.subr.mxu0 0.0
    %2653 = vmatpush1.xpose.msra.mxu0 0.0
    %2654 = vmatprep.subr.mxu0 0.0
    %2655 = vmatpush1.xpose.msra.mxu0 0.0
    %2656 = vmatprep.subr.mxu0 0.0
    %2657 = vmatpush1.xpose.msra.mxu0 0.0
    %2658 = vmatprep.subr.mxu0 0.0
    %2659 = vmatpush1.xpose.msra.mxu0 0.0
    %2660 = vmatprep.subr.mxu0 0.0
    %2661 = vmatpush1.xpose.msra.mxu0 0.0
    %2662 = vmatprep.subr.mxu0 0.0
    %2663 = vmatpush1.xpose.msra.mxu0 0.0
    %2664 = vmatprep.subr.mxu0 0.0
    %2665 = vmatpush1.xpose.msra.mxu0 0.0
    %2666 = vmatprep.subr.mxu0 0.0
    %2667 = vmatpush1.xpose.msra.mxu0 0.0
    %2668 = vmatprep.subr.mxu0 0.0
    %2669 = vmatpush1.xpose.msra.mxu0 0.0
    %2670 = vmatprep.mubr.f32.mxu0 0.0
    %2671 = vmatmul.mubr.f32.gmra.mrb[0].mxu0 %v2571
    %v2672 = vpop.f32.mrb[0].mxu0
    %v2673 = vadd.f32 0.0, %v2672
    %v2674 = vpop.f32.mrb[0].mxu0
    %2675 = vmatprep.mubr.f32.mxu0 0.0
    %2676 = vmatmul.mubr.f32.gmra.mrb[0].mxu0 %v2574
    %v2677 = vpop.f32.mrb[0].mxu0
    %v2678 = vadd.f32 0.0, %v2677
    %v2679 = vpop.f32.mrb[0].mxu0
    %2680 = vmatprep.mubr.f32.mxu0 0.0
    %2681 = vmatmul.mubr.f32.gmra.mrb[0].mxu0 %v2577
    %v2682 = vpop.f32.mrb[0].mxu0
    %v2683 = vadd.f32 0.0, %v2682
    %v2684 = vpop.f32.mrb[0].mxu0
    %2685 = vmatprep.mubr.f32.mxu0 0.0
    %2686 = vmatmul.mubr.f32.gmra.mrb[0].mxu0 %v2580
    %v2687 = vpop.f32.mrb[0].mxu0
    %v2688 = vadd.f32 0.0, %v2687
    %v2689 = vpop.f32.mrb[0].mxu0
    %2690 = vmatprep.mubr.f32.mxu0 0.0
    %2691 = vmatmul.mubr.f32.gmra.mrb[0].mxu0 %v2583
    %v2692 = vpop.f32.mrb[0].mxu0
    %v2693 = vadd.f32 0.0, %v2692
    %v2694 = vpop.f32.mrb[0].mxu0
    %2695 = vmatprep.mubr.f32.mxu0 0.0
    %2696 = vmatmul.mubr.f32.gmra.mrb[0].mxu0 %v2586
    %v2697 = vpop.f32.mrb[0].mxu0
    %v2698 = vadd.f32 0.0, %v2697
    %v2699 = vpop.f32.mrb[0].mxu0
    %2700 = vmatprep.mubr.f32.mxu0 0.0
    %2701 = vmatmul.mubr.f32.gmra.mrb[0].mxu0 %v2589
    %v2702 = vpop.f32.mrb[0].mxu0
    %v2703 = vadd.f32 0.0, %v2702
    %v2704 = vpop.f32.mrb[0].mxu0
    %2705 = vmatprep.mubr.f32.mxu0 0.0
    %2706 = vmatmul.mubr.f32.gmra.mrb[0].mxu0 %v2592
    %v2707 = vpop.f32.mrb[0].mxu0
    %v2708 = vadd.f32 0.0, %v2707
    %v2709 = vpop.f32.mrb[0].mxu0
    %2710 = vmatprep.mubr.f32.mxu0 0.0
    %2711 = vmatmul.mubr.f32.gmra.mrb[0].mxu0 %v2595
    %v2712 = vpop.f32.mrb[0].mxu0
    %v2713 = vadd.f32 0.0, %v2712
    %v2714 = vpop.f32.mrb[0].mxu0
    %2715 = vdwg.mxu0
    %v2716 = vsel %vm834, %v2673, -inf
    %2717 = vmax.xlane.f32.xlu0 %v2716
    %v2718 = vpop.xlane.xlu0 %2717
    %v2719 = vsel %vm834, %v2678, -inf
    %2720 = vmax.xlane.f32.xlu0 %v2719
    %v2721 = vpop.xlane.xlu0 %2720
    %v2722 = vsel %vm834, %v2683, -inf
    %2723 = vmax.xlane.f32.xlu0 %v2722
    %v2724 = vpop.xlane.xlu0 %2723
    %v2725 = vsel %vm834, %v2688, -inf
    %2726 = vmax.xlane.f32.xlu0 %v2725
    %v2727 = vpop.xlane.xlu0 %2726
    %v2728 = vsel %vm834, %v2693, -inf
    %2729 = vmax.xlane.f32.xlu0 %v2728
    %v2730 = vpop.xlane.xlu0 %2729
    %v2731 = vsel %vm834, %v2698, -inf
    %2732 = vmax.xlane.f32.xlu0 %v2731
    %v2733 = vpop.xlane.xlu0 %2732
    %v2734 = vsel %vm834, %v2703, -inf
    %2735 = vmax.xlane.f32.xlu0 %v2734
    %v2736 = vpop.xlane.xlu0 %2735
    %v2737 = vsel %vm834, %v2708, -inf
    %2738 = vmax.xlane.f32.xlu0 %v2737
    %v2739 = vpop.xlane.xlu0 %2738
    %v2740 = vsel %vm859, %v2713, -inf
    %2741 = vmax.xlane.f32.xlu0 %v2740
    %v2742 = vpop.xlane.xlu0 %2741
    %v2743 = vsub.f32 %v2673, %v2718
    %v2744 = vsub.f32 %v2678, %v2721
    %v2745 = vsub.f32 %v2683, %v2724
    %v2746 = vsub.f32 %v2688, %v2727
    %v2747 = vsub.f32 %v2693, %v2730
    %v2748 = vsub.f32 %v2698, %v2733
    %v2749 = vsub.f32 %v2703, %v2736
    %v2750 = vsub.f32 %v2708, %v2739
    %v2751 = vsub.f32 %v2713, %v2742
    %v2752 = vmul.f32 %v2743, 1.442695
    %v2753 = vpow.pop %v2752
    %v2754 = vmul.f32 %v2744, 1.442695
    %v2755 = vpow.pop %v2754
    %v2756 = vmul.f32 %v2745, 1.442695
    %v2757 = vpow.pop %v2756
    %v2758 = vmul.f32 %v2746, 1.442695
    %v2759 = vpow.pop %v2758
    %v2760 = vmul.f32 %v2747, 1.442695
    %v2761 = vpow.pop %v2760
    %v2762 = vmul.f32 %v2748, 1.442695
    %v2763 = vpow.pop %v2762
    %v2764 = vmul.f32 %v2749, 1.442695
    %v2765 = vpow.pop %v2764
    %v2766 = vmul.f32 %v2750, 1.442695
    %v2767 = vpow.pop %v2766
    %v2768 = vmul.f32 %v2751, 1.442695
    %v2769 = vpow.pop %v2768
    %v2770 = vsel %vm834, %v2753, 0.0
    %2771 = vadd.xlane.f32.xlu0 %v2770
    %v2772 = vpop.xlane.xlu0 %2771
    %v2773 = vsel %vm834, %v2755, 0.0
    %2774 = vadd.xlane.f32.xlu0 %v2773
    %v2775 = vpop.xlane.xlu0 %2774
    %v2776 = vsel %vm834, %v2757, 0.0
    %2777 = vadd.xlane.f32.xlu0 %v2776
    %v2778 = vpop.xlane.xlu0 %2777
    %v2779 = vsel %vm834, %v2759, 0.0
    %2780 = vadd.xlane.f32.xlu0 %v2779
    %v2781 = vpop.xlane.xlu0 %2780
    %v2782 = vsel %vm834, %v2761, 0.0
    %2783 = vadd.xlane.f32.xlu0 %v2782
    %v2784 = vpop.xlane.xlu0 %2783
    %v2785 = vsel %vm834, %v2763, 0.0
    %2786 = vadd.xlane.f32.xlu0 %v2785
    %v2787 = vpop.xlane.xlu0 %2786
    %v2788 = vsel %vm834, %v2765, 0.0
    %2789 = vadd.xlane.f32.xlu0 %v2788
    %v2790 = vpop.xlane.xlu0 %2789
    %v2791 = vsel %vm834, %v2767, 0.0
    %2792 = vadd.xlane.f32.xlu0 %v2791
    %v2793 = vpop.xlane.xlu0 %2792
    %v2794 = vsel %vm859, %v2769, 0.0
    %2795 = vadd.xlane.f32.xlu0 %v2794
    %v2796 = vpop.xlane.xlu0 %2795
    %v2797 = vrcp.pop %v2772
    %v2798 = vrcp.pop %v2775
    %v2799 = vrcp.pop %v2778
    %v2800 = vrcp.pop %v2781
    %v2801 = vrcp.pop %v2784
    %v2802 = vrcp.pop %v2787
    %v2803 = vrcp.pop %v2790
    %v2804 = vrcp.pop %v2793
    %v2805 = vrcp.pop %v2796
    %v2806 = vmul.f32 %v2753, %v2797
    %v2807 = vmul.f32 %v2755, %v2798
    %v2808 = vmul.f32 %v2757, %v2799
    %v2809 = vmul.f32 %v2759, %v2800
    %v2810 = vmul.f32 %v2761, %v2801
    %v2811 = vmul.f32 %v2763, %v2802
    %v2812 = vmul.f32 %v2765, %v2803
    %v2813 = vmul.f32 %v2767, %v2804
    %v2814 = vmul.f32 %v2769, %v2805
    %v2816 = vsel %vm834, %v2806, 0
    %v2819 = vsel %vm834, %v2807, 0
    %v2822 = vsel %vm834, %v2808, 0
    %v2825 = vsel %vm834, %v2809, 0
    %v2828 = vsel %vm834, %v2810, 0
    %v2831 = vsel %vm834, %v2811, 0
    %v2834 = vsel %vm834, %v2812, 0
    %v2837 = vsel %vm834, %v2813, 0
    %v2840 = vsel %vm834, %v2814, 0
    %v2843 = vsel %vm213, %v2518, 0
    %2845 = vmatprep.subr.mxu0 0.0
    %2846 = vmatpush1.msra.mxu0 %v2508
    %2847 = vmatprep.subr.mxu0 0.0
    %2848 = vmatpush1.msra.mxu0 %v2513
    %2849 = vmatprep.subr.mxu0 0.0
    %2850 = vmatpush1.msra.mxu0 %v2843
    %2851 = vmatprep.subr.mxu0 0.0
    %2852 = vmatpush1.msra.mxu0 0.0
    %2853 = vmatprep.subr.mxu0 0.0
    %2854 = vmatpush1.msra.mxu0 0.0
    %2855 = vmatprep.subr.mxu0 0.0
    %2856 = vmatpush1.msra.mxu0 0.0
    %2857 = vmatprep.subr.mxu0 0.0
    %2858 = vmatpush1.msra.mxu0 0.0
    %2859 = vmatprep.subr.mxu0 0.0
    %2860 = vmatpush1.msra.mxu0 0.0
    %2861 = vmatprep.subr.mxu0 0.0
    %2862 = vmatpush1.msra.mxu0 0.0
    %2863 = vmatprep.subr.mxu0 0.0
    %2864 = vmatpush1.msra.mxu0 0.0
    %2865 = vmatprep.subr.mxu0 0.0
    %2866 = vmatpush1.msra.mxu0 0.0
    %2867 = vmatprep.subr.mxu0 0.0
    %2868 = vmatpush1.msra.mxu0 0.0
    %2869 = vmatprep.subr.mxu0 0.0
    %2870 = vmatpush1.msra.mxu0 0.0
    %2871 = vmatprep.subr.mxu0 0.0
    %2872 = vmatpush1.msra.mxu0 0.0
    %2873 = vmatprep.subr.mxu0 0.0
    %2874 = vmatpush1.msra.mxu0 0.0
    %2875 = vmatprep.subr.mxu0 0.0
    %2876 = vmatpush1.msra.mxu0 0.0
    %2877 = vmatprep.subr.mxu0 0.0
    %2878 = vmatpush1.msra.mxu0 0.0
    %2879 = vmatprep.subr.mxu0 0.0
    %2880 = vmatpush1.msra.mxu0 0.0
    %2881 = vmatprep.subr.mxu0 0.0
    %2882 = vmatpush1.msra.mxu0 0.0
    %2883 = vmatprep.subr.mxu0 0.0
    %2884 = vmatpush1.msra.mxu0 0.0
    %2885 = vmatprep.subr.mxu0 0.0
    %2886 = vmatpush1.msra.mxu0 0.0
    %2887 = vmatprep.subr.mxu0 0.0
    %2888 = vmatpush1.msra.mxu0 0.0
    %2889 = vmatprep.subr.mxu0 0.0
    %2890 = vmatpush1.msra.mxu0 0.0
    %2891 = vmatprep.subr.mxu0 0.0
    %2892 = vmatpush1.msra.mxu0 0.0
    %2893 = vmatprep.subr.mxu0 0.0
    %2894 = vmatpush1.msra.mxu0 0.0
    %2895 = vmatprep.subr.mxu0 0.0
    %2896 = vmatpush1.msra.mxu0 0.0
    %2897 = vmatprep.subr.mxu0 0.0
    %2898 = vmatpush1.msra.mxu0 0.0
    %2899 = vmatprep.subr.mxu0 0.0
    %2900 = vmatpush1.msra.mxu0 0.0
    %2901 = vmatprep.subr.mxu0 0.0
    %2902 = vmatpush1.msra.mxu0 0.0
    %2903 = vmatprep.subr.mxu0 0.0
    %2904 = vmatpush1.msra.mxu0 0.0
    %2905 = vmatprep.subr.mxu0 0.0
    %2906 = vmatpush1.msra.mxu0 0.0
    %2907 = vmatprep.subr.mxu0 0.0
    %2908 = vmatpush1.msra.mxu0 0.0
    %2909 = vmatprep.mubr.f32.mxu0 0.0
    %2910 = vmatmul.mubr.f32.gmra.mrb[0].mxu0 %v2816
    %v2911 = vpop.f32.mrb[0].mxu0
    %v2912 = vadd.f32 0.0, %v2911
    %v2913 = vpop.f32.mrb[0].mxu0
    %2914 = vmatprep.mubr.f32.mxu0 0.0
    %2915 = vmatmul.mubr.f32.gmra.mrb[0].mxu0 %v2819
    %v2916 = vpop.f32.mrb[0].mxu0
    %v2917 = vadd.f32 0.0, %v2916
    %v2918 = vpop.f32.mrb[0].mxu0
    %2919 = vmatprep.mubr.f32.mxu0 0.0
    %2920 = vmatmul.mubr.f32.gmra.mrb[0].mxu0 %v2822
    %v2921 = vpop.f32.mrb[0].mxu0
    %v2922 = vadd.f32 0.0, %v2921
    %v2923 = vpop.f32.mrb[0].mxu0
    %2924 = vmatprep.mubr.f32.mxu0 0.0
    %2925 = vmatmul.mubr.f32.gmra.mrb[0].mxu0 %v2825
    %v2926 = vpop.f32.mrb[0].mxu0
    %v2927 = vadd.f32 0.0, %v2926
    %v2928 = vpop.f32.mrb[0].mxu0
    %2929 = vmatprep.mubr.f32.mxu0 0.0
    %2930 = vmatmul.mubr.f32.gmra.mrb[0].mxu0 %v2828
    %v2931 = vpop.f32.mrb[0].mxu0
    %v2932 = vadd.f32 0.0, %v2931
    %v2933 = vpop.f32.mrb[0].mxu0
    %2934 = vmatprep.mubr.f32.mxu0 0.0
    %2935 = vmatmul.mubr.f32.gmra.mrb[0].mxu0 %v2831
    %v2936 = vpop.f32.mrb[0].mxu0
    %v2937 = vadd.f32 0.0, %v2936
    %v2938 = vpop.f32.mrb[0].mxu0
    %2939 = vmatprep.mubr.f32.mxu0 0.0
    %2940 = vmatmul.mubr.f32.gmra.mrb[0].mxu0 %v2834
    %v2941 = vpop.f32.mrb[0].mxu0
    %v2942 = vadd.f32 0.0, %v2941
    %v2943 = vpop.f32.mrb[0].mxu0
    %2944 = vmatprep.mubr.f32.mxu0 0.0
    %2945 = vmatmul.mubr.f32.gmra.mrb[0].mxu0 %v2837
    %v2946 = vpop.f32.mrb[0].mxu0
    %v2947 = vadd.f32 0.0, %v2946
    %v2948 = vpop.f32.mrb[0].mxu0
    %2949 = vmatprep.mubr.f32.mxu0 0.0
    %2950 = vmatmul.mubr.f32.gmra.mrb[0].mxu0 %v2840
    %v2951 = vpop.f32.mrb[0].mxu0
    %v2952 = vadd.f32 0.0, %v2951
    %v2953 = vpop.f32.mrb[0].mxu0
    %2954 = vdwg.mxu0
    %v2955 = vmul.f32 %v2912, %v87
    %v2956 = vmul.f32 %v2917, %v88
    %v2957 = vmul.f32 %v2922, %v89
    %v2958 = vmul.f32 %v2927, %v90
    %v2959 = vmul.f32 %v2932, %v91
    %v2960 = vmul.f32 %v2937, %v92
    %v2961 = vmul.f32 %v2942, %v93
    %v2962 = vmul.f32 %v2947, %v94
    %v2963 = vmul.f32 %v2952, %v95
    %v2967 = vrot.slane %v2957, 1
    %v2968 = vrot.slane %v2958, 1
    %v2969 = vsel %vm1087, %v2967, %v2968
    %v2970 = vrot.slane %v2959, 1
    %v2971 = vsel %vm1087, %v2968, %v2970
    %v2975 = vadd.f32 %v2955, %v2969
    %v2976 = vadd.f32 %v2956, %v2971
    %v2977 = vadd.f32 %v2957, %v2970
    %v2980 = vrot.slane %v2959, 2
    %v2981 = vrot.slane %v2960, 2
    %v2982 = vsel %vm1101, %v2980, %v2981
    %v2983 = vrot.slane %v2961, 2
    %v2984 = vsel %vm1101, %v2981, %v2983
    %v2988 = vadd.f32 %v2975, %v2982
    %v2989 = vadd.f32 %v2976, %v2984
    %v2990 = vadd.f32 %v2977, %v2983
    %v2993 = vrot.slane %v2961, 3
    %v2994 = vrot.slane %v2962, 3
    %v2995 = vsel %vm1115, %v2993, %v2994
    %v2996 = vrot.slane %v2963, 3
    %v2997 = vsel %vm1115, %v2994, %v2996
    %v3001 = vadd.f32 %v2988, %v2995
    %v3002 = vadd.f32 %v2989, %v2997
    %v3003 = vadd.f32 %v2990, %v2996
    %v3006 = vrot.slane %v2312, 1
    %v3007 = vrot.slane %v2317, 1
    %v3008 = vsel %vm1087, %v3006, %v3007
    %v3009 = vrot.slane %v2322, 1
    %v3010 = vsel %vm1087, %v3007, %v3009
    %v3014 = vrot.slane %v2317, 7
    %v3015 = vsel %vm213, %v2537, %v3014
    %v3016 = vrot.slane %v2322, 7
    %v3017 = vsel %vm213, %v3014, %v3016
    %v3021 = vrot.slane %v2317, 6
    %v3022 = vsel %vm228, %v2545, %v3021
    %v3023 = vrot.slane %v2322, 6
    %v3024 = vsel %vm228, %v3021, %v3023
    %v3028 = vsel %vm213, %v3009, %v2312
    %v3029 = vsel %vm228, %v2322, %v2537
    %v3030 = vsel %vm667, %v3017, %v2545
    %v3031 = vmul.f32 %v3008, %v87
    %v3032 = vmul.f32 %v3010, %v88
    %v3033 = vmul.f32 %v3028, %v89
    %v3034 = vmul.f32 %v2317, %v90
    %v3035 = vmul.f32 %v3029, %v91
    %v3036 = vmul.f32 %v3015, %v92
    %v3037 = vmul.f32 %v3030, %v93
    %v3038 = vmul.f32 %v3022, %v94
    %v3039 = vmul.f32 %v3024, %v95
    %v3042 = vrot.slane %v2415, 1
    %v3043 = vrot.slane %v2420, 1
    %v3044 = vsel %vm1087, %v3042, %v3043
    %v3045 = vrot.slane %v2425, 1
    %v3046 = vsel %vm1087, %v3043, %v3045
    %v3048 = vsel %vm240, %v3031, 0
    %v3051 = vsel %vm240, %v3032, 0
    %v3054 = vsel %vm240, %v3033, 0
    %v3057 = vsel %vm240, %v3034, 0
    %v3060 = vsel %vm240, %v3035, 0
    %v3063 = vsel %vm240, %v3036, 0
    %v3066 = vsel %vm240, %v3037, 0
    %v3069 = vsel %vm240, %v3038, 0
    %v3072 = vsel %vm240, %v3039, 0
    %v3074 = vsel %vm240, %v3044, 0
    %v3076 = vsel %vm240, %v3046, 0
    %v3078 = vsel %vm240, %v3045, 0
    %3080 = vmatprep.subr.mxu0 0.0
    %3081 = vmatpush1.xpose.msra.mxu0 %v3074
    %3082 = vmatprep.subr.mxu0 0.0
    %3083 = vmatpush1.xpose.msra.mxu0 %v3076
    %3084 = vmatprep.subr.mxu0 0.0
    %3085 = vmatpush1.xpose.msra.mxu0 %v3078
    %3086 = vmatprep.subr.mxu0 0.0
    %3087 = vmatpush1.xpose.msra.mxu0 0.0
    %3088 = vmatprep.subr.mxu0 0.0
    %3089 = vmatpush1.xpose.msra.mxu0 0.0
    %3090 = vmatprep.subr.mxu0 0.0
    %3091 = vmatpush1.xpose.msra.mxu0 0.0
    %3092 = vmatprep.subr.mxu0 0.0
    %3093 = vmatpush1.xpose.msra.mxu0 0.0
    %3094 = vmatprep.subr.mxu0 0.0
    %3095 = vmatpush1.xpose.msra.mxu0 0.0
    %3096 = vmatprep.subr.mxu0 0.0
    %3097 = vmatpush1.xpose.msra.mxu0 0.0
    %3098 = vmatprep.subr.mxu0 0.0
    %3099 = vmatpush1.xpose.msra.mxu0 0.0
    %3100 = vmatprep.subr.mxu0 0.0
    %3101 = vmatpush1.xpose.msra.mxu0 0.0
    %3102 = vmatprep.subr.mxu0 0.0
    %3103 = vmatpush1.xpose.msra.mxu0 0.0
    %3104 = vmatprep.subr.mxu0 0.0
    %3105 = vmatpush1.xpose.msra.mxu0 0.0
    %3106 = vmatprep.subr.mxu0 0.0
    %3107 = vmatpush1.xpose.msra.mxu0 0.0
    %3108 = vmatprep.subr.mxu0 0.0
    %3109 = vmatpush1.xpose.msra.mxu0 0.0
    %3110 = vmatprep.subr.mxu0 0.0
    %3111 = vmatpush1.xpose.msra.mxu0 0.0
    %3112 = vmatprep.subr.mxu0 0.0
    %3113 = vmatpush1.xpose.msra.mxu0 0.0
    %3114 = vmatprep.subr.mxu0 0.0
    %3115 = vmatpush1.xpose.msra.mxu0 0.0
    %3116 = vmatprep.subr.mxu0 0.0
    %3117 = vmatpush1.xpose.msra.mxu0 0.0
    %3118 = vmatprep.subr.mxu0 0.0
    %3119 = vmatpush1.xpose.msra.mxu0 0.0
    %3120 = vmatprep.subr.mxu0 0.0
    %3121 = vmatpush1.xpose.msra.mxu0 0.0
    %3122 = vmatprep.subr.mxu0 0.0
    %3123 = vmatpush1.xpose.msra.mxu0 0.0
    %3124 = vmatprep.subr.mxu0 0.0
    %3125 = vmatpush1.xpose.msra.mxu0 0.0
    %3126 = vmatprep.subr.mxu0 0.0
    %3127 = vmatpush1.xpose.msra.mxu0 0.0
    %3128 = vmatprep.subr.mxu0 0.0
    %3129 = vmatpush1.xpose.msra.mxu0 0.0
    %3130 = vmatprep.subr.mxu0 0.0
    %3131 = vmatpush1.xpose.msra.mxu0 0.0
    %3132 = vmatprep.subr.mxu0 0.0
    %3133 = vmatpush1.xpose.msra.mxu0 0.0
    %3134 = vmatprep.subr.mxu0 0.0
    %3135 = vmatpush1.xpose.msra.mxu0 0.0
    %3136 = vmatprep.subr.mxu0 0.0
    %3137 = vmatpush1.xpose.msra.mxu0 0.0
    %3138 = vmatprep.subr.mxu0 0.0
    %3139 = vmatpush1.xpose.msra.mxu0 0.0
    %3140 = vmatprep.subr.mxu0 0.0
    %3141 = vmatpush1.xpose.msra.mxu0 0.0
    %3142 = vmatprep.subr.mxu0 0.0
    %3143 = vmatpush1.xpose.msra.mxu0 0.0
    %3144 = vmatprep.mubr.f32.mxu0 0.0
    %3145 = vmatmul.mubr.f32.gmra.mrb[0].mxu0 %v3048
    %v3146 = vpop.f32.mrb[0].mxu0
    %v3147 = vadd.f32 0.0, %v3146
    %v3148 = vpop.f32.mrb[0].mxu0
    %3149 = vmatprep.mubr.f32.mxu0 0.0
    %3150 = vmatmul.mubr.f32.gmra.mrb[0].mxu0 %v3051
    %v3151 = vpop.f32.mrb[0].mxu0
    %v3152 = vadd.f32 0.0, %v3151
    %v3153 = vpop.f32.mrb[0].mxu0
    %3154 = vmatprep.mubr.f32.mxu0 0.0
    %3155 = vmatmul.mubr.f32.gmra.mrb[0].mxu0 %v3054
    %v3156 = vpop.f32.mrb[0].mxu0
    %v3157 = vadd.f32 0.0, %v3156
    %v3158 = vpop.f32.mrb[0].mxu0
    %3159 = vmatprep.mubr.f32.mxu0 0.0
    %3160 = vmatmul.mubr.f32.gmra.mrb[0].mxu0 %v3057
    %v3161 = vpop.f32.mrb[0].mxu0
    %v3162 = vadd.f32 0.0, %v3161
    %v3163 = vpop.f32.mrb[0].mxu0
    %3164 = vmatprep.mubr.f32.mxu0 0.0
    %3165 = vmatmul.mubr.f32.gmra.mrb[0].mxu0 %v3060
    %v3166 = vpop.f32.mrb[0].mxu0
    %v3167 = vadd.f32 0.0, %v3166
    %v3168 = vpop.f32.mrb[0].mxu0
    %3169 = vmatprep.mubr.f32.mxu0 0.0
    %3170 = vmatmul.mubr.f32.gmra.mrb[0].mxu0 %v3063
    %v3171 = vpop.f32.mrb[0].mxu0
    %v3172 = vadd.f32 0.0, %v3171
    %v3173 = vpop.f32.mrb[0].mxu0
    %3174 = vmatprep.mubr.f32.mxu0 0.0
    %3175 = vmatmul.mubr.f32.gmra.mrb[0].mxu0 %v3066
    %v3176 = vpop.f32.mrb[0].mxu0
    %v3177 = vadd.f32 0.0, %v3176
    %v3178 = vpop.f32.mrb[0].mxu0
    %3179 = vmatprep.mubr.f32.mxu0 0.0
    %3180 = vmatmul.mubr.f32.gmra.mrb[0].mxu0 %v3069
    %v3181 = vpop.f32.mrb[0].mxu0
    %v3182 = vadd.f32 0.0, %v3181
    %v3183 = vpop.f32.mrb[0].mxu0
    %3184 = vmatprep.mubr.f32.mxu0 0.0
    %3185 = vmatmul.mubr.f32.gmra.mrb[0].mxu0 %v3072
    %v3186 = vpop.f32.mrb[0].mxu0
    %v3187 = vadd.f32 0.0, %v3186
    %v3188 = vpop.f32.mrb[0].mxu0
    %3189 = vdwg.mxu0
    %v3190 = vsel %vm834, %v3147, -inf
    %3191 = vmax.xlane.f32.xlu0 %v3190
    %v3192 = vpop.xlane.xlu0 %3191
    %v3193 = vsel %vm834, %v3152, -inf
    %3194 = vmax.xlane.f32.xlu0 %v3193
    %v3195 = vpop.xlane.xlu0 %3194
    %v3196 = vsel %vm834, %v3157, -inf
    %3197 = vmax.xlane.f32.xlu0 %v3196
    %v3198 = vpop.xlane.xlu0 %3197
    %v3199 = vsel %vm834, %v3162, -inf
    %3200 = vmax.xlane.f32.xlu0 %v3199
    %v3201 = vpop.xlane.xlu0 %3200
    %v3202 = vsel %vm834, %v3167, -inf
    %3203 = vmax.xlane.f32.xlu0 %v3202
    %v3204 = vpop.xlane.xlu0 %3203
    %v3205 = vsel %vm834, %v3172, -inf
    %3206 = vmax.xlane.f32.xlu0 %v3205
    %v3207 = vpop.xlane.xlu0 %3206
    %v3208 = vsel %vm834, %v3177, -inf
    %3209 = vmax.xlane.f32.xlu0 %v3208
    %v3210 = vpop.xlane.xlu0 %3209
    %v3211 = vsel %vm834, %v3182, -inf
    %3212 = vmax.xlane.f32.xlu0 %v3211
    %v3213 = vpop.xlane.xlu0 %3212
    %v3214 = vsel %vm859, %v3187, -inf
    %3215 = vmax.xlane.f32.xlu0 %v3214
    %v3216 = vpop.xlane.xlu0 %3215
    %v3217 = vsub.f32 %v3147, %v3192
    %v3218 = vsub.f32 %v3152, %v3195
    %v3219 = vsub.f32 %v3157, %v3198
    %v3220 = vsub.f32 %v3162, %v3201
    %v3221 = vsub.f32 %v3167, %v3204
    %v3222 = vsub.f32 %v3172, %v3207
    %v3223 = vsub.f32 %v3177, %v3210
    %v3224 = vsub.f32 %v3182, %v3213
    %v3225 = vsub.f32 %v3187, %v3216
    %v3226 = vmul.f32 %v3217, 1.442695
    %v3227 = vpow.pop %v3226
    %v3228 = vmul.f32 %v3218, 1.442695
    %v3229 = vpow.pop %v3228
    %v3230 = vmul.f32 %v3219, 1.442695
    %v3231 = vpow.pop %v3230
    %v3232 = vmul.f32 %v3220, 1.442695
    %v3233 = vpow.pop %v3232
    %v3234 = vmul.f32 %v3221, 1.442695
    %v3235 = vpow.pop %v3234
    %v3236 = vmul.f32 %v3222, 1.442695
    %v3237 = vpow.pop %v3236
    %v3238 = vmul.f32 %v3223, 1.442695
    %v3239 = vpow.pop %v3238
    %v3240 = vmul.f32 %v3224, 1.442695
    %v3241 = vpow.pop %v3240
    %v3242 = vmul.f32 %v3225, 1.442695
    %v3243 = vpow.pop %v3242
    %v3244 = vsel %vm834, %v3227, 0.0
    %3245 = vadd.xlane.f32.xlu0 %v3244
    %v3246 = vpop.xlane.xlu0 %3245
    %v3247 = vsel %vm834, %v3229, 0.0
    %3248 = vadd.xlane.f32.xlu0 %v3247
    %v3249 = vpop.xlane.xlu0 %3248
    %v3250 = vsel %vm834, %v3231, 0.0
    %3251 = vadd.xlane.f32.xlu0 %v3250
    %v3252 = vpop.xlane.xlu0 %3251
    %v3253 = vsel %vm834, %v3233, 0.0
    %3254 = vadd.xlane.f32.xlu0 %v3253
    %v3255 = vpop.xlane.xlu0 %3254
    %v3256 = vsel %vm834, %v3235, 0.0
    %3257 = vadd.xlane.f32.xlu0 %v3256
    %v3258 = vpop.xlane.xlu0 %3257
    %v3259 = vsel %vm834, %v3237, 0.0
    %3260 = vadd.xlane.f32.xlu0 %v3259
    %v3261 = vpop.xlane.xlu0 %3260
    %v3262 = vsel %vm834, %v3239, 0.0
    %3263 = vadd.xlane.f32.xlu0 %v3262
    %v3264 = vpop.xlane.xlu0 %3263
    %v3265 = vsel %vm834, %v3241, 0.0
    %3266 = vadd.xlane.f32.xlu0 %v3265
    %v3267 = vpop.xlane.xlu0 %3266
    %v3268 = vsel %vm859, %v3243, 0.0
    %3269 = vadd.xlane.f32.xlu0 %v3268
    %v3270 = vpop.xlane.xlu0 %3269
    %v3271 = vrcp.pop %v3246
    %v3272 = vrcp.pop %v3249
    %v3273 = vrcp.pop %v3252
    %v3274 = vrcp.pop %v3255
    %v3275 = vrcp.pop %v3258
    %v3276 = vrcp.pop %v3261
    %v3277 = vrcp.pop %v3264
    %v3278 = vrcp.pop %v3267
    %v3279 = vrcp.pop %v3270
    %v3280 = vmul.f32 %v3227, %v3271
    %v3281 = vmul.f32 %v3229, %v3272
    %v3282 = vmul.f32 %v3231, %v3273
    %v3283 = vmul.f32 %v3233, %v3274
    %v3284 = vmul.f32 %v3235, %v3275
    %v3285 = vmul.f32 %v3237, %v3276
    %v3286 = vmul.f32 %v3239, %v3277
    %v3287 = vmul.f32 %v3241, %v3278
    %v3288 = vmul.f32 %v3243, %v3279
    %v3291 = vrot.slane %v2518, 1
    %v3292 = vrot.slane %v2523, 1
    %v3293 = vsel %vm1087, %v3291, %v3292
    %v3294 = vrot.slane %v2528, 1
    %v3295 = vsel %vm1087, %v3292, %v3294
    %v3299 = vsel %vm834, %v3280, 0
    %v3302 = vsel %vm834, %v3281, 0
    %v3305 = vsel %vm834, %v3282, 0
    %v3308 = vsel %vm834, %v3283, 0
    %v3311 = vsel %vm834, %v3284, 0
    %v3314 = vsel %vm834, %v3285, 0
    %v3317 = vsel %vm834, %v3286, 0
    %v3320 = vsel %vm834, %v3287, 0
    %v3323 = vsel %vm834, %v3288, 0
    %v3325 = vsel %vm213, %v3294, 0
    %3327 = vmatprep.subr.mxu0 0.0
    %3328 = vmatpush1.msra.mxu0 %v3293
    %3329 = vmatprep.subr.mxu0 0.0
    %3330 = vmatpush1.msra.mxu0 %v3295
    %3331 = vmatprep.subr.mxu0 0.0
    %3332 = vmatpush1.msra.mxu0 %v3325
    %3333 = vmatprep.subr.mxu0 0.0
    %3334 = vmatpush1.msra.mxu0 0.0
    %3335 = vmatprep.subr.mxu0 0.0
    %3336 = vmatpush1.msra.mxu0 0.0
    %3337 = vmatprep.subr.mxu0 0.0
    %3338 = vmatpush1.msra.mxu0 0.0
    %3339 = vmatprep.subr.mxu0 0.0
    %3340 = vmatpush1.msra.mxu0 0.0
    %3341 = vmatprep.subr.mxu0 0.0
    %3342 = vmatpush1.msra.mxu0 0.0
    %3343 = vmatprep.subr.mxu0 0.0
    %3344 = vmatpush1.msra.mxu0 0.0
    %3345 = vmatprep.subr.mxu0 0.0
    %3346 = vmatpush1.msra.mxu0 0.0
    %3347 = vmatprep.subr.mxu0 0.0
    %3348 = vmatpush1.msra.mxu0 0.0
    %3349 = vmatprep.subr.mxu0 0.0
    %3350 = vmatpush1.msra.mxu0 0.0
    %3351 = vmatprep.subr.mxu0 0.0
    %3352 = vmatpush1.msra.mxu0 0.0
    %3353 = vmatprep.subr.mxu0 0.0
    %3354 = vmatpush1.msra.mxu0 0.0
    %3355 = vmatprep.subr.mxu0 0.0
    %3356 = vmatpush1.msra.mxu0 0.0
    %3357 = vmatprep.subr.mxu0 0.0
    %3358 = vmatpush1.msra.mxu0 0.0
    %3359 = vmatprep.subr.mxu0 0.0
    %3360 = vmatpush1.msra.mxu0 0.0
    %3361 = vmatprep.subr.mxu0 0.0
    %3362 = vmatpush1.msra.mxu0 0.0
    %3363 = vmatprep.subr.mxu0 0.0
    %3364 = vmatpush1.msra.mxu0 0.0
    %3365 = vmatprep.subr.mxu0 0.0
    %3366 = vmatpush1.msra.mxu0 0.0
    %3367 = vmatprep.subr.mxu0 0.0
    %3368 = vmatpush1.msra.mxu0 0.0
    %3369 = vmatprep.subr.mxu0 0.0
    %3370 = vmatpush1.msra.mxu0 0.0
    %3371 = vmatprep.subr.mxu0 0.0
    %3372 = vmatpush1.msra.mxu0 0.0
    %3373 = vmatprep.subr.mxu0 0.0
    %3374 = vmatpush1.msra.mxu0 0.0
    %3375 = vmatprep.subr.mxu0 0.0
    %3376 = vmatpush1.msra.mxu0 0.0
    %3377 = vmatprep.subr.mxu0 0.0
    %3378 = vmatpush1.msra.mxu0 0.0
    %3379 = vmatprep.subr.mxu0 0.0
    %3380 = vmatpush1.msra.mxu0 0.0
    %3381 = vmatprep.subr.mxu0 0.0
    %3382 = vmatpush1.msra.mxu0 0.0
    %3383 = vmatprep.subr.mxu0 0.0
    %3384 = vmatpush1.msra.mxu0 0.0
    %3385 = vmatprep.subr.mxu0 0.0
    %3386 = vmatpush1.msra.mxu0 0.0
    %3387 = vmatprep.subr.mxu0 0.0
    %3388 = vmatpush1.msra.mxu0 0.0
    %3389 = vmatprep.subr.mxu0 0.0
    %3390 = vmatpush1.msra.mxu0 0.0
    %3391 = vmatprep.mubr.f32.mxu0 0.0
    %3392 = vmatmul.mubr.f32.gmra.mrb[0].mxu0 %v3299
    %v3393 = vpop.f32.mrb[0].mxu0
    %v3394 = vadd.f32 0.0, %v3393
    %v3395 = vpop.f32.mrb[0].mxu0
    %3396 = vmatprep.mubr.f32.mxu0 0.0
    %3397 = vmatmul.mubr.f32.gmra.mrb[0].mxu0 %v3302
    %v3398 = vpop.f32.mrb[0].mxu0
    %v3399 = vadd.f32 0.0, %v3398
    %v3400 = vpop.f32.mrb[0].mxu0
    %3401 = vmatprep.mubr.f32.mxu0 0.0
    %3402 = vmatmul.mubr.f32.gmra.mrb[0].mxu0 %v3305
    %v3403 = vpop.f32.mrb[0].mxu0
    %v3404 = vadd.f32 0.0, %v3403
    %v3405 = vpop.f32.mrb[0].mxu0
    %3406 = vmatprep.mubr.f32.mxu0 0.0
    %3407 = vmatmul.mubr.f32.gmra.mrb[0].mxu0 %v3308
    %v3408 = vpop.f32.mrb[0].mxu0
    %v3409 = vadd.f32 0.0, %v3408
    %v3410 = vpop.f32.mrb[0].mxu0
    %3411 = vmatprep.mubr.f32.mxu0 0.0
    %3412 = vmatmul.mubr.f32.gmra.mrb[0].mxu0 %v3311
    %v3413 = vpop.f32.mrb[0].mxu0
    %v3414 = vadd.f32 0.0, %v3413
    %v3415 = vpop.f32.mrb[0].mxu0
    %3416 = vmatprep.mubr.f32.mxu0 0.0
    %3417 = vmatmul.mubr.f32.gmra.mrb[0].mxu0 %v3314
    %v3418 = vpop.f32.mrb[0].mxu0
    %v3419 = vadd.f32 0.0, %v3418
    %v3420 = vpop.f32.mrb[0].mxu0
    %3421 = vmatprep.mubr.f32.mxu0 0.0
    %3422 = vmatmul.mubr.f32.gmra.mrb[0].mxu0 %v3317
    %v3423 = vpop.f32.mrb[0].mxu0
    %v3424 = vadd.f32 0.0, %v3423
    %v3425 = vpop.f32.mrb[0].mxu0
    %3426 = vmatprep.mubr.f32.mxu0 0.0
    %3427 = vmatmul.mubr.f32.gmra.mrb[0].mxu0 %v3320
    %v3428 = vpop.f32.mrb[0].mxu0
    %v3429 = vadd.f32 0.0, %v3428
    %v3430 = vpop.f32.mrb[0].mxu0
    %3431 = vmatprep.mubr.f32.mxu0 0.0
    %3432 = vmatmul.mubr.f32.gmra.mrb[0].mxu0 %v3323
    %v3433 = vpop.f32.mrb[0].mxu0
    %v3434 = vadd.f32 0.0, %v3433
    %v3435 = vpop.f32.mrb[0].mxu0
    %3436 = vdwg.mxu0
    %v3437 = vmul.f32 %v3394, %v87
    %v3438 = vmul.f32 %v3399, %v88
    %v3439 = vmul.f32 %v3404, %v89
    %v3440 = vmul.f32 %v3409, %v90
    %v3441 = vmul.f32 %v3414, %v91
    %v3442 = vmul.f32 %v3419, %v92
    %v3443 = vmul.f32 %v3424, %v93
    %v3444 = vmul.f32 %v3429, %v94
    %v3445 = vmul.f32 %v3434, %v95
    %v3449 = vrot.slane %v3439, 1
    %v3450 = vrot.slane %v3440, 1
    %v3451 = vsel %vm1087, %v3449, %v3450
    %v3452 = vrot.slane %v3441, 1
    %v3453 = vsel %vm1087, %v3450, %v3452
    %v3457 = vadd.f32 %v3437, %v3451
    %v3458 = vadd.f32 %v3438, %v3453
    %v3459 = vadd.f32 %v3439, %v3452
    %v3462 = vrot.slane %v3441, 2
    %v3463 = vrot.slane %v3442, 2
    %v3464 = vsel %vm1101, %v3462, %v3463
    %v3465 = vrot.slane %v3443, 2
    %v3466 = vsel %vm1101, %v3463, %v3465
    %v3470 = vadd.f32 %v3457, %v3464
    %v3471 = vadd.f32 %v3458, %v3466
    %v3472 = vadd.f32 %v3459, %v3465
    %v3475 = vrot.slane %v3443, 3
    %v3476 = vrot.slane %v3444, 3
    %v3477 = vsel %vm1115, %v3475, %v3476
    %v3478 = vrot.slane %v3445, 3
    %v3479 = vsel %vm1115, %v3476, %v3478
    %v3483 = vadd.f32 %v3470, %v3477
    %v3484 = vadd.f32 %v3471, %v3479
    %v3485 = vadd.f32 %v3472, %v3478
    %v3489 = vrot.slane %v3483, 7
    %v3490 = vrot.slane %v3484, 7
    %v3491 = vsel %vm213, %v3489, %v3490
    %v3492 = vrot.slane %v3485, 7
    %v3493 = vsel %vm213, %v3490, %v3492
    %v3495 = vsel %vm213, %v3003, %v3489
    %s3496 = scalar_lea.vmem %s14, 32
    %v3497 = vld [vmem:[%s3496] sm:$0xff]
    %v3498 = vld [vmem:[%s3496 + $0x8] sm:$0xff]
    %v3499 = vld [vmem:[%s3496 + $0x10] sm:$0xff]
    %v3500 = vld [vmem:[%s3496 + $0x18] sm:$0xff]
    %v3502 = vsel %vm240, %v3001, 0
    %v3505 = vsel %vm240, %v3002, 0
    %v3508 = vsel %vm240, %v3495, 0
    %v3510 = vsel %vm240, %v3491, 0
    %v3512 = vsel %vm240, %v3493, 0
    %3514 = vmatprep.subr.mxu0 0.0
    %3515 = vmatpush1.msra.mxu0 %v3497
    %3516 = vmatprep.subr.mxu0 0.0
    %3517 = vmatpush1.msra.mxu0 %v3498
    %3518 = vmatprep.subr.mxu0 0.0
    %3519 = vmatpush1.msra.mxu0 %v3499
    %3520 = vmatprep.subr.mxu0 0.0
    %3521 = vmatpush1.msra.mxu0 %v3500
    %3522 = vmatprep.subr.mxu0 0.0
    %3523 = vmatpush1.msra.mxu0 0.0
    %3524 = vmatprep.subr.mxu0 0.0
    %3525 = vmatpush1.msra.mxu0 0.0
    %3526 = vmatprep.subr.mxu0 0.0
    %3527 = vmatpush1.msra.mxu0 0.0
    %3528 = vmatprep.subr.mxu0 0.0
    %3529 = vmatpush1.msra.mxu0 0.0
    %3530 = vmatprep.subr.mxu0 0.0
    %3531 = vmatpush1.msra.mxu0 0.0
    %3532 = vmatprep.subr.mxu0 0.0
    %3533 = vmatpush1.msra.mxu0 0.0
    %3534 = vmatprep.subr.mxu0 0.0
    %3535 = vmatpush1.msra.mxu0 0.0
    %3536 = vmatprep.subr.mxu0 0.0
    %3537 = vmatpush1.msra.mxu0 0.0
    %3538 = vmatprep.subr.mxu0 0.0
    %3539 = vmatpush1.msra.mxu0 0.0
    %3540 = vmatprep.subr.mxu0 0.0
    %3541 = vmatpush1.msra.mxu0 0.0
    %3542 = vmatprep.subr.mxu0 0.0
    %3543 = vmatpush1.msra.mxu0 0.0
    %3544 = vmatprep.subr.mxu0 0.0
    %3545 = vmatpush1.msra.mxu0 0.0
    %3546 = vmatprep.subr.mxu0 0.0
    %3547 = vmatpush1.msra.mxu0 0.0
    %3548 = vmatprep.subr.mxu0 0.0
    %3549 = vmatpush1.msra.mxu0 0.0
    %3550 = vmatprep.subr.mxu0 0.0
    %3551 = vmatpush1.msra.mxu0 0.0
    %3552 = vmatprep.subr.mxu0 0.0
    %3553 = vmatpush1.msra.mxu0 0.0
    %3554 = vmatprep.subr.mxu0 0.0
    %3555 = vmatpush1.msra.mxu0 0.0
    %3556 = vmatprep.subr.mxu0 0.0
    %3557 = vmatpush1.msra.mxu0 0.0
    %3558 = vmatprep.subr.mxu0 0.0
    %3559 = vmatpush1.msra.mxu0 0.0
    %3560 = vmatprep.subr.mxu0 0.0
    %3561 = vmatpush1.msra.mxu0 0.0
    %3562 = vmatprep.subr.mxu0 0.0
    %3563 = vmatpush1.msra.mxu0 0.0
    %3564 = vmatprep.subr.mxu0 0.0
    %3565 = vmatpush1.msra.mxu0 0.0
    %3566 = vmatprep.subr.mxu0 0.0
    %3567 = vmatpush1.msra.mxu0 0.0
    %3568 = vmatprep.subr.mxu0 0.0
    %3569 = vmatpush1.msra.mxu0 0.0
    %3570 = vmatprep.subr.mxu0 0.0
    %3571 = vmatpush1.msra.mxu0 0.0
    %3572 = vmatprep.subr.mxu0 0.0
    %3573 = vmatpush1.msra.mxu0 0.0
    %3574 = vmatprep.subr.mxu0 0.0
    %3575 = vmatpush1.msra.mxu0 0.0
    %3576 = vmatprep.subr.mxu0 0.0
    %3577 = vmatpush1.msra.mxu0 0.0
    %3578 = vmatprep.mubr.f32.mxu0 0.0
    %3579 = vmatmul.mubr.f32.gmra.mrb[0].mxu0 %v3502
    %v3580 = vpop.f32.mrb[0].mxu0
    %v3581 = vadd.f32 0.0, %v3580
    %v3582 = vpop.f32.mrb[0].mxu0
    %3583 = vmatprep.mubr.f32.mxu0 0.0
    %3584 = vmatmul.mubr.f32.gmra.mrb[0].mxu0 %v3505
    %v3585 = vpop.f32.mrb[0].mxu0
    %v3586 = vadd.f32 0.0, %v3585
    %v3587 = vpop.f32.mrb[0].mxu0
    %3588 = vmatprep.mubr.f32.mxu0 0.0
    %3589 = vmatmul.mubr.f32.gmra.mrb[0].mxu0 %v3508
    %v3590 = vpop.f32.mrb[0].mxu0
    %v3591 = vadd.f32 0.0, %v3590
    %v3592 = vpop.f32.mrb[0].mxu0
    %3593 = vmatprep.mubr.f32.mxu0 0.0
    %3594 = vmatmul.mubr.f32.gmra.mrb[0].mxu0 %v3510
    %v3595 = vpop.f32.mrb[0].mxu0
    %v3596 = vadd.f32 0.0, %v3595
    %v3597 = vpop.f32.mrb[0].mxu0
    %3598 = vmatprep.mubr.f32.mxu0 0.0
    %3599 = vmatmul.mubr.f32.gmra.mrb[0].mxu0 %v3512
    %v3600 = vpop.f32.mrb[0].mxu0
    %v3601 = vadd.f32 0.0, %v3600
    %v3602 = vpop.f32.mrb[0].mxu0
    %3603 = vdwg.mxu0
    %v3604 = vadd.f32 %v2111, %v3581
    %v3605 = vadd.f32 %v2112, %v3586
    %v3606 = vadd.f32 %v2113, %v3591
    %v3607 = vadd.f32 %v2114, %v3596
    %v3608 = vadd.f32 %v2115, %v3601
    %s3609 = scalar_lea.vmem %s15, 1
    %v3610 = vld [vmem:[%s3609] sm:$0x1]
    %v3612 = vlaneseq
    %v3613 = vshrl.u32 %v3612, 7
    %v3614 = vsub.s32 0, %v3613
    %v3615 = vrot.slane %v3610, %v3614
    %v3617 = vadd.f32 %v3604, %v3615
    %v3618 = vadd.f32 %v3605, %v3615
    %v3619 = vadd.f32 %v3606, %v3615
    %v3620 = vadd.f32 %v3607, %v3615
    %v3621 = vadd.f32 %v3608, %v3615
    %s3622 = scalar_lea.vmem %s16, 1
    %v3623 = vld [vmem:[%s3622] sm:$0x1]
    %s3624 = scalar_lea.vmem %s17, 1
    %v3625 = vld [vmem:[%s3624] sm:$0x1]
    %v3626 = vsel %vm240, %v3617, 0.0
    %3627 = vadd.xlane.f32.xlu0 %v3626
    %v3628 = vpop.xlane.xlu0 %3627
    %v3629 = vsel %vm240, %v3618, 0.0
    %3630 = vadd.xlane.f32.xlu0 %v3629
    %v3631 = vpop.xlane.xlu0 %3630
    %v3632 = vsel %vm240, %v3619, 0.0
    %3633 = vadd.xlane.f32.xlu0 %v3632
    %v3634 = vpop.xlane.xlu0 %3633
    %v3635 = vsel %vm240, %v3620, 0.0
    %3636 = vadd.xlane.f32.xlu0 %v3635
    %v3637 = vpop.xlane.xlu0 %3636
    %v3638 = vsel %vm253, %v3621, 0.0
    %3639 = vadd.xlane.f32.xlu0 %v3638
    %v3640 = vpop.xlane.xlu0 %3639
    %v3641 = vmul.f32 %v3628, %v257
    %v3642 = vmul.f32 %v3631, %v257
    %v3643 = vmul.f32 %v3634, %v257
    %v3644 = vmul.f32 %v3637, %v257
    %v3645 = vmul.f32 %v3640, %v257
    %v3646 = vsub.f32 %v3617, %v3641
    %v3647 = vsub.f32 %v3618, %v3642
    %v3648 = vsub.f32 %v3619, %v3643
    %v3649 = vsub.f32 %v3620, %v3644
    %v3650 = vsub.f32 %v3621, %v3645
    %v3651 = vmul.f32 %v3646, %v3646
    %v3652 = vmul.f32 %v3647, %v3647
    %v3653 = vmul.f32 %v3648, %v3648
    %v3654 = vmul.f32 %v3649, %v3649
    %v3655 = vmul.f32 %v3650, %v3650
    %v3656 = vsel %vm240, %v3651, 0.0
    %3657 = vadd.xlane.f32.xlu0 %v3656
    %v3658 = vpop.xlane.xlu0 %3657
    %v3659 = vsel %vm240, %v3652, 0.0
    %3660 = vadd.xlane.f32.xlu0 %v3659
    %v3661 = vpop.xlane.xlu0 %3660
    %v3662 = vsel %vm240, %v3653, 0.0
    %3663 = vadd.xlane.f32.xlu0 %v3662
    %v3664 = vpop.xlane.xlu0 %3663
    %v3665 = vsel %vm240, %v3654, 0.0
    %3666 = vadd.xlane.f32.xlu0 %v3665
    %v3667 = vpop.xlane.xlu0 %3666
    %v3668 = vsel %vm253, %v3655, 0.0
    %3669 = vadd.xlane.f32.xlu0 %v3668
    %v3670 = vpop.xlane.xlu0 %3669
    %v3671 = vmul.f32 %v3658, %v257
    %v3672 = vmul.f32 %v3661, %v257
    %v3673 = vmul.f32 %v3664, %v257
    %v3674 = vmul.f32 %v3667, %v257
    %v3675 = vmul.f32 %v3670, %v257
    %v3676 = vadd.f32 %v3671, 1e-06
    %v3677 = vadd.f32 %v3672, 1e-06
    %v3678 = vadd.f32 %v3673, 1e-06
    %v3679 = vadd.f32 %v3674, 1e-06
    %v3680 = vadd.f32 %v3675, 1e-06
    %v3681 = vrsqrt.pop %v3676
    %v3682 = vrsqrt.pop %v3677
    %v3683 = vrsqrt.pop %v3678
    %v3684 = vrsqrt.pop %v3679
    %v3685 = vrsqrt.pop %v3680
    %v3686 = vmul.f32 %v3646, %v3681
    %v3687 = vmul.f32 %v3647, %v3682
    %v3688 = vmul.f32 %v3648, %v3683
    %v3689 = vmul.f32 %v3649, %v3684
    %v3690 = vmul.f32 %v3650, %v3685
    %v3692 = vlaneseq
    %v3693 = vshrl.u32 %v3692, 7
    %v3694 = vsub.s32 0, %v3693
    %v3695 = vrot.slane %v3623, %v3694
    %v3697 = vmul.f32 %v3686, %v3695
    %v3698 = vmul.f32 %v3687, %v3695
    %v3699 = vmul.f32 %v3688, %v3695
    %v3700 = vmul.f32 %v3689, %v3695
    %v3701 = vmul.f32 %v3690, %v3695
    %v3703 = vlaneseq
    %v3704 = vshrl.u32 %v3703, 7
    %v3705 = vsub.s32 0, %v3704
    %v3706 = vrot.slane %v3625, %v3705
    %v3708 = vadd.f32 %v3697, %v3706
    %v3709 = vadd.f32 %v3698, %v3706
    %v3710 = vadd.f32 %v3699, %v3706
    %v3711 = vadd.f32 %v3700, %v3706
    %v3712 = vadd.f32 %v3701, %v3706
    %s3713 = scalar_lea.vmem %s18, 32
    %v3714 = vld [vmem:[%s3713] sm:$0xff]
    %v3715 = vld [vmem:[%s3713 + $0x8] sm:$0xff]
    %v3716 = vld [vmem:[%s3713 + $0x10] sm:$0xff]
    %v3717 = vld [vmem:[%s3713 + $0x18] sm:$0xff]
    %s3718 = scalar_lea.vmem %s19, 1
    %v3719 = vld [vmem:[%s3718] sm:$0x1]
    %v3721 = vlaneseq
    %v3722 = vshrl.u32 %v3721, 7
    %v3723 = vsub.s32 0, %v3722
    %v3724 = vrot.slane %v3719, %v3723
    %v3727 = vsel %vm240, %v3708, 0
    %v3730 = vsel %vm240, %v3709, 0
    %v3733 = vsel %vm240, %v3710, 0
    %v3736 = vsel %vm240, %v3711, 0
    %v3739 = vsel %vm240, %v3712, 0
    %3741 = vmatprep.subr.mxu0 0.0
    %3742 = vmatpush1.msra.mxu0 %v3714
    %3743 = vmatprep.subr.mxu0 0.0
    %3744 = vmatpush1.msra.mxu0 %v3715
    %3745 = vmatprep.subr.mxu0 0.0
    %3746 = vmatpush1.msra.mxu0 %v3716
    %3747 = vmatprep.subr.mxu0 0.0
    %3748 = vmatpush1.msra.mxu0 %v3717
    %3749 = vmatprep.subr.mxu0 0.0
    %3750 = vmatpush1.msra.mxu0 0.0
    %3751 = vmatprep.subr.mxu0 0.0
    %3752 = vmatpush1.msra.mxu0 0.0
    %3753 = vmatprep.subr.mxu0 0.0
    %3754 = vmatpush1.msra.mxu0 0.0
    %3755 = vmatprep.subr.mxu0 0.0
    %3756 = vmatpush1.msra.mxu0 0.0
    %3757 = vmatprep.subr.mxu0 0.0
    %3758 = vmatpush1.msra.mxu0 0.0
    %3759 = vmatprep.subr.mxu0 0.0
    %3760 = vmatpush1.msra.mxu0 0.0
    %3761 = vmatprep.subr.mxu0 0.0
    %3762 = vmatpush1.msra.mxu0 0.0
    %3763 = vmatprep.subr.mxu0 0.0
    %3764 = vmatpush1.msra.mxu0 0.0
    %3765 = vmatprep.subr.mxu0 0.0
    %3766 = vmatpush1.msra.mxu0 0.0
    %3767 = vmatprep.subr.mxu0 0.0
    %3768 = vmatpush1.msra.mxu0 0.0
    %3769 = vmatprep.subr.mxu0 0.0
    %3770 = vmatpush1.msra.mxu0 0.0
    %3771 = vmatprep.subr.mxu0 0.0
    %3772 = vmatpush1.msra.mxu0 0.0
    %3773 = vmatprep.subr.mxu0 0.0
    %3774 = vmatpush1.msra.mxu0 0.0
    %3775 = vmatprep.subr.mxu0 0.0
    %3776 = vmatpush1.msra.mxu0 0.0
    %3777 = vmatprep.subr.mxu0 0.0
    %3778 = vmatpush1.msra.mxu0 0.0
    %3779 = vmatprep.subr.mxu0 0.0
    %3780 = vmatpush1.msra.mxu0 0.0
    %3781 = vmatprep.subr.mxu0 0.0
    %3782 = vmatpush1.msra.mxu0 0.0
    %3783 = vmatprep.subr.mxu0 0.0
    %3784 = vmatpush1.msra.mxu0 0.0
    %3785 = vmatprep.subr.mxu0 0.0
    %3786 = vmatpush1.msra.mxu0 0.0
    %3787 = vmatprep.subr.mxu0 0.0
    %3788 = vmatpush1.msra.mxu0 0.0
    %3789 = vmatprep.subr.mxu0 0.0
    %3790 = vmatpush1.msra.mxu0 0.0
    %3791 = vmatprep.subr.mxu0 0.0
    %3792 = vmatpush1.msra.mxu0 0.0
    %3793 = vmatprep.subr.mxu0 0.0
    %3794 = vmatpush1.msra.mxu0 0.0
    %3795 = vmatprep.subr.mxu0 0.0
    %3796 = vmatpush1.msra.mxu0 0.0
    %3797 = vmatprep.subr.mxu0 0.0
    %3798 = vmatpush1.msra.mxu0 0.0
    %3799 = vmatprep.subr.mxu0 0.0
    %3800 = vmatpush1.msra.mxu0 0.0
    %3801 = vmatprep.subr.mxu0 0.0
    %3802 = vmatpush1.msra.mxu0 0.0
    %3803 = vmatprep.subr.mxu0 0.0
    %3804 = vmatpush1.msra.mxu0 0.0
    %3805 = vmatprep.mubr.f32.mxu0 0.0
    %3806 = vmatmul.mubr.f32.gmra.mrb[0].mxu0 %v3727
    %v3807 = vpop.f32.mrb[0].mxu0
    %v3808 = vadd.f32 %v3724, %v3807
    %v3809 = vpop.f32.mrb[0].mxu0
    %3810 = vmatprep.mubr.f32.mxu0 0.0
    %3811 = vmatmul.mubr.f32.gmra.mrb[0].mxu0 %v3730
    %v3812 = vpop.f32.mrb[0].mxu0
    %v3813 = vadd.f32 %v3724, %v3812
    %v3814 = vpop.f32.mrb[0].mxu0
    %3815 = vmatprep.mubr.f32.mxu0 0.0
    %3816 = vmatmul.mubr.f32.gmra.mrb[0].mxu0 %v3733
    %v3817 = vpop.f32.mrb[0].mxu0
    %v3818 = vadd.f32 %v3724, %v3817
    %v3819 = vpop.f32.mrb[0].mxu0
    %3820 = vmatprep.mubr.f32.mxu0 0.0
    %3821 = vmatmul.mubr.f32.gmra.mrb[0].mxu0 %v3736
    %v3822 = vpop.f32.mrb[0].mxu0
    %v3823 = vadd.f32 %v3724, %v3822
    %v3824 = vpop.f32.mrb[0].mxu0
    %3825 = vmatprep.mubr.f32.mxu0 0.0
    %3826 = vmatmul.mubr.f32.gmra.mrb[0].mxu0 %v3739
    %v3827 = vpop.f32.mrb[0].mxu0
    %v3828 = vadd.f32 %v3724, %v3827
    %v3829 = vpop.f32.mrb[0].mxu0
    %3830 = vdwg.mxu0
    %v3831 = vmul.f32 %v3808, 0.5
    %v3832 = vmul.f32 %v3813, 0.5
    %v3833 = vmul.f32 %v3818, 0.5
    %v3834 = vmul.f32 %v3823, 0.5
    %v3835 = vmul.f32 %v3828, 0.5
    %v3836 = vmul.f32 %v3808, 0.044715
    %v3837 = vmul.f32 %v3813, 0.044715
    %v3838 = vmul.f32 %v3818, 0.044715
    %v3839 = vmul.f32 %v3823, 0.044715
    %v3840 = vmul.f32 %v3828, 0.044715
    %v3841 = vmul.f32 %v3836, %v3808
    %v3842 = vmul.f32 %v3837, %v3813
    %v3843 = vmul.f32 %v3838, %v3818
    %v3844 = vmul.f32 %v3839, %v3823
    %v3845 = vmul.f32 %v3840, %v3828
    %v3846 = vmul.f32 %v3841, %v3808
    %v3847 = vmul.f32 %v3842, %v3813
    %v3848 = vmul.f32 %v3843, %v3818
    %v3849 = vmul.f32 %v3844, %v3823
    %v3850 = vmul.f32 %v3845, %v3828
    %v3851 = vadd.f32 %v3808, %v3846
    %v3852 = vadd.f32 %v3813, %v3847
    %v3853 = vadd.f32 %v3818, %v3848
    %v3854 = vadd.f32 %v3823, %v3849
    %v3855 = vadd.f32 %v3828, %v3850
    %v3856 = vmul.f32 %v3851, 0.7978846
    %v3857 = vmul.f32 %v3852, 0.7978846
    %v3858 = vmul.f32 %v3853, 0.7978846
    %v3859 = vmul.f32 %v3854, 0.7978846
    %v3860 = vmul.f32 %v3855, 0.7978846
    %v3861 = vtanh.pop %v3856
    %v3862 = vtanh.pop %v3857
    %v3863 = vtanh.pop %v3858
    %v3864 = vtanh.pop %v3859
    %v3865 = vtanh.pop %v3860
    %v3866 = vadd.f32 %v3861, 1.0
    %v3867 = vadd.f32 %v3862, 1.0
    %v3868 = vadd.f32 %v3863, 1.0
    %v3869 = vadd.f32 %v3864, 1.0
    %v3870 = vadd.f32 %v3865, 1.0
    %v3871 = vmul.f32 %v3831, %v3866
    %v3872 = vmul.f32 %v3832, %v3867
    %v3873 = vmul.f32 %v3833, %v3868
    %v3874 = vmul.f32 %v3834, %v3869
    %v3875 = vmul.f32 %v3835, %v3870
    %s3876 = scalar_lea.vmem %s20, 128
    %v3877 = vld [vmem:[%s3876] sm:$0xff]
    %v3878 = vld [vmem:[%s3876 + $0x8] sm:$0xff]
    %v3879 = vld [vmem:[%s3876 + $0x10] sm:$0xff]
    %v3880 = vld [vmem:[%s3876 + $0x18] sm:$0xff]
    %v3881 = vld [vmem:[%s3876 + $0x20] sm:$0xff]
    %v3882 = vld [vmem:[%s3876 + $0x28] sm:$0xff]
    %v3883 = vld [vmem:[%s3876 + $0x30] sm:$0xff]
    %v3884 = vld [vmem:[%s3876 + $0x38] sm:$0xff]
    %v3885 = vld [vmem:[%s3876 + $0x40] sm:$0xff]
    %v3886 = vld [vmem:[%s3876 + $0x48] sm:$0xff]
    %v3887 = vld [vmem:[%s3876 + $0x50] sm:$0xff]
    %v3888 = vld [vmem:[%s3876 + $0x58] sm:$0xff]
    %v3889 = vld [vmem:[%s3876 + $0x60] sm:$0xff]
    %v3890 = vld [vmem:[%s3876 + $0x68] sm:$0xff]
    %v3891 = vld [vmem:[%s3876 + $0x70] sm:$0xff]
    %v3892 = vld [vmem:[%s3876 + $0x78] sm:$0xff]
    %3893 = vmatprep.subr.mxu0 0.0
    %3894 = vmatpush1.msra.mxu0 %v3877
    %3895 = vmatprep.subr.mxu0 0.0
    %3896 = vmatpush1.msra.mxu0 %v3878
    %3897 = vmatprep.subr.mxu0 0.0
    %3898 = vmatpush1.msra.mxu0 %v3879
    %3899 = vmatprep.subr.mxu0 0.0
    %3900 = vmatpush1.msra.mxu0 %v3880
    %3901 = vmatprep.subr.mxu0 0.0
    %3902 = vmatpush1.msra.mxu0 %v3881
    %3903 = vmatprep.subr.mxu0 0.0
    %3904 = vmatpush1.msra.mxu0 %v3882
    %3905 = vmatprep.subr.mxu0 0.0
    %3906 = vmatpush1.msra.mxu0 %v3883
    %3907 = vmatprep.subr.mxu0 0.0
    %3908 = vmatpush1.msra.mxu0 %v3884
    %3909 = vmatprep.subr.mxu0 0.0
    %3910 = vmatpush1.msra.mxu0 %v3885
    %3911 = vmatprep.subr.mxu0 0.0
    %3912 = vmatpush1.msra.mxu0 %v3886
    %3913 = vmatprep.subr.mxu0 0.0
    %3914 = vmatpush1.msra.mxu0 %v3887
    %3915 = vmatprep.subr.mxu0 0.0
    %3916 = vmatpush1.msra.mxu0 %v3888
    %3917 = vmatprep.subr.mxu0 0.0
    %3918 = vmatpush1.msra.mxu0 %v3889
    %3919 = vmatprep.subr.mxu0 0.0
    %3920 = vmatpush1.msra.mxu0 %v3890
    %3921 = vmatprep.subr.mxu0 0.0
    %3922 = vmatpush1.msra.mxu0 %v3891
    %3923 = vmatprep.subr.mxu0 0.0
    %3924 = vmatpush1.msra.mxu0 %v3892
    %3925 = vmatprep.subr.mxu0 0.0
    %3926 = vmatpush1.msra.mxu0 0.0
    %3927 = vmatprep.subr.mxu0 0.0
    %3928 = vmatpush1.msra.mxu0 0.0
    %3929 = vmatprep.subr.mxu0 0.0
    %3930 = vmatpush1.msra.mxu0 0.0
    %3931 = vmatprep.subr.mxu0 0.0
    %3932 = vmatpush1.msra.mxu0 0.0
    %3933 = vmatprep.subr.mxu0 0.0
    %3934 = vmatpush1.msra.mxu0 0.0
    %3935 = vmatprep.subr.mxu0 0.0
    %3936 = vmatpush1.msra.mxu0 0.0
    %3937 = vmatprep.subr.mxu0 0.0
    %3938 = vmatpush1.msra.mxu0 0.0
    %3939 = vmatprep.subr.mxu0 0.0
    %3940 = vmatpush1.msra.mxu0 0.0
    %3941 = vmatprep.subr.mxu0 0.0
    %3942 = vmatpush1.msra.mxu0 0.0
    %3943 = vmatprep.subr.mxu0 0.0
    %3944 = vmatpush1.msra.mxu0 0.0
    %3945 = vmatprep.subr.mxu0 0.0
    %3946 = vmatpush1.msra.mxu0 0.0
    %3947 = vmatprep.subr.mxu0 0.0
    %3948 = vmatpush1.msra.mxu0 0.0
    %3949 = vmatprep.subr.mxu0 0.0
    %3950 = vmatpush1.msra.mxu0 0.0
    %3951 = vmatprep.subr.mxu0 0.0
    %3952 = vmatpush1.msra.mxu0 0.0
    %3953 = vmatprep.subr.mxu0 0.0
    %3954 = vmatpush1.msra.mxu0 0.0
    %3955 = vmatprep.subr.mxu0 0.0
    %3956 = vmatpush1.msra.mxu0 0.0
    %3957 = vmatprep.mubr.f32.mxu0 0.0
    %3958 = vmatmul.mubr.f32.gmra.mrb[0].mxu0 %v3871
    %v3959 = vpop.f32.mrb[0].mxu0
    %v3960 = vadd.f32 0.0, %v3959
    %v3961 = vpop.f32.mrb[0].mxu0
    %3962 = vmatprep.mubr.f32.mxu0 0.0
    %3963 = vmatmul.mubr.f32.gmra.mrb[0].mxu0 %v3872
    %v3964 = vpop.f32.mrb[0].mxu0
    %v3965 = vpop.f32.mrb[0].mxu0
    %3966 = vmatprep.mubr.f32.mxu0 0.0
    %3967 = vmatmul.mubr.f32.gmra.mrb[0].mxu0 %v3873
    %v3968 = vpop.f32.mrb[0].mxu0
    %v3969 = vadd.f32 0.0, %v3968
    %v3970 = vpop.f32.mrb[0].mxu0
    %3971 = vmatprep.mubr.f32.mxu0 0.0
    %3972 = vmatmul.mubr.f32.gmra.mrb[0].mxu0 %v3874
    %v3973 = vpop.f32.mrb[0].mxu0
    %v3974 = vpop.f32.mrb[0].mxu0
    %3975 = vmatprep.mubr.f32.mxu0 0.0
    %3976 = vmatmul.mubr.f32.gmra.mrb[0].mxu0 %v3875
    %v3977 = vpop.f32.mrb[0].mxu0
    %v3978 = vpop.f32.mrb[0].mxu0
    %3979 = vdwg.mxu0
    %v3980 = vadd.f32 %v3617, %v3960
    %v3981 = vadd.f32 %v3619, %v3969
    %s3982 = scalar_lea.vmem %s21, 1
    %v3983 = vld [vmem:[%s3982] sm:$0x1]
    %v3985 = vlaneseq
    %v3986 = vshrl.u32 %v3985, 7
    %v3987 = vsub.s32 0, %v3986
    %v3988 = vrot.slane %v3983, %v3987
    %v3990 = vadd.f32 %v3980, %v3988
    %v3991 = vadd.f32 %v3981, %v3988
    %v3992 = vsel %vm213, %v3990, %v3991
    %v3993 = vld [vmem:[%s22] sm:$0x1]
    %v3994 = vld [vmem:[%s23] sm:$0x1]
    %v3995 = vsel %vm253, %v3992, 0.0
    %3996 = vadd.xlane.f32.xlu0 %v3995
    %v3997 = vpop.xlane.xlu0 %3996
    %v3998 = vmul.f32 %v3997, %v257
    %v3999 = vsub.f32 %v3992, %v3998
    %v4000 = vmul.f32 %v3999, %v3999
    %v4001 = vsel %vm253, %v4000, 0.0
    %4002 = vadd.xlane.f32.xlu0 %v4001
    %v4003 = vpop.xlane.xlu0 %4002
    %v4004 = vmul.f32 %v4003, %v257
    %v4005 = vadd.f32 %v4004, 1e-06
    %v4006 = vrsqrt.pop %v4005
    %v4007 = vmul.f32 %v3999, %v4006
    %v4009 = vlaneseq
    %v4010 = vshrl.u32 %v4009, 7
    %v4011 = vsub.s32 0, %v4010
    %v4012 = vrot.slane %v3993, %v4011
    %v4014 = vmul.f32 %v4007, %v4012
    %v4016 = vlaneseq
    %v4017 = vshrl.u32 %v4016, 7
    %v4018 = vsub.s32 0, %v4017
    %v4019 = vrot.slane %v3994, %v4018
    %v4021 = vadd.f32 %v4014, %v4019
    %v4022 = vld [vmem:[%s24] sm:$0xff]
    %v4023 = vld [vmem:[%s24 + $0x8] sm:$0xff]
    %v4024 = vld [vmem:[%s24 + $0x10] sm:$0xff]
    %v4025 = vld [vmem:[%s24 + $0x18] sm:$0xff]
    %v4026 = vld [vmem:[%s1] sm:$0x3]
    %v4027 = vld [vmem:[%s25] sm:$0xff]
    %vm4028 = vcmask 64512
    %v4030 = vsel %vm4028, %v4026, 0
    %4032 = vmatprep.subr.mxu0 0.0
    %4033 = vmatpush1.msra.mxu0 %v4027
    %4034 = vmatprep.subr.mxu0 0.0
    %4035 = vmatpush1.msra.mxu0 0.0
    %4036 = vmatprep.subr.mxu0 0.0
    %4037 = vmatpush1.msra.mxu0 0.0
    %4038 = vmatprep.subr.mxu0 0.0
    %4039 = vmatpush1.msra.mxu0 0.0
    %4040 = vmatprep.subr.mxu0 0.0
    %4041 = vmatpush1.msra.mxu0 0.0
    %4042 = vmatprep.subr.mxu0 0.0
    %4043 = vmatpush1.msra.mxu0 0.0
    %4044 = vmatprep.subr.mxu0 0.0
    %4045 = vmatpush1.msra.mxu0 0.0
    %4046 = vmatprep.subr.mxu0 0.0
    %4047 = vmatpush1.msra.mxu0 0.0
    %4048 = vmatprep.subr.mxu0 0.0
    %4049 = vmatpush1.msra.mxu0 0.0
    %4050 = vmatprep.subr.mxu0 0.0
    %4051 = vmatpush1.msra.mxu0 0.0
    %4052 = vmatprep.subr.mxu0 0.0
    %4053 = vmatpush1.msra.mxu0 0.0
    %4054 = vmatprep.subr.mxu0 0.0
    %4055 = vmatpush1.msra.mxu0 0.0
    %4056 = vmatprep.subr.mxu0 0.0
    %4057 = vmatpush1.msra.mxu0 0.0
    %4058 = vmatprep.subr.mxu0 0.0
    %4059 = vmatpush1.msra.mxu0 0.0
    %4060 = vmatprep.subr.mxu0 0.0
    %4061 = vmatpush1.msra.mxu0 0.0
    %4062 = vmatprep.subr.mxu0 0.0
    %4063 = vmatpush1.msra.mxu0 0.0
    %4064 = vmatprep.subr.mxu0 0.0
    %4065 = vmatpush1.msra.mxu0 0.0
    %4066 = vmatprep.subr.mxu0 0.0
    %4067 = vmatpush1.msra.mxu0 0.0
    %4068 = vmatprep.subr.mxu0 0.0
    %4069 = vmatpush1.msra.mxu0 0.0
    %4070 = vmatprep.subr.mxu0 0.0
    %4071 = vmatpush1.msra.mxu0 0.0
    %4072 = vmatprep.subr.mxu0 0.0
    %4073 = vmatpush1.msra.mxu0 0.0
    %4074 = vmatprep.subr.mxu0 0.0
    %4075 = vmatpush1.msra.mxu0 0.0
    %4076 = vmatprep.subr.mxu0 0.0
    %4077 = vmatpush1.msra.mxu0 0.0
    %4078 = vmatprep.subr.mxu0 0.0
    %4079 = vmatpush1.msra.mxu0 0.0
    %4080 = vmatprep.subr.mxu0 0.0
    %4081 = vmatpush1.msra.mxu0 0.0
    %4082 = vmatprep.subr.mxu0 0.0
    %4083 = vmatpush1.msra.mxu0 0.0
    %4084 = vmatprep.subr.mxu0 0.0
    %4085 = vmatpush1.msra.mxu0 0.0
    %4086 = vmatprep.subr.mxu0 0.0
    %4087 = vmatpush1.msra.mxu0 0.0
    %4088 = vmatprep.subr.mxu0 0.0
    %4089 = vmatpush1.msra.mxu0 0.0
    %4090 = vmatprep.subr.mxu0 0.0
    %4091 = vmatpush1.msra.mxu0 0.0
    %4092 = vmatprep.subr.mxu0 0.0
    %4093 = vmatpush1.msra.mxu0 0.0
    %4094 = vmatprep.subr.mxu0 0.0
    %4095 = vmatpush1.msra.mxu0 0.0
    %4096 = vmatprep.mubr.f32.mxu0 0.0
    %4097 = vmatmul.mubr.f32.gmra.mrb[0].mxu0 %v4030
    %v4098 = vpop.f32.mrb[0].mxu0
    %v4099 = vadd.f32 0.0, %v4098
    %v4100 = vpop.f32.mrb[0].mxu0
    %4101 = vdwg.mxu0
    %v4103 = vsel %vm240, %v4021, 0
    %4105 = vmatprep.subr.mxu0 0.0
    %4106 = vmatpush1.msra.mxu0 %v4022
    %4107 = vmatprep.subr.mxu0 0.0
    %4108 = vmatpush1.msra.mxu0 %v4023
    %4109 = vmatprep.subr.mxu0 0.0
    %4110 = vmatpush1.msra.mxu0 %v4024
    %4111 = vmatprep.subr.mxu0 0.0
    %4112 = vmatpush1.msra.mxu0 %v4025
    %4113 = vmatprep.subr.mxu0 0.0
    %4114 = vmatpush1.msra.mxu0 0.0
    %4115 = vmatprep.subr.mxu0 0.0
    %4116 = vmatpush1.msra.mxu0 0.0
    %4117 = vmatprep.subr.mxu0 0.0
    %4118 = vmatpush1.msra.mxu0 0.0
    %4119 = vmatprep.subr.mxu0 0.0
    %4120 = vmatpush1.msra.mxu0 0.0
    %4121 = vmatprep.subr.mxu0 0.0
    %4122 = vmatpush1.msra.mxu0 0.0
    %4123 = vmatprep.subr.mxu0 0.0
    %4124 = vmatpush1.msra.mxu0 0.0
    %4125 = vmatprep.subr.mxu0 0.0
    %4126 = vmatpush1.msra.mxu0 0.0
    %4127 = vmatprep.subr.mxu0 0.0
    %4128 = vmatpush1.msra.mxu0 0.0
    %4129 = vmatprep.subr.mxu0 0.0
    %4130 = vmatpush1.msra.mxu0 0.0
    %4131 = vmatprep.subr.mxu0 0.0
    %4132 = vmatpush1.msra.mxu0 0.0
    %4133 = vmatprep.subr.mxu0 0.0
    %4134 = vmatpush1.msra.mxu0 0.0
    %4135 = vmatprep.subr.mxu0 0.0
    %4136 = vmatpush1.msra.mxu0 0.0
    %4137 = vmatprep.subr.mxu0 0.0
    %4138 = vmatpush1.msra.mxu0 0.0
    %4139 = vmatprep.subr.mxu0 0.0
    %4140 = vmatpush1.msra.mxu0 0.0
    %4141 = vmatprep.subr.mxu0 0.0
    %4142 = vmatpush1.msra.mxu0 0.0
    %4143 = vmatprep.subr.mxu0 0.0
    %4144 = vmatpush1.msra.mxu0 0.0
    %4145 = vmatprep.subr.mxu0 0.0
    %4146 = vmatpush1.msra.mxu0 0.0
    %4147 = vmatprep.subr.mxu0 0.0
    %4148 = vmatpush1.msra.mxu0 0.0
    %4149 = vmatprep.subr.mxu0 0.0
    %4150 = vmatpush1.msra.mxu0 0.0
    %4151 = vmatprep.subr.mxu0 0.0
    %4152 = vmatpush1.msra.mxu0 0.0
    %4153 = vmatprep.subr.mxu0 0.0
    %4154 = vmatpush1.msra.mxu0 0.0
    %4155 = vmatprep.subr.mxu0 0.0
    %4156 = vmatpush1.msra.mxu0 0.0
    %4157 = vmatprep.subr.mxu0 0.0
    %4158 = vmatpush1.msra.mxu0 0.0
    %4159 = vmatprep.subr.mxu0 0.0
    %4160 = vmatpush1.msra.mxu0 0.0
    %4161 = vmatprep.subr.mxu0 0.0
    %4162 = vmatpush1.msra.mxu0 0.0
    %4163 = vmatprep.subr.mxu0 0.0
    %4164 = vmatpush1.msra.mxu0 0.0
    %4165 = vmatprep.subr.mxu0 0.0
    %4166 = vmatpush1.msra.mxu0 0.0
    %4167 = vmatprep.subr.mxu0 0.0
    %4168 = vmatpush1.msra.mxu0 0.0
    %4169 = vmatprep.mubr.f32.mxu0 0.0
    %4170 = vmatmul.mubr.f32.gmra.mrb[0].mxu0 %v4103
    %v4171 = vpop.f32.mrb[0].mxu0
    %v4172 = vadd.f32 %v4099, %v4171
    %v4173 = vpop.f32.mrb[0].mxu0
    %4174 = vdwg.mxu0
    %v4175 = vld [vmem:[%s26] sm:$0x1]
    %v4177 = vlaneseq
    %v4178 = vshrl.u32 %v4177, 7
    %v4179 = vsub.s32 0, %v4178
    %v4180 = vrot.slane %v4175, %v4179
    %v4182 = vadd.f32 %v4172, %v4180
    %vm4183 = vcmask 33792
    %4184 = vst.msk [vmem:[#allocation2] sm:$0x3] %vm4183, %v4182
    // Predicated region
    $region110: #{forward.1} parent=1 // pred_check
      _
    $region111: #{forward.1} parent=1 // pred_check_branch
      %4186 = sbr.rel (0) target = $region113
    $region112: #{forward.1} parent=1 // pred_region
      %s4188 = ssub.s32 32, 32
      %4189 = vsyncadd [#allocation3], %s4188
      %s4191 = sshll.u32 [#allocation2], 4
      %s4192 = int_to_ptr.vmem [resolvable:$true] %s4191
      %4194 = dma.vmem_to_hbm [thread:$0]  %s4192, 32, %s27, [#allocation3]
    $region113: #{forward.1} parent=1 // pred_fallthru
      _
    // Predicated region
    $region114: #{forward.1} parent=1 // pred_check
      _
    $region115: #{forward.1} parent=1 // pred_check_branch
      %4196 = sbr.rel (0) target = $region117
    $region116: #{forward.1} parent=1 // pred_region
      %4197 = dma.done [#allocation3], 32
    $region117: #{forward.1} parent=1 // pred_fallthru
      _
    %4198 = vsyncpa [#allocation3], 1

</llo_original>
